<compile_context>
chip_gen: v7x
topology: tpu7x:2x2x1
jax: 0.10.0
libtpu: 0.0.40
codegen_flags: <defaults>
</compile_context>

<pallas_src>
import functools
import math

import jax
import jax.numpy as jnp
from jax import lax
from jax.experimental import pallas as pl
from jax.experimental.pallas import tpu as pltpu

# ---- module-consistent hyperparameters ----
D_MODEL = 32
HEADS = 4
D_K = D_MODEL // HEADS
SEQ_LEN = 8
BATCH = 2


# ----------------------------- kernel -----------------------------

def mha_kernel(q_ref, k_ref, v_ref,
               wq_ref, bq_ref, wk_ref, bk_ref, wv_ref, bv_ref,
               wo_ref, bo_ref, o_ref, *, batch, seq, heads, d_k):
    # q_ref/k_ref/v_ref/o_ref: (B*S, D)  -- batch folded into the matmul M dim.
    # wq/wk/wv: (H, D, d_k), bq/bk/bv: (H, 1, d_k), wo: (H, d_k, D), bo: (1, D).
    m = batch * seq
    d_model = heads * d_k

    q2 = q_ref[...]
    k2 = k_ref[...]
    v2 = v_ref[...]

    acc = jnp.zeros((m, d_model), jnp.float32)
    for h in range(heads):
        # Per-head projections (wq/bq already carry the 1/sqrt(d_k) scale).
        qh = (jnp.dot(q2, wq_ref[h], preferred_element_type=jnp.float32)
              + bq_ref[h]).reshape(batch, seq, d_k)
        kh = (jnp.dot(k2, wk_ref[h], preferred_element_type=jnp.float32)
              + bk_ref[h]).reshape(batch, seq, d_k)
        vh = (jnp.dot(v2, wv_ref[h], preferred_element_type=jnp.float32)
              + bv_ref[h]).reshape(batch, seq, d_k)

        # scores[b, i, j] = sum_d qh[b, i, d] * kh[b, j, d]  (no transpose).
        scores = lax.dot_general(qh, kh, (((2,), (2,)), ((0,), (0,))),
                                 preferred_element_type=jnp.float32)   # (B, S, S)
        mx = jnp.max(scores, axis=-1, keepdims=True)
        e = jnp.exp(scores - mx)
        p = e / jnp.sum(e, axis=-1, keepdims=True)                      # softmax

        ctx = lax.dot_general(p, vh, (((2,), (1,)), ((0,), (0,))),
                              preferred_element_type=jnp.float32)       # (B, S, d_k)

        # Concat-free output projection: out = sum_h ctx_h @ Wo[h] + bo.
        acc = acc + jnp.dot(ctx.reshape(m, d_k), wo_ref[h],
                            preferred_element_type=jnp.float32)

    o_ref[...] = acc + bo_ref[...]


# ----------------------------- wrapper -----------------------------

def mha_forward(q, k, v, packed):
    B, S, D = q.shape
    M = B * S
    H, _, DK = packed["wq"].shape

    q2 = q.reshape(M, D)
    k2 = k.reshape(M, D)
    v2 = v.reshape(M, D)

    kernel = functools.partial(mha_kernel, batch=B, seq=S, heads=H, d_k=DK)

    def full_spec(shape):
        rank = len(shape)
        return pl.BlockSpec(shape, lambda i, _r=rank: (0,) * _r)

    out = pl.pallas_call(
        kernel,
        out_shape=jax.ShapeDtypeStruct((M, D), jnp.float32),
        grid=(1,),
        in_specs=[
            full_spec((M, D)), full_spec((M, D)), full_spec((M, D)),
            full_spec((H, D, DK)), full_spec((H, 1, DK)),
            full_spec((H, D, DK)), full_spec((H, 1, DK)),
            full_spec((H, D, DK)), full_spec((H, 1, DK)),
            full_spec((H, DK, D)), full_spec((1, D)),
        ],
        out_specs=full_spec((M, D)),
        compiler_params=pltpu.CompilerParams(dimension_semantics=("arbitrary",)),
    )(q2, k2, v2,
      packed["wq"], packed["bq"], packed["wk"], packed["bk"],
      packed["wv"], packed["bv"], packed["wo"], packed["bo"])

    return out.reshape(B, S, D)


# ----------------------------- params -----------------------------

def init_params(key):
    """Linear weights stored (in_features, out_features); applied as x @ W + b."""
    ks = jax.random.split(key, 8)

    def dense(kw, kb, fan_in, fan_out):
        w = jax.random.normal(kw, (fan_in, fan_out), jnp.float32) / math.sqrt(fan_in)
        b = jax.random.normal(kb, (fan_out,), jnp.float32) * 0.02
        return w, b

    wq, bq = dense(ks[0], ks[1], D_MODEL, D_MODEL)
    wk, bk = dense(ks[2], ks[3], D_MODEL, D_MODEL)
    wv, bv = dense(ks[4], ks[5], D_MODEL, D_MODEL)
    wo, bo = dense(ks[6], ks[7], D_MODEL, D_MODEL)
    return dict(wq=wq, bq=bq, wk=wk, bk=bk, wv=wv, bv=bv, wo=wo, bo=bo)


def pack_params(p):
    """One-time host-side repack: split per head, fold 1/sqrt(d_k) into Wq/bq."""
    scale = 1.0 / math.sqrt(D_K)

    def split_cols(w, b, s=1.0):
        w_h = (w * s).reshape(D_MODEL, HEADS, D_K).transpose(1, 0, 2)  # (H, D, d_k)
        b_h = (b * s).reshape(HEADS, 1, D_K)                           # (H, 1, d_k)
        return w_h, b_h

    wq, bq = split_cols(p["wq"], p["bq"], scale)
    wk, bk = split_cols(p["wk"], p["bk"])
    wv, bv = split_cols(p["wv"], p["bv"])
    wo = p["wo"].reshape(HEADS, D_K, D_MODEL)                          # (H, d_k, D)
    bo = p["bo"].reshape(1, D_MODEL)
    return dict(wq=wq, bq=bq, wk=wk, bk=bk, wv=wv, bv=bv, wo=wo, bo=bo)


# ----------------------------- reference -----------------------------

def reference_forward(q, k, v, p):
    """Pure-JAX mirror of the PyTorch MultiHeadAttention forward (mask=None)."""
    B, S, D = q.shape
    Q = (q @ p["wq"] + p["bq"]).reshape(B, S, HEADS, D_K).transpose(0, 2, 1, 3)
    K = (k @ p["wk"] + p["bk"]).reshape(B, S, HEADS, D_K).transpose(0, 2, 1, 3)
    V = (v @ p["wv"] + p["bv"]).reshape(B, S, HEADS, D_K).transpose(0, 2, 1, 3)
    scores = jnp.einsum("bhqd,bhkd->bhqk", Q, K) / math.sqrt(D_K)
    attn = jax.nn.softmax(scores, axis=-1)
    ctx = jnp.einsum("bhqk,bhkd->bhqd", attn, V).transpose(0, 2, 1, 3).reshape(B, S, D)
    return ctx @ p["wo"] + p["bo"]


if __name__ == "__main__":
    key = jax.random.PRNGKey(0)
    kp, kq, kk, kv = jax.random.split(key, 4)
    params = init_params(kp)
    packed = pack_params(params)

    q = jax.random.normal(kq, (BATCH, SEQ_LEN, D_MODEL), jnp.float32)
    k = jax.random.normal(kk, (BATCH, SEQ_LEN, D_MODEL), jnp.float32)
    v = jax.random.normal(kv, (BATCH, SEQ_LEN, D_MODEL), jnp.float32)

    out = mha_forward(q, k, v, packed)
    out = jax.block_until_ready(out)
    assert out.shape == (BATCH, SEQ_LEN, D_MODEL)

    ref = reference_forward(q, k, v, params)
    assert bool(jnp.allclose(out, ref, rtol=1e-3, atol=1e-3)), (out, ref)

    print("KERNEL_OK")
</pallas_src>

<mosaic_0001>
module attributes {stable_mosaic.version = 11 : i64} {
  func.func @mha_kernel(%arg0: i32, %arg1: memref<16x32xf32, #tpu.memory_space<vmem>>, %arg2: memref<16x32xf32, #tpu.memory_space<vmem>>, %arg3: memref<16x32xf32, #tpu.memory_space<vmem>>, %arg4: memref<4x32x8xf32, #tpu.memory_space<vmem>>, %arg5: memref<4x1x8xf32, #tpu.memory_space<vmem>>, %arg6: memref<4x32x8xf32, #tpu.memory_space<vmem>>, %arg7: memref<4x1x8xf32, #tpu.memory_space<vmem>>, %arg8: memref<4x32x8xf32, #tpu.memory_space<vmem>>, %arg9: memref<4x1x8xf32, #tpu.memory_space<vmem>>, %arg10: memref<4x8x32xf32, #tpu.memory_space<vmem>>, %arg11: memref<1x32xf32, #tpu.memory_space<vmem>>, %arg12: memref<16x32xf32, #tpu.memory_space<vmem>>) attributes {dimension_semantics = [#tpu.dimension_semantics<arbitrary>], iteration_bounds = array<i64: 1>, scalar_prefetch = 0 : i64, scratch_operands = 0 : i64, tpu.core_type = #tpu.core_type<tc>, window_params = [{pipeline_mode = #tpu.pipeline_mode<synchronous>, transform_indices = @transform_0, window_bounds = array<i64: 16, 32>}, {pipeline_mode = #tpu.pipeline_mode<synchronous>, transform_indices = @transform_1, window_bounds = array<i64: 16, 32>}, {pipeline_mode = #tpu.pipeline_mode<synchronous>, transform_indices = @transform_2, window_bounds = array<i64: 16, 32>}, {pipeline_mode = #tpu.pipeline_mode<synchronous>, transform_indices = @transform_3, window_bounds = array<i64: 4, 32, 8>}, {pipeline_mode = #tpu.pipeline_mode<synchronous>, transform_indices = @transform_4, window_bounds = array<i64: 4, 1, 8>}, {pipeline_mode = #tpu.pipeline_mode<synchronous>, transform_indices = @transform_5, window_bounds = array<i64: 4, 32, 8>}, {pipeline_mode = #tpu.pipeline_mode<synchronous>, transform_indices = @transform_6, window_bounds = array<i64: 4, 1, 8>}, {pipeline_mode = #tpu.pipeline_mode<synchronous>, transform_indices = @transform_7, window_bounds = array<i64: 4, 32, 8>}, {pipeline_mode = #tpu.pipeline_mode<synchronous>, transform_indices = @transform_8, window_bounds = array<i64: 4, 1, 8>}, {pipeline_mode = #tpu.pipeline_mode<synchronous>, transform_indices = @transform_9, window_bounds = array<i64: 4, 8, 32>}, {pipeline_mode = #tpu.pipeline_mode<synchronous>, transform_indices = @transform_10, window_bounds = array<i64: 1, 32>}, {pipeline_mode = #tpu.pipeline_mode<synchronous>, transform_indices = @transform_11, window_bounds = array<i64: 16, 32>}]} {
    %c0 = arith.constant 0 : index
    %c0_0 = arith.constant 0 : index
    %0 = vector.load %arg1[%c0, %c0_0] : memref<16x32xf32, #tpu.memory_space<vmem>>, vector<16x32xf32>
    %c0_1 = arith.constant 0 : index
    %c0_2 = arith.constant 0 : index
    %1 = vector.load %arg2[%c0_1, %c0_2] : memref<16x32xf32, #tpu.memory_space<vmem>>, vector<16x32xf32>
    %c0_3 = arith.constant 0 : index
    %c0_4 = arith.constant 0 : index
    %2 = vector.load %arg3[%c0_3, %c0_4] : memref<16x32xf32, #tpu.memory_space<vmem>>, vector<16x32xf32>
    %cst = arith.constant 0.000000e+00 : f32
    %3 = vector.broadcast %cst : f32 to vector<16x32xf32>
    %c0_5 = arith.constant 0 : index
    %c0_6 = arith.constant 0 : index
    %c0_7 = arith.constant 0 : index
    %4 = vector.load %arg4[%c0_5, %c0_6, %c0_7] : memref<4x32x8xf32, #tpu.memory_space<vmem>>, vector<1x32x8xf32>
    %5 = vector.shape_cast %4 : vector<1x32x8xf32> to vector<32x8xf32>
    %cst_8 = arith.constant dense<0.000000e+00> : vector<16x8xf32>
    %6 = tpu.matmul %0, %5, %cst_8 {dimension_numbers = #tpu.dot_dimension_numbers<[1], [0], [0], [1], [0, 0, 1, 1], [], []>} : vector<16x32xf32>, vector<32x8xf32>, vector<16x8xf32> -> vector<16x8xf32>
    %c0_9 = arith.constant 0 : index
    %c0_10 = arith.constant 0 : index
    %c0_11 = arith.constant 0 : index
    %7 = vector.load %arg5[%c0_9, %c0_10, %c0_11] : memref<4x1x8xf32, #tpu.memory_space<vmem>>, vector<1x1x8xf32>
    %8 = vector.shape_cast %7 : vector<1x1x8xf32> to vector<1x8xf32>
    %9 = vector.broadcast %8 : vector<1x8xf32> to vector<16x8xf32>
    %10 = arith.addf %6, %9 : vector<16x8xf32>
    %11 = vector.shape_cast %10 : vector<16x8xf32> to vector<2x8x8xf32>
    %c0_12 = arith.constant 0 : index
    %c0_13 = arith.constant 0 : index
    %c0_14 = arith.constant 0 : index
    %12 = vector.load %arg6[%c0_12, %c0_13, %c0_14] : memref<4x32x8xf32, #tpu.memory_space<vmem>>, vector<1x32x8xf32>
    %13 = vector.shape_cast %12 : vector<1x32x8xf32> to vector<32x8xf32>
    %cst_15 = arith.constant dense<0.000000e+00> : vector<16x8xf32>
    %14 = tpu.matmul %1, %13, %cst_15 {dimension_numbers = #tpu.dot_dimension_numbers<[1], [0], [0], [1], [0, 0, 1, 1], [], []>} : vector<16x32xf32>, vector<32x8xf32>, vector<16x8xf32> -> vector<16x8xf32>
    %c0_16 = arith.constant 0 : index
    %c0_17 = arith.constant 0 : index
    %c0_18 = arith.constant 0 : index
    %15 = vector.load %arg7[%c0_16, %c0_17, %c0_18] : memref<4x1x8xf32, #tpu.memory_space<vmem>>, vector<1x1x8xf32>
    %16 = vector.shape_cast %15 : vector<1x1x8xf32> to vector<1x8xf32>
    %17 = vector.broadcast %16 : vector<1x8xf32> to vector<16x8xf32>
    %18 = arith.addf %14, %17 : vector<16x8xf32>
    %19 = vector.shape_cast %18 : vector<16x8xf32> to vector<2x8x8xf32>
    %c0_19 = arith.constant 0 : index
    %c0_20 = arith.constant 0 : index
    %c0_21 = arith.constant 0 : index
    %20 = vector.load %arg8[%c0_19, %c0_20, %c0_21] : memref<4x32x8xf32, #tpu.memory_space<vmem>>, vector<1x32x8xf32>
    %21 = vector.shape_cast %20 : vector<1x32x8xf32> to vector<32x8xf32>
    %cst_22 = arith.constant dense<0.000000e+00> : vector<16x8xf32>
    %22 = tpu.matmul %2, %21, %cst_22 {dimension_numbers = #tpu.dot_dimension_numbers<[1], [0], [0], [1], [0, 0, 1, 1], [], []>} : vector<16x32xf32>, vector<32x8xf32>, vector<16x8xf32> -> vector<16x8xf32>
    %c0_23 = arith.constant 0 : index
    %c0_24 = arith.constant 0 : index
    %c0_25 = arith.constant 0 : index
    %23 = vector.load %arg9[%c0_23, %c0_24, %c0_25] : memref<4x1x8xf32, #tpu.memory_space<vmem>>, vector<1x1x8xf32>
    %24 = vector.shape_cast %23 : vector<1x1x8xf32> to vector<1x8xf32>
    %25 = vector.broadcast %24 : vector<1x8xf32> to vector<16x8xf32>
    %26 = arith.addf %22, %25 : vector<16x8xf32>
    %27 = vector.shape_cast %26 : vector<16x8xf32> to vector<2x8x8xf32>
    %cst_26 = arith.constant dense<0.000000e+00> : vector<2x8x8xf32>
    %28 = tpu.matmul %11, %19, %cst_26 {dimension_numbers = #tpu.dot_dimension_numbers<[2], [2], [1], [1], [0, 0, 0, 1, 1, 1], [0], [0]>} : vector<2x8x8xf32>, vector<2x8x8xf32>, vector<2x8x8xf32> -> vector<2x8x8xf32>
    %cst_27 = arith.constant dense<0xFF800000> : vector<2x8xf32>
    %29 = vector.multi_reduction <maximumf>, %28, %cst_27 [2] : vector<2x8x8xf32> to vector<2x8xf32>
    %30 = vector.shape_cast %29 : vector<2x8xf32> to vector<2x8x1xf32>
    %31 = vector.broadcast %30 : vector<2x8x1xf32> to vector<2x8x8xf32>
    %32 = arith.subf %28, %31 : vector<2x8x8xf32>
    %33 = math.exp %32 : vector<2x8x8xf32>
    %cst_28 = arith.constant dense<0.000000e+00> : vector<2x8xf32>
    %34 = vector.multi_reduction <add>, %33, %cst_28 [2] : vector<2x8x8xf32> to vector<2x8xf32>
    %35 = vector.shape_cast %34 : vector<2x8xf32> to vector<2x8x1xf32>
    %36 = vector.broadcast %35 : vector<2x8x1xf32> to vector<2x8x8xf32>
    %37 = arith.divf %33, %36 : vector<2x8x8xf32>
    %cst_29 = arith.constant dense<0.000000e+00> : vector<2x8x8xf32>
    %38 = tpu.matmul %37, %27, %cst_29 {dimension_numbers = #tpu.dot_dimension_numbers<[2], [1], [1], [2], [0, 0, 0, 1, 1, 2], [0], [0]>} : vector<2x8x8xf32>, vector<2x8x8xf32>, vector<2x8x8xf32> -> vector<2x8x8xf32>
    %39 = vector.shape_cast %38 : vector<2x8x8xf32> to vector<16x8xf32>
    %c0_30 = arith.constant 0 : index
    %c0_31 = arith.constant 0 : index
    %c0_32 = arith.constant 0 : index
    %40 = vector.load %arg10[%c0_30, %c0_31, %c0_32] : memref<4x8x32xf32, #tpu.memory_space<vmem>>, vector<1x8x32xf32>
    %41 = vector.shape_cast %40 : vector<1x8x32xf32> to vector<8x32xf32>
    %cst_33 = arith.constant dense<0.000000e+00> : vector<16x32xf32>
    %42 = tpu.matmul %39, %41, %cst_33 {dimension_numbers = #tpu.dot_dimension_numbers<[1], [0], [0], [1], [0, 0, 1, 1], [], []>} : vector<16x8xf32>, vector<8x32xf32>, vector<16x32xf32> -> vector<16x32xf32>
    %43 = arith.addf %3, %42 : vector<16x32xf32>
    %c1 = arith.constant 1 : index
    %c0_34 = arith.constant 0 : index
    %c0_35 = arith.constant 0 : index
    %44 = vector.load %arg4[%c1, %c0_34, %c0_35] : memref<4x32x8xf32, #tpu.memory_space<vmem>>, vector<1x32x8xf32>
    %45 = vector.shape_cast %44 : vector<1x32x8xf32> to vector<32x8xf32>
    %cst_36 = arith.constant dense<0.000000e+00> : vector<16x8xf32>
    %46 = tpu.matmul %0, %45, %cst_36 {dimension_numbers = #tpu.dot_dimension_numbers<[1], [0], [0], [1], [0, 0, 1, 1], [], []>} : vector<16x32xf32>, vector<32x8xf32>, vector<16x8xf32> -> vector<16x8xf32>
    %c1_37 = arith.constant 1 : index
    %c0_38 = arith.constant 0 : index
    %c0_39 = arith.constant 0 : index
    %47 = vector.load %arg5[%c1_37, %c0_38, %c0_39] : memref<4x1x8xf32, #tpu.memory_space<vmem>>, vector<1x1x8xf32>
    %48 = vector.shape_cast %47 : vector<1x1x8xf32> to vector<1x8xf32>
    %49 = vector.broadcast %48 : vector<1x8xf32> to vector<16x8xf32>
    %50 = arith.addf %46, %49 : vector<16x8xf32>
    %51 = vector.shape_cast %50 : vector<16x8xf32> to vector<2x8x8xf32>
    %c1_40 = arith.constant 1 : index
    %c0_41 = arith.constant 0 : index
    %c0_42 = arith.constant 0 : index
    %52 = vector.load %arg6[%c1_40, %c0_41, %c0_42] : memref<4x32x8xf32, #tpu.memory_space<vmem>>, vector<1x32x8xf32>
    %53 = vector.shape_cast %52 : vector<1x32x8xf32> to vector<32x8xf32>
    %cst_43 = arith.constant dense<0.000000e+00> : vector<16x8xf32>
    %54 = tpu.matmul %1, %53, %cst_43 {dimension_numbers = #tpu.dot_dimension_numbers<[1], [0], [0], [1], [0, 0, 1, 1], [], []>} : vector<16x32xf32>, vector<32x8xf32>, vector<16x8xf32> -> vector<16x8xf32>
    %c1_44 = arith.constant 1 : index
    %c0_45 = arith.constant 0 : index
    %c0_46 = arith.constant 0 : index
    %55 = vector.load %arg7[%c1_44, %c0_45, %c0_46] : memref<4x1x8xf32, #tpu.memory_space<vmem>>, vector<1x1x8xf32>
    %56 = vector.shape_cast %55 : vector<1x1x8xf32> to vector<1x8xf32>
    %57 = vector.broadcast %56 : vector<1x8xf32> to vector<16x8xf32>
    %58 = arith.addf %54, %57 : vector<16x8xf32>
    %59 = vector.shape_cast %58 : vector<16x8xf32> to vector<2x8x8xf32>
    %c1_47 = arith.constant 1 : index
    %c0_48 = arith.constant 0 : index
    %c0_49 = arith.constant 0 : index
    %60 = vector.load %arg8[%c1_47, %c0_48, %c0_49] : memref<4x32x8xf32, #tpu.memory_space<vmem>>, vector<1x32x8xf32>
    %61 = vector.shape_cast %60 : vector<1x32x8xf32> to vector<32x8xf32>
    %cst_50 = arith.constant dense<0.000000e+00> : vector<16x8xf32>
    %62 = tpu.matmul %2, %61, %cst_50 {dimension_numbers = #tpu.dot_dimension_numbers<[1], [0], [0], [1], [0, 0, 1, 1], [], []>} : vector<16x32xf32>, vector<32x8xf32>, vector<16x8xf32> -> vector<16x8xf32>
    %c1_51 = arith.constant 1 : index
    %c0_52 = arith.constant 0 : index
    %c0_53 = arith.constant 0 : index
    %63 = vector.load %arg9[%c1_51, %c0_52, %c0_53] : memref<4x1x8xf32, #tpu.memory_space<vmem>>, vector<1x1x8xf32>
    %64 = vector.shape_cast %63 : vector<1x1x8xf32> to vector<1x8xf32>
    %65 = vector.broadcast %64 : vector<1x8xf32> to vector<16x8xf32>
    %66 = arith.addf %62, %65 : vector<16x8xf32>
    %67 = vector.shape_cast %66 : vector<16x8xf32> to vector<2x8x8xf32>
    %cst_54 = arith.constant dense<0.000000e+00> : vector<2x8x8xf32>
    %68 = tpu.matmul %51, %59, %cst_54 {dimension_numbers = #tpu.dot_dimension_numbers<[2], [2], [1], [1], [0, 0, 0, 1, 1, 1], [0], [0]>} : vector<2x8x8xf32>, vector<2x8x8xf32>, vector<2x8x8xf32> -> vector<2x8x8xf32>
    %cst_55 = arith.constant dense<0xFF800000> : vector<2x8xf32>
    %69 = vector.multi_reduction <maximumf>, %68, %cst_55 [2] : vector<2x8x8xf32> to vector<2x8xf32>
    %70 = vector.shape_cast %69 : vector<2x8xf32> to vector<2x8x1xf32>
    %71 = vector.broadcast %70 : vector<2x8x1xf32> to vector<2x8x8xf32>
    %72 = arith.subf %68, %71 : vector<2x8x8xf32>
    %73 = math.exp %72 : vector<2x8x8xf32>
    %cst_56 = arith.constant dense<0.000000e+00> : vector<2x8xf32>
    %74 = vector.multi_reduction <add>, %73, %cst_56 [2] : vector<2x8x8xf32> to vector<2x8xf32>
    %75 = vector.shape_cast %74 : vector<2x8xf32> to vector<2x8x1xf32>
    %76 = vector.broadcast %75 : vector<2x8x1xf32> to vector<2x8x8xf32>
    %77 = arith.divf %73, %76 : vector<2x8x8xf32>
    %cst_57 = arith.constant dense<0.000000e+00> : vector<2x8x8xf32>
    %78 = tpu.matmul %77, %67, %cst_57 {dimension_numbers = #tpu.dot_dimension_numbers<[2], [1], [1], [2], [0, 0, 0, 1, 1, 2], [0], [0]>} : vector<2x8x8xf32>, vector<2x8x8xf32>, vector<2x8x8xf32> -> vector<2x8x8xf32>
    %79 = vector.shape_cast %78 : vector<2x8x8xf32> to vector<16x8xf32>
    %c1_58 = arith.constant 1 : index
    %c0_59 = arith.constant 0 : index
    %c0_60 = arith.constant 0 : index
    %80 = vector.load %arg10[%c1_58, %c0_59, %c0_60] : memref<4x8x32xf32, #tpu.memory_space<vmem>>, vector<1x8x32xf32>
    %81 = vector.shape_cast %80 : vector<1x8x32xf32> to vector<8x32xf32>
    %cst_61 = arith.constant dense<0.000000e+00> : vector<16x32xf32>
    %82 = tpu.matmul %79, %81, %cst_61 {dimension_numbers = #tpu.dot_dimension_numbers<[1], [0], [0], [1], [0, 0, 1, 1], [], []>} : vector<16x8xf32>, vector<8x32xf32>, vector<16x32xf32> -> vector<16x32xf32>
    %83 = arith.addf %43, %82 : vector<16x32xf32>
    %c2 = arith.constant 2 : index
    %c0_62 = arith.constant 0 : index
    %c0_63 = arith.constant 0 : index
    %84 = vector.load %arg4[%c2, %c0_62, %c0_63] : memref<4x32x8xf32, #tpu.memory_space<vmem>>, vector<1x32x8xf32>
    %85 = vector.shape_cast %84 : vector<1x32x8xf32> to vector<32x8xf32>
    %cst_64 = arith.constant dense<0.000000e+00> : vector<16x8xf32>
    %86 = tpu.matmul %0, %85, %cst_64 {dimension_numbers = #tpu.dot_dimension_numbers<[1], [0], [0], [1], [0, 0, 1, 1], [], []>} : vector<16x32xf32>, vector<32x8xf32>, vector<16x8xf32> -> vector<16x8xf32>
    %c2_65 = arith.constant 2 : index
    %c0_66 = arith.constant 0 : index
    %c0_67 = arith.constant 0 : index
    %87 = vector.load %arg5[%c2_65, %c0_66, %c0_67] : memref<4x1x8xf32, #tpu.memory_space<vmem>>, vector<1x1x8xf32>
    %88 = vector.shape_cast %87 : vector<1x1x8xf32> to vector<1x8xf32>
    %89 = vector.broadcast %88 : vector<1x8xf32> to vector<16x8xf32>
    %90 = arith.addf %86, %89 : vector<16x8xf32>
    %91 = vector.shape_cast %90 : vector<16x8xf32> to vector<2x8x8xf32>
    %c2_68 = arith.constant 2 : index
    %c0_69 = arith.constant 0 : index
    %c0_70 = arith.constant 0 : index
    %92 = vector.load %arg6[%c2_68, %c0_69, %c0_70] : memref<4x32x8xf32, #tpu.memory_space<vmem>>, vector<1x32x8xf32>
    %93 = vector.shape_cast %92 : vector<1x32x8xf32> to vector<32x8xf32>
    %cst_71 = arith.constant dense<0.000000e+00> : vector<16x8xf32>
    %94 = tpu.matmul %1, %93, %cst_71 {dimension_numbers = #tpu.dot_dimension_numbers<[1], [0], [0], [1], [0, 0, 1, 1], [], []>} : vector<16x32xf32>, vector<32x8xf32>, vector<16x8xf32> -> vector<16x8xf32>
    %c2_72 = arith.constant 2 : index
    %c0_73 = arith.constant 0 : index
    %c0_74 = arith.constant 0 : index
    %95 = vector.load %arg7[%c2_72, %c0_73, %c0_74] : memref<4x1x8xf32, #tpu.memory_space<vmem>>, vector<1x1x8xf32>
    %96 = vector.shape_cast %95 : vector<1x1x8xf32> to vector<1x8xf32>
    %97 = vector.broadcast %96 : vector<1x8xf32> to vector<16x8xf32>
    %98 = arith.addf %94, %97 : vector<16x8xf32>
    %99 = vector.shape_cast %98 : vector<16x8xf32> to vector<2x8x8xf32>
    %c2_75 = arith.constant 2 : index
    %c0_76 = arith.constant 0 : index
    %c0_77 = arith.constant 0 : index
    %100 = vector.load %arg8[%c2_75, %c0_76, %c0_77] : memref<4x32x8xf32, #tpu.memory_space<vmem>>, vector<1x32x8xf32>
    %101 = vector.shape_cast %100 : vector<1x32x8xf32> to vector<32x8xf32>
    %cst_78 = arith.constant dense<0.000000e+00> : vector<16x8xf32>
    %102 = tpu.matmul %2, %101, %cst_78 {dimension_numbers = #tpu.dot_dimension_numbers<[1], [0], [0], [1], [0, 0, 1, 1], [], []>} : vector<16x32xf32>, vector<32x8xf32>, vector<16x8xf32> -> vector<16x8xf32>
    %c2_79 = arith.constant 2 : index
    %c0_80 = arith.constant 0 : index
    %c0_81 = arith.constant 0 : index
    %103 = vector.load %arg9[%c2_79, %c0_80, %c0_81] : memref<4x1x8xf32, #tpu.memory_space<vmem>>, vector<1x1x8xf32>
    %104 = vector.shape_cast %103 : vector<1x1x8xf32> to vector<1x8xf32>
    %105 = vector.broadcast %104 : vector<1x8xf32> to vector<16x8xf32>
    %106 = arith.addf %102, %105 : vector<16x8xf32>
    %107 = vector.shape_cast %106 : vector<16x8xf32> to vector<2x8x8xf32>
    %cst_82 = arith.constant dense<0.000000e+00> : vector<2x8x8xf32>
    %108 = tpu.matmul %91, %99, %cst_82 {dimension_numbers = #tpu.dot_dimension_numbers<[2], [2], [1], [1], [0, 0, 0, 1, 1, 1], [0], [0]>} : vector<2x8x8xf32>, vector<2x8x8xf32>, vector<2x8x8xf32> -> vector<2x8x8xf32>
    %cst_83 = arith.constant dense<0xFF800000> : vector<2x8xf32>
    %109 = vector.multi_reduction <maximumf>, %108, %cst_83 [2] : vector<2x8x8xf32> to vector<2x8xf32>
    %110 = vector.shape_cast %109 : vector<2x8xf32> to vector<2x8x1xf32>
    %111 = vector.broadcast %110 : vector<2x8x1xf32> to vector<2x8x8xf32>
    %112 = arith.subf %108, %111 : vector<2x8x8xf32>
    %113 = math.exp %112 : vector<2x8x8xf32>
    %cst_84 = arith.constant dense<0.000000e+00> : vector<2x8xf32>
    %114 = vector.multi_reduction <add>, %113, %cst_84 [2] : vector<2x8x8xf32> to vector<2x8xf32>
    %115 = vector.shape_cast %114 : vector<2x8xf32> to vector<2x8x1xf32>
    %116 = vector.broadcast %115 : vector<2x8x1xf32> to vector<2x8x8xf32>
    %117 = arith.divf %113, %116 : vector<2x8x8xf32>
    %cst_85 = arith.constant dense<0.000000e+00> : vector<2x8x8xf32>
    %118 = tpu.matmul %117, %107, %cst_85 {dimension_numbers = #tpu.dot_dimension_numbers<[2], [1], [1], [2], [0, 0, 0, 1, 1, 2], [0], [0]>} : vector<2x8x8xf32>, vector<2x8x8xf32>, vector<2x8x8xf32> -> vector<2x8x8xf32>
    %119 = vector.shape_cast %118 : vector<2x8x8xf32> to vector<16x8xf32>
    %c2_86 = arith.constant 2 : index
    %c0_87 = arith.constant 0 : index
    %c0_88 = arith.constant 0 : index
    %120 = vector.load %arg10[%c2_86, %c0_87, %c0_88] : memref<4x8x32xf32, #tpu.memory_space<vmem>>, vector<1x8x32xf32>
    %121 = vector.shape_cast %120 : vector<1x8x32xf32> to vector<8x32xf32>
    %cst_89 = arith.constant dense<0.000000e+00> : vector<16x32xf32>
    %122 = tpu.matmul %119, %121, %cst_89 {dimension_numbers = #tpu.dot_dimension_numbers<[1], [0], [0], [1], [0, 0, 1, 1], [], []>} : vector<16x8xf32>, vector<8x32xf32>, vector<16x32xf32> -> vector<16x32xf32>
    %123 = arith.addf %83, %122 : vector<16x32xf32>
    %c3 = arith.constant 3 : index
    %c0_90 = arith.constant 0 : index
    %c0_91 = arith.constant 0 : index
    %124 = vector.load %arg4[%c3, %c0_90, %c0_91] : memref<4x32x8xf32, #tpu.memory_space<vmem>>, vector<1x32x8xf32>
    %125 = vector.shape_cast %124 : vector<1x32x8xf32> to vector<32x8xf32>
    %cst_92 = arith.constant dense<0.000000e+00> : vector<16x8xf32>
    %126 = tpu.matmul %0, %125, %cst_92 {dimension_numbers = #tpu.dot_dimension_numbers<[1], [0], [0], [1], [0, 0, 1, 1], [], []>} : vector<16x32xf32>, vector<32x8xf32>, vector<16x8xf32> -> vector<16x8xf32>
    %c3_93 = arith.constant 3 : index
    %c0_94 = arith.constant 0 : index
    %c0_95 = arith.constant 0 : index
    %127 = vector.load %arg5[%c3_93, %c0_94, %c0_95] : memref<4x1x8xf32, #tpu.memory_space<vmem>>, vector<1x1x8xf32>
    %128 = vector.shape_cast %127 : vector<1x1x8xf32> to vector<1x8xf32>
    %129 = vector.broadcast %128 : vector<1x8xf32> to vector<16x8xf32>
    %130 = arith.addf %126, %129 : vector<16x8xf32>
    %131 = vector.shape_cast %130 : vector<16x8xf32> to vector<2x8x8xf32>
    %c3_96 = arith.constant 3 : index
    %c0_97 = arith.constant 0 : index
    %c0_98 = arith.constant 0 : index
    %132 = vector.load %arg6[%c3_96, %c0_97, %c0_98] : memref<4x32x8xf32, #tpu.memory_space<vmem>>, vector<1x32x8xf32>
    %133 = vector.shape_cast %132 : vector<1x32x8xf32> to vector<32x8xf32>
    %cst_99 = arith.constant dense<0.000000e+00> : vector<16x8xf32>
    %134 = tpu.matmul %1, %133, %cst_99 {dimension_numbers = #tpu.dot_dimension_numbers<[1], [0], [0], [1], [0, 0, 1, 1], [], []>} : vector<16x32xf32>, vector<32x8xf32>, vector<16x8xf32> -> vector<16x8xf32>
    %c3_100 = arith.constant 3 : index
    %c0_101 = arith.constant 0 : index
    %c0_102 = arith.constant 0 : index
    %135 = vector.load %arg7[%c3_100, %c0_101, %c0_102] : memref<4x1x8xf32, #tpu.memory_space<vmem>>, vector<1x1x8xf32>
    %136 = vector.shape_cast %135 : vector<1x1x8xf32> to vector<1x8xf32>
    %137 = vector.broadcast %136 : vector<1x8xf32> to vector<16x8xf32>
    %138 = arith.addf %134, %137 : vector<16x8xf32>
    %139 = vector.shape_cast %138 : vector<16x8xf32> to vector<2x8x8xf32>
    %c3_103 = arith.constant 3 : index
    %c0_104 = arith.constant 0 : index
    %c0_105 = arith.constant 0 : index
    %140 = vector.load %arg8[%c3_103, %c0_104, %c0_105] : memref<4x32x8xf32, #tpu.memory_space<vmem>>, vector<1x32x8xf32>
    %141 = vector.shape_cast %140 : vector<1x32x8xf32> to vector<32x8xf32>
    %cst_106 = arith.constant dense<0.000000e+00> : vector<16x8xf32>
    %142 = tpu.matmul %2, %141, %cst_106 {dimension_numbers = #tpu.dot_dimension_numbers<[1], [0], [0], [1], [0, 0, 1, 1], [], []>} : vector<16x32xf32>, vector<32x8xf32>, vector<16x8xf32> -> vector<16x8xf32>
    %c3_107 = arith.constant 3 : index
    %c0_108 = arith.constant 0 : index
    %c0_109 = arith.constant 0 : index
    %143 = vector.load %arg9[%c3_107, %c0_108, %c0_109] : memref<4x1x8xf32, #tpu.memory_space<vmem>>, vector<1x1x8xf32>
    %144 = vector.shape_cast %143 : vector<1x1x8xf32> to vector<1x8xf32>
    %145 = vector.broadcast %144 : vector<1x8xf32> to vector<16x8xf32>
    %146 = arith.addf %142, %145 : vector<16x8xf32>
    %147 = vector.shape_cast %146 : vector<16x8xf32> to vector<2x8x8xf32>
    %cst_110 = arith.constant dense<0.000000e+00> : vector<2x8x8xf32>
    %148 = tpu.matmul %131, %139, %cst_110 {dimension_numbers = #tpu.dot_dimension_numbers<[2], [2], [1], [1], [0, 0, 0, 1, 1, 1], [0], [0]>} : vector<2x8x8xf32>, vector<2x8x8xf32>, vector<2x8x8xf32> -> vector<2x8x8xf32>
    %cst_111 = arith.constant dense<0xFF800000> : vector<2x8xf32>
    %149 = vector.multi_reduction <maximumf>, %148, %cst_111 [2] : vector<2x8x8xf32> to vector<2x8xf32>
    %150 = vector.shape_cast %149 : vector<2x8xf32> to vector<2x8x1xf32>
    %151 = vector.broadcast %150 : vector<2x8x1xf32> to vector<2x8x8xf32>
    %152 = arith.subf %148, %151 : vector<2x8x8xf32>
    %153 = math.exp %152 : vector<2x8x8xf32>
    %cst_112 = arith.constant dense<0.000000e+00> : vector<2x8xf32>
    %154 = vector.multi_reduction <add>, %153, %cst_112 [2] : vector<2x8x8xf32> to vector<2x8xf32>
    %155 = vector.shape_cast %154 : vector<2x8xf32> to vector<2x8x1xf32>
    %156 = vector.broadcast %155 : vector<2x8x1xf32> to vector<2x8x8xf32>
    %157 = arith.divf %153, %156 : vector<2x8x8xf32>
    %cst_113 = arith.constant dense<0.000000e+00> : vector<2x8x8xf32>
    %158 = tpu.matmul %157, %147, %cst_113 {dimension_numbers = #tpu.dot_dimension_numbers<[2], [1], [1], [2], [0, 0, 0, 1, 1, 2], [0], [0]>} : vector<2x8x8xf32>, vector<2x8x8xf32>, vector<2x8x8xf32> -> vector<2x8x8xf32>
    %159 = vector.shape_cast %158 : vector<2x8x8xf32> to vector<16x8xf32>
    %c3_114 = arith.constant 3 : index
    %c0_115 = arith.constant 0 : index
    %c0_116 = arith.constant 0 : index
    %160 = vector.load %arg10[%c3_114, %c0_115, %c0_116] : memref<4x8x32xf32, #tpu.memory_space<vmem>>, vector<1x8x32xf32>
    %161 = vector.shape_cast %160 : vector<1x8x32xf32> to vector<8x32xf32>
    %cst_117 = arith.constant dense<0.000000e+00> : vector<16x32xf32>
    %162 = tpu.matmul %159, %161, %cst_117 {dimension_numbers = #tpu.dot_dimension_numbers<[1], [0], [0], [1], [0, 0, 1, 1], [], []>} : vector<16x8xf32>, vector<8x32xf32>, vector<16x32xf32> -> vector<16x32xf32>
    %163 = arith.addf %123, %162 : vector<16x32xf32>
    %c0_118 = arith.constant 0 : index
    %c0_119 = arith.constant 0 : index
    %164 = vector.load %arg11[%c0_118, %c0_119] : memref<1x32xf32, #tpu.memory_space<vmem>>, vector<1x32xf32>
    %165 = vector.broadcast %164 : vector<1x32xf32> to vector<16x32xf32>
    %166 = arith.addf %163, %165 : vector<16x32xf32>
    %c0_120 = arith.constant 0 : index
    %c0_121 = arith.constant 0 : index
    %167 = vector.load %arg12[%c0_120, %c0_121] : memref<16x32xf32, #tpu.memory_space<vmem>>, vector<16x32xf32>
    tpu.vector_store %arg12[%c0_120, %c0_121], %166 {strides = array<i32>} : memref<16x32xf32, #tpu.memory_space<vmem>>, vector<16x32xf32>,
    return
  }
  func.func @transform_0(%arg0: i32) -> (i32, i32) {
    %c0_i32 = arith.constant 0 : i32
    %c0_i32_0 = arith.constant 0 : i32
    %c0_i32_1 = arith.constant 0 : i32
    return %c0_i32, %c0_i32_0 : i32, i32
  }
  func.func @transform_1(%arg0: i32) -> (i32, i32) {
    %c0_i32 = arith.constant 0 : i32
    %c0_i32_0 = arith.constant 0 : i32
    %c0_i32_1 = arith.constant 0 : i32
    return %c0_i32, %c0_i32_0 : i32, i32
  }
  func.func @transform_2(%arg0: i32) -> (i32, i32) {
    %c0_i32 = arith.constant 0 : i32
    %c0_i32_0 = arith.constant 0 : i32
    %c0_i32_1 = arith.constant 0 : i32
    return %c0_i32, %c0_i32_0 : i32, i32
  }
  func.func @transform_3(%arg0: i32) -> (i32, i32, i32) {
    %c0_i32 = arith.constant 0 : i32
    %c0_i32_0 = arith.constant 0 : i32
    %c0_i32_1 = arith.constant 0 : i32
    %c0_i32_2 = arith.constant 0 : i32
    return %c0_i32, %c0_i32_0, %c0_i32_1 : i32, i32, i32
  }
  func.func @transform_4(%arg0: i32) -> (i32, i32, i32) {
    %c0_i32 = arith.constant 0 : i32
    %c0_i32_0 = arith.constant 0 : i32
    %c0_i32_1 = arith.constant 0 : i32
    %c0_i32_2 = arith.constant 0 : i32
    return %c0_i32, %c0_i32_0, %c0_i32_1 : i32, i32, i32
  }
  func.func @transform_5(%arg0: i32) -> (i32, i32, i32) {
    %c0_i32 = arith.constant 0 : i32
    %c0_i32_0 = arith.constant 0 : i32
    %c0_i32_1 = arith.constant 0 : i32
    %c0_i32_2 = arith.constant 0 : i32
    return %c0_i32, %c0_i32_0, %c0_i32_1 : i32, i32, i32
  }
  func.func @transform_6(%arg0: i32) -> (i32, i32, i32) {
    %c0_i32 = arith.constant 0 : i32
    %c0_i32_0 = arith.constant 0 : i32
    %c0_i32_1 = arith.constant 0 : i32
    %c0_i32_2 = arith.constant 0 : i32
    return %c0_i32, %c0_i32_0, %c0_i32_1 : i32, i32, i32
  }
  func.func @transform_7(%arg0: i32) -> (i32, i32, i32) {
    %c0_i32 = arith.constant 0 : i32
    %c0_i32_0 = arith.constant 0 : i32
    %c0_i32_1 = arith.constant 0 : i32
    %c0_i32_2 = arith.constant 0 : i32
    return %c0_i32, %c0_i32_0, %c0_i32_1 : i32, i32, i32
  }
  func.func @transform_8(%arg0: i32) -> (i32, i32, i32) {
    %c0_i32 = arith.constant 0 : i32
    %c0_i32_0 = arith.constant 0 : i32
    %c0_i32_1 = arith.constant 0 : i32
    %c0_i32_2 = arith.constant 0 : i32
    return %c0_i32, %c0_i32_0, %c0_i32_1 : i32, i32, i32
  }
  func.func @transform_9(%arg0: i32) -> (i32, i32, i32) {
    %c0_i32 = arith.constant 0 : i32
    %c0_i32_0 = arith.constant 0 : i32
    %c0_i32_1 = arith.constant 0 : i32
    %c0_i32_2 = arith.constant 0 : i32
    return %c0_i32, %c0_i32_0, %c0_i32_1 : i32, i32, i32
  }
  func.func @transform_10(%arg0: i32) -> (i32, i32) {
    %c0_i32 = arith.constant 0 : i32
    %c0_i32_0 = arith.constant 0 : i32
    %c0_i32_1 = arith.constant 0 : i32
    return %c0_i32, %c0_i32_0 : i32, i32
  }
  func.func @transform_11(%arg0: i32) -> (i32, i32) {
    %c0_i32 = arith.constant 0 : i32
    %c0_i32_0 = arith.constant 0 : i32
    %c0_i32_1 = arith.constant 0 : i32
    return %c0_i32, %c0_i32_0 : i32, i32
  }
}

</mosaic_0001>

<llo_original>
// kernel: tpu_custom_call.1
$region0: #{tpu_custom_call.1}
  #allocation0 [shape = 'u32[]', space=smem, size = 0x4, offset = 0x4, fixed_abs, tag = 'smem constant byte address 0x4 - core index']
  #allocation1 [shape = 'u32[144,128]{1,0:T(1,128)}', space=vmem, size = 0x12000, scoped, tag = 'internal scratch']
  %s0 = inlined_call_operand.vmem [shape: f32[16,32], index: 0, kind: input, shape index: {}]
  %s1 = inlined_call_operand.vmem [shape: f32[16,32], index: 1, kind: input, shape index: {}]
  %s2 = inlined_call_operand.vmem [shape: f32[16,32], index: 2, kind: input, shape index: {}]
  %s3 = inlined_call_operand.vmem [shape: f32[4,32,8], index: 3, kind: input, shape index: {}]
  %s4 = inlined_call_operand.vmem [shape: f32[4,1,8], index: 4, kind: input, shape index: {}]
  %s5 = inlined_call_operand.vmem [shape: f32[4,32,8], index: 5, kind: input, shape index: {}]
  %s6 = inlined_call_operand.vmem [shape: f32[4,1,8], index: 6, kind: input, shape index: {}]
  %s7 = inlined_call_operand.vmem [shape: f32[4,32,8], index: 7, kind: input, shape index: {}]
  %s8 = inlined_call_operand.vmem [shape: f32[4,1,8], index: 8, kind: input, shape index: {}]
  %s9 = inlined_call_operand.vmem [shape: f32[4,8,32], index: 9, kind: input, shape index: {}]
  %s10 = inlined_call_operand.vmem [shape: f32[1,32], index: 10, kind: input, shape index: {}]
  %s11 = inlined_call_operand.hbm [shape: f32[16,32], index: 11, kind: output, shape index: {}]
  %s12 = sld [smem:[#allocation0]]
  $region54: #{tpu_custom_call.1} parent=0
    _
  %s14 = ssub.s32 1, %s12
  %s15 = scalar_select 0, %s14, %s12
  $region1: #{tpu_custom_call.1} parent=0
    #allocation2 [shape = 'u8[8192]{0}', space=vmem, size = 0x2000, scoped, tag = 'output window, operand 0, single buffered']
    #allocation3 [shape = 's32[1]{0}', space=sflag, size = 0x4, scoped, tag = 'scoped memory for tpu_custom_call.1']
    %16 = vsyncpa [#allocation3], 0
    // Predicated region
    $region2: #{tpu_custom_call.1} parent=1 // pred_check
      _
    $region3: #{tpu_custom_call.1} parent=1 // pred_check_branch
      %18 = sbr.rel (0) target = $region5
    $region4: #{tpu_custom_call.1} parent=1 // pred_region
      _
    $region5: #{tpu_custom_call.1} parent=1 // pred_fallthru
      _
    // Predicated region
    $region6: #{tpu_custom_call.1} parent=1 // pred_check
      _
    $region7: #{tpu_custom_call.1} parent=1 // pred_check_branch
      %20 = sbr.rel (0) target = $region9
    $region8: #{tpu_custom_call.1} parent=1 // pred_region
      _
    $region9: #{tpu_custom_call.1} parent=1 // pred_fallthru
      _
    // Predicated region
    $region10: #{tpu_custom_call.1} parent=1 // pred_check
      _
    $region11: #{tpu_custom_call.1} parent=1 // pred_check_branch
      %22 = sbr.rel (0) target = $region13
    $region12: #{tpu_custom_call.1} parent=1 // pred_region
      _
    $region13: #{tpu_custom_call.1} parent=1 // pred_fallthru
      _
    // Predicated region
    $region14: #{tpu_custom_call.1} parent=1 // pred_check
      _
    $region15: #{tpu_custom_call.1} parent=1 // pred_check_branch
      %24 = sbr.rel (0) target = $region17
    $region16: #{tpu_custom_call.1} parent=1 // pred_region
      _
    $region17: #{tpu_custom_call.1} parent=1 // pred_fallthru
      _
    // Predicated region
    $region18: #{tpu_custom_call.1} parent=1 // pred_check
      _
    $region19: #{tpu_custom_call.1} parent=1 // pred_check_branch
      %26 = sbr.rel (0) target = $region21
    $region20: #{tpu_custom_call.1} parent=1 // pred_region
      _
    $region21: #{tpu_custom_call.1} parent=1 // pred_fallthru
      _
    // Predicated region
    $region22: #{tpu_custom_call.1} parent=1 // pred_check
      _
    $region23: #{tpu_custom_call.1} parent=1 // pred_check_branch
      %28 = sbr.rel (0) target = $region25
    $region24: #{tpu_custom_call.1} parent=1 // pred_region
      _
    $region25: #{tpu_custom_call.1} parent=1 // pred_fallthru
      _
    // Predicated region
    $region26: #{tpu_custom_call.1} parent=1 // pred_check
      _
    $region27: #{tpu_custom_call.1} parent=1 // pred_check_branch
      %30 = sbr.rel (0) target = $region29
    $region28: #{tpu_custom_call.1} parent=1 // pred_region
      _
    $region29: #{tpu_custom_call.1} parent=1 // pred_fallthru
      _
    // Predicated region
    $region30: #{tpu_custom_call.1} parent=1 // pred_check
      _
    $region31: #{tpu_custom_call.1} parent=1 // pred_check_branch
      %32 = sbr.rel (0) target = $region33
    $region32: #{tpu_custom_call.1} parent=1 // pred_region
      _
    $region33: #{tpu_custom_call.1} parent=1 // pred_fallthru
      _
    // Predicated region
    $region34: #{tpu_custom_call.1} parent=1 // pred_check
      _
    $region35: #{tpu_custom_call.1} parent=1 // pred_check_branch
      %34 = sbr.rel (0) target = $region37
    $region36: #{tpu_custom_call.1} parent=1 // pred_region
      _
    $region37: #{tpu_custom_call.1} parent=1 // pred_fallthru
      _
    // Predicated region
    $region38: #{tpu_custom_call.1} parent=1 // pred_check
      _
    $region39: #{tpu_custom_call.1} parent=1 // pred_check_branch
      %36 = sbr.rel (0) target = $region41
    $region40: #{tpu_custom_call.1} parent=1 // pred_region
      _
    $region41: #{tpu_custom_call.1} parent=1 // pred_fallthru
      _
    // Predicated region
    $region42: #{tpu_custom_call.1} parent=1 // pred_check
      _
    $region43: #{tpu_custom_call.1} parent=1 // pred_check_branch
      %38 = sbr.rel (0) target = $region45
    $region44: #{tpu_custom_call.1} parent=1 // pred_region
      _
    $region45: #{tpu_custom_call.1} parent=1 // pred_fallthru
      _
    %v39 = vld [vmem:[%s0] sm:$0xff]
    %v40 = vld [vmem:[%s0 + $0x8] sm:$0xff]
    %v41 = vld [vmem:[%s1] sm:$0xff]
    %v42 = vld [vmem:[%s1 + $0x8] sm:$0xff]
    %v43 = vld [vmem:[%s2] sm:$0xff]
    %v44 = vld [vmem:[%s2 + $0x8] sm:$0xff]
    %v45 = vld [vmem:[%s3] sm:$0xff]
    %v46 = vld [vmem:[%s3 + $0x8] sm:$0xff]
    %v47 = vld [vmem:[%s3 + $0x10] sm:$0xff]
    %v48 = vld [vmem:[%s3 + $0x18] sm:$0xff]
    %v49 = vld [vmem:[%s4] sm:$0x1]
    %v51 = vlaneseq
    %v52 = vshrl.u32 %v51, 7
    %v53 = vsub.s32 0, %v52
    %v54 = vrot.slane %v49, %v53
    %vm56 = vcmask 261120
    %v58 = vsel %vm56, %v39, 0
    %v61 = vsel %vm56, %v40, 0
    %63 = vmatprep.subr.mxu0 0.0
    %64 = vmatpush1.msra.mxu0 %v45
    %65 = vmatprep.subr.mxu0 0.0
    %66 = vmatpush1.msra.mxu0 %v46
    %67 = vmatprep.subr.mxu0 0.0
    %68 = vmatpush1.msra.mxu0 %v47
    %69 = vmatprep.subr.mxu0 0.0
    %70 = vmatpush1.msra.mxu0 %v48
    %71 = vmatprep.subr.mxu0 0.0
    %72 = vmatpush1.msra.mxu0 0.0
    %73 = vmatprep.subr.mxu0 0.0
    %74 = vmatpush1.msra.mxu0 0.0
    %75 = vmatprep.subr.mxu0 0.0
    %76 = vmatpush1.msra.mxu0 0.0
    %77 = vmatprep.subr.mxu0 0.0
    %78 = vmatpush1.msra.mxu0 0.0
    %79 = vmatprep.subr.mxu0 0.0
    %80 = vmatpush1.msra.mxu0 0.0
    %81 = vmatprep.subr.mxu0 0.0
    %82 = vmatpush1.msra.mxu0 0.0
    %83 = vmatprep.subr.mxu0 0.0
    %84 = vmatpush1.msra.mxu0 0.0
    %85 = vmatprep.subr.mxu0 0.0
    %86 = vmatpush1.msra.mxu0 0.0
    %87 = vmatprep.subr.mxu0 0.0
    %88 = vmatpush1.msra.mxu0 0.0
    %89 = vmatprep.subr.mxu0 0.0
    %90 = vmatpush1.msra.mxu0 0.0
    %91 = vmatprep.subr.mxu0 0.0
    %92 = vmatpush1.msra.mxu0 0.0
    %93 = vmatprep.subr.mxu0 0.0
    %94 = vmatpush1.msra.mxu0 0.0
    %95 = vmatprep.subr.mxu0 0.0
    %96 = vmatpush1.msra.mxu0 0.0
    %97 = vmatprep.subr.mxu0 0.0
    %98 = vmatpush1.msra.mxu0 0.0
    %99 = vmatprep.subr.mxu0 0.0
    %100 = vmatpush1.msra.mxu0 0.0
    %101 = vmatprep.subr.mxu0 0.0
    %102 = vmatpush1.msra.mxu0 0.0
    %103 = vmatprep.subr.mxu0 0.0
    %104 = vmatpush1.msra.mxu0 0.0
    %105 = vmatprep.subr.mxu0 0.0
    %106 = vmatpush1.msra.mxu0 0.0
    %107 = vmatprep.subr.mxu0 0.0
    %108 = vmatpush1.msra.mxu0 0.0
    %109 = vmatprep.subr.mxu0 0.0
    %110 = vmatpush1.msra.mxu0 0.0
    %111 = vmatprep.subr.mxu0 0.0
    %112 = vmatpush1.msra.mxu0 0.0
    %113 = vmatprep.subr.mxu0 0.0
    %114 = vmatpush1.msra.mxu0 0.0
    %115 = vmatprep.subr.mxu0 0.0
    %116 = vmatpush1.msra.mxu0 0.0
    %117 = vmatprep.subr.mxu0 0.0
    %118 = vmatpush1.msra.mxu0 0.0
    %119 = vmatprep.subr.mxu0 0.0
    %120 = vmatpush1.msra.mxu0 0.0
    %121 = vmatprep.subr.mxu0 0.0
    %122 = vmatpush1.msra.mxu0 0.0
    %123 = vmatprep.subr.mxu0 0.0
    %124 = vmatpush1.msra.mxu0 0.0
    %125 = vmatprep.subr.mxu0 0.0
    %126 = vmatpush1.msra.mxu0 0.0
    %127 = vmatprep.mubr.f32.mxu0 0.0
    %128 = vmatmul.mubr.f32.gmra.mrb[0].mxu0 %v58
    %v129 = vpop.f32.mrb[0].mxu0
    %v130 = vadd.f32 %v54, %v129
    %v131 = vpop.f32.mrb[0].mxu0
    %132 = vmatprep.mubr.f32.mxu0 0.0
    %133 = vmatmul.mubr.f32.gmra.mrb[0].mxu0 %v61
    %v134 = vpop.f32.mrb[0].mxu0
    %v135 = vadd.f32 %v54, %v134
    %v136 = vpop.f32.mrb[0].mxu0
    %137 = vdwg.mxu0
    %v138 = vld [vmem:[%s5] sm:$0xff]
    %v139 = vld [vmem:[%s5 + $0x8] sm:$0xff]
    %v140 = vld [vmem:[%s5 + $0x10] sm:$0xff]
    %v141 = vld [vmem:[%s5 + $0x18] sm:$0xff]
    %v142 = vld [vmem:[%s6] sm:$0x1]
    %v144 = vlaneseq
    %v145 = vshrl.u32 %v144, 7
    %v146 = vsub.s32 0, %v145
    %v147 = vrot.slane %v142, %v146
    %v150 = vsel %vm56, %v41, 0
    %v153 = vsel %vm56, %v42, 0
    %155 = vmatprep.subr.mxu0 0.0
    %156 = vmatpush1.msra.mxu0 %v138
    %157 = vmatprep.subr.mxu0 0.0
    %158 = vmatpush1.msra.mxu0 %v139
    %159 = vmatprep.subr.mxu0 0.0
    %160 = vmatpush1.msra.mxu0 %v140
    %161 = vmatprep.subr.mxu0 0.0
    %162 = vmatpush1.msra.mxu0 %v141
    %163 = vmatprep.subr.mxu0 0.0
    %164 = vmatpush1.msra.mxu0 0.0
    %165 = vmatprep.subr.mxu0 0.0
    %166 = vmatpush1.msra.mxu0 0.0
    %167 = vmatprep.subr.mxu0 0.0
    %168 = vmatpush1.msra.mxu0 0.0
    %169 = vmatprep.subr.mxu0 0.0
    %170 = vmatpush1.msra.mxu0 0.0
    %171 = vmatprep.subr.mxu0 0.0
    %172 = vmatpush1.msra.mxu0 0.0
    %173 = vmatprep.subr.mxu0 0.0
    %174 = vmatpush1.msra.mxu0 0.0
    %175 = vmatprep.subr.mxu0 0.0
    %176 = vmatpush1.msra.mxu0 0.0
    %177 = vmatprep.subr.mxu0 0.0
    %178 = vmatpush1.msra.mxu0 0.0
    %179 = vmatprep.subr.mxu0 0.0
    %180 = vmatpush1.msra.mxu0 0.0
    %181 = vmatprep.subr.mxu0 0.0
    %182 = vmatpush1.msra.mxu0 0.0
    %183 = vmatprep.subr.mxu0 0.0
    %184 = vmatpush1.msra.mxu0 0.0
    %185 = vmatprep.subr.mxu0 0.0
    %186 = vmatpush1.msra.mxu0 0.0
    %187 = vmatprep.subr.mxu0 0.0
    %188 = vmatpush1.msra.mxu0 0.0
    %189 = vmatprep.subr.mxu0 0.0
    %190 = vmatpush1.msra.mxu0 0.0
    %191 = vmatprep.subr.mxu0 0.0
    %192 = vmatpush1.msra.mxu0 0.0
    %193 = vmatprep.subr.mxu0 0.0
    %194 = vmatpush1.msra.mxu0 0.0
    %195 = vmatprep.subr.mxu0 0.0
    %196 = vmatpush1.msra.mxu0 0.0
    %197 = vmatprep.subr.mxu0 0.0
    %198 = vmatpush1.msra.mxu0 0.0
    %199 = vmatprep.subr.mxu0 0.0
    %200 = vmatpush1.msra.mxu0 0.0
    %201 = vmatprep.subr.mxu0 0.0
    %202 = vmatpush1.msra.mxu0 0.0
    %203 = vmatprep.subr.mxu0 0.0
    %204 = vmatpush1.msra.mxu0 0.0
    %205 = vmatprep.subr.mxu0 0.0
    %206 = vmatpush1.msra.mxu0 0.0
    %207 = vmatprep.subr.mxu0 0.0
    %208 = vmatpush1.msra.mxu0 0.0
    %209 = vmatprep.subr.mxu0 0.0
    %210 = vmatpush1.msra.mxu0 0.0
    %211 = vmatprep.subr.mxu0 0.0
    %212 = vmatpush1.msra.mxu0 0.0
    %213 = vmatprep.subr.mxu0 0.0
    %214 = vmatpush1.msra.mxu0 0.0
    %215 = vmatprep.subr.mxu0 0.0
    %216 = vmatpush1.msra.mxu0 0.0
    %217 = vmatprep.subr.mxu0 0.0
    %218 = vmatpush1.msra.mxu0 0.0
    %219 = vmatprep.mubr.f32.mxu0 0.0
    %220 = vmatmul.mubr.f32.gmra.mrb[0].mxu0 %v150
    %v221 = vpop.f32.mrb[0].mxu0
    %v222 = vadd.f32 %v147, %v221
    %v223 = vpop.f32.mrb[0].mxu0
    %224 = vmatprep.mubr.f32.mxu0 0.0
    %225 = vmatmul.mubr.f32.gmra.mrb[0].mxu0 %v153
    %v226 = vpop.f32.mrb[0].mxu0
    %v227 = vadd.f32 %v147, %v226
    %v228 = vpop.f32.mrb[0].mxu0
    %229 = vdwg.mxu0
    %v230 = vld [vmem:[%s7] sm:$0xff]
    %v231 = vld [vmem:[%s7 + $0x8] sm:$0xff]
    %v232 = vld [vmem:[%s7 + $0x10] sm:$0xff]
    %v233 = vld [vmem:[%s7 + $0x18] sm:$0xff]
    %v234 = vld [vmem:[%s8] sm:$0x1]
    %v236 = vlaneseq
    %v237 = vshrl.u32 %v236, 7
    %v238 = vsub.s32 0, %v237
    %v239 = vrot.slane %v234, %v238
    %v242 = vsel %vm56, %v43, 0
    %v245 = vsel %vm56, %v44, 0
    %247 = vmatprep.subr.mxu0 0.0
    %248 = vmatpush1.msra.mxu0 %v230
    %249 = vmatprep.subr.mxu0 0.0
    %250 = vmatpush1.msra.mxu0 %v231
    %251 = vmatprep.subr.mxu0 0.0
    %252 = vmatpush1.msra.mxu0 %v232
    %253 = vmatprep.subr.mxu0 0.0
    %254 = vmatpush1.msra.mxu0 %v233
    %255 = vmatprep.subr.mxu0 0.0
    %256 = vmatpush1.msra.mxu0 0.0
    %257 = vmatprep.subr.mxu0 0.0
    %258 = vmatpush1.msra.mxu0 0.0
    %259 = vmatprep.subr.mxu0 0.0
    %260 = vmatpush1.msra.mxu0 0.0
    %261 = vmatprep.subr.mxu0 0.0
    %262 = vmatpush1.msra.mxu0 0.0
    %263 = vmatprep.subr.mxu0 0.0
    %264 = vmatpush1.msra.mxu0 0.0
    %265 = vmatprep.subr.mxu0 0.0
    %266 = vmatpush1.msra.mxu0 0.0
    %267 = vmatprep.subr.mxu0 0.0
    %268 = vmatpush1.msra.mxu0 0.0
    %269 = vmatprep.subr.mxu0 0.0
    %270 = vmatpush1.msra.mxu0 0.0
    %271 = vmatprep.subr.mxu0 0.0
    %272 = vmatpush1.msra.mxu0 0.0
    %273 = vmatprep.subr.mxu0 0.0
    %274 = vmatpush1.msra.mxu0 0.0
    %275 = vmatprep.subr.mxu0 0.0
    %276 = vmatpush1.msra.mxu0 0.0
    %277 = vmatprep.subr.mxu0 0.0
    %278 = vmatpush1.msra.mxu0 0.0
    %279 = vmatprep.subr.mxu0 0.0
    %280 = vmatpush1.msra.mxu0 0.0
    %281 = vmatprep.subr.mxu0 0.0
    %282 = vmatpush1.msra.mxu0 0.0
    %283 = vmatprep.subr.mxu0 0.0
    %284 = vmatpush1.msra.mxu0 0.0
    %285 = vmatprep.subr.mxu0 0.0
    %286 = vmatpush1.msra.mxu0 0.0
    %287 = vmatprep.subr.mxu0 0.0
    %288 = vmatpush1.msra.mxu0 0.0
    %289 = vmatprep.subr.mxu0 0.0
    %290 = vmatpush1.msra.mxu0 0.0
    %291 = vmatprep.subr.mxu0 0.0
    %292 = vmatpush1.msra.mxu0 0.0
    %293 = vmatprep.subr.mxu0 0.0
    %294 = vmatpush1.msra.mxu0 0.0
    %295 = vmatprep.subr.mxu0 0.0
    %296 = vmatpush1.msra.mxu0 0.0
    %297 = vmatprep.subr.mxu0 0.0
    %298 = vmatpush1.msra.mxu0 0.0
    %299 = vmatprep.subr.mxu0 0.0
    %300 = vmatpush1.msra.mxu0 0.0
    %301 = vmatprep.subr.mxu0 0.0
    %302 = vmatpush1.msra.mxu0 0.0
    %303 = vmatprep.subr.mxu0 0.0
    %304 = vmatpush1.msra.mxu0 0.0
    %305 = vmatprep.subr.mxu0 0.0
    %306 = vmatpush1.msra.mxu0 0.0
    %307 = vmatprep.subr.mxu0 0.0
    %308 = vmatpush1.msra.mxu0 0.0
    %309 = vmatprep.subr.mxu0 0.0
    %310 = vmatpush1.msra.mxu0 0.0
    %311 = vmatprep.mubr.f32.mxu0 0.0
    %312 = vmatmul.mubr.f32.gmra.mrb[0].mxu0 %v242
    %v313 = vpop.f32.mrb[0].mxu0
    %v314 = vadd.f32 %v239, %v313
    %v315 = vpop.f32.mrb[0].mxu0
    %316 = vmatprep.mubr.f32.mxu0 0.0
    %317 = vmatmul.mubr.f32.gmra.mrb[0].mxu0 %v245
    %v318 = vpop.f32.mrb[0].mxu0
    %v319 = vadd.f32 %v239, %v318
    %v320 = vpop.f32.mrb[0].mxu0
    %321 = vdwg.mxu0
    %vm322 = vcmask 64512
    %v324 = vsel %vm322, %v130, 0
    %v327 = vsel %vm322, %v222, 0
    %329 = vmatprep.subr.mxu0 0.0
    %330 = vmatpush1.xpose.msra.mxu0 %v327
    %331 = vmatprep.subr.mxu0 0.0
    %332 = vmatpush1.xpose.msra.mxu0 0.0
    %333 = vmatprep.subr.mxu0 0.0
    %334 = vmatpush1.xpose.msra.mxu0 0.0
    %335 = vmatprep.subr.mxu0 0.0
    %336 = vmatpush1.xpose.msra.mxu0 0.0
    %337 = vmatprep.subr.mxu0 0.0
    %338 = vmatpush1.xpose.msra.mxu0 0.0
    %339 = vmatprep.subr.mxu0 0.0
    %340 = vmatpush1.xpose.msra.mxu0 0.0
    %341 = vmatprep.subr.mxu0 0.0
    %342 = vmatpush1.xpose.msra.mxu0 0.0
    %343 = vmatprep.subr.mxu0 0.0
    %344 = vmatpush1.xpose.msra.mxu0 0.0
    %345 = vmatprep.subr.mxu0 0.0
    %346 = vmatpush1.xpose.msra.mxu0 0.0
    %347 = vmatprep.subr.mxu0 0.0
    %348 = vmatpush1.xpose.msra.mxu0 0.0
    %349 = vmatprep.subr.mxu0 0.0
    %350 = vmatpush1.xpose.msra.mxu0 0.0
    %351 = vmatprep.subr.mxu0 0.0
    %352 = vmatpush1.xpose.msra.mxu0 0.0
    %353 = vmatprep.subr.mxu0 0.0
    %354 = vmatpush1.xpose.msra.mxu0 0.0
    %355 = vmatprep.subr.mxu0 0.0
    %356 = vmatpush1.xpose.msra.mxu0 0.0
    %357 = vmatprep.subr.mxu0 0.0
    %358 = vmatpush1.xpose.msra.mxu0 0.0
    %359 = vmatprep.subr.mxu0 0.0
    %360 = vmatpush1.xpose.msra.mxu0 0.0
    %361 = vmatprep.subr.mxu0 0.0
    %362 = vmatpush1.xpose.msra.mxu0 0.0
    %363 = vmatprep.subr.mxu0 0.0
    %364 = vmatpush1.xpose.msra.mxu0 0.0
    %365 = vmatprep.subr.mxu0 0.0
    %366 = vmatpush1.xpose.msra.mxu0 0.0
    %367 = vmatprep.subr.mxu0 0.0
    %368 = vmatpush1.xpose.msra.mxu0 0.0
    %369 = vmatprep.subr.mxu0 0.0
    %370 = vmatpush1.xpose.msra.mxu0 0.0
    %371 = vmatprep.subr.mxu0 0.0
    %372 = vmatpush1.xpose.msra.mxu0 0.0
    %373 = vmatprep.subr.mxu0 0.0
    %374 = vmatpush1.xpose.msra.mxu0 0.0
    %375 = vmatprep.subr.mxu0 0.0
    %376 = vmatpush1.xpose.msra.mxu0 0.0
    %377 = vmatprep.subr.mxu0 0.0
    %378 = vmatpush1.xpose.msra.mxu0 0.0
    %379 = vmatprep.subr.mxu0 0.0
    %380 = vmatpush1.xpose.msra.mxu0 0.0
    %381 = vmatprep.subr.mxu0 0.0
    %382 = vmatpush1.xpose.msra.mxu0 0.0
    %383 = vmatprep.subr.mxu0 0.0
    %384 = vmatpush1.xpose.msra.mxu0 0.0
    %385 = vmatprep.subr.mxu0 0.0
    %386 = vmatpush1.xpose.msra.mxu0 0.0
    %387 = vmatprep.subr.mxu0 0.0
    %388 = vmatpush1.xpose.msra.mxu0 0.0
    %389 = vmatprep.subr.mxu0 0.0
    %390 = vmatpush1.xpose.msra.mxu0 0.0
    %391 = vmatprep.subr.mxu0 0.0
    %392 = vmatpush1.xpose.msra.mxu0 0.0
    %393 = vmatprep.mubr.f32.mxu0 0.0
    %394 = vmatmul.mubr.f32.gmra.mrb[0].mxu0 %v324
    %v395 = vpop.f32.mrb[0].mxu0
    %v396 = vadd.f32 0.0, %v395
    %v397 = vpop.f32.mrb[0].mxu0
    %398 = vdwg.mxu0
    %v400 = vsel %vm322, %v135, 0
    %v403 = vsel %vm322, %v227, 0
    %405 = vmatprep.subr.mxu0 0.0
    %406 = vmatpush1.xpose.msra.mxu0 %v403
    %407 = vmatprep.subr.mxu0 0.0
    %408 = vmatpush1.xpose.msra.mxu0 0.0
    %409 = vmatprep.subr.mxu0 0.0
    %410 = vmatpush1.xpose.msra.mxu0 0.0
    %411 = vmatprep.subr.mxu0 0.0
    %412 = vmatpush1.xpose.msra.mxu0 0.0
    %413 = vmatprep.subr.mxu0 0.0
    %414 = vmatpush1.xpose.msra.mxu0 0.0
    %415 = vmatprep.subr.mxu0 0.0
    %416 = vmatpush1.xpose.msra.mxu0 0.0
    %417 = vmatprep.subr.mxu0 0.0
    %418 = vmatpush1.xpose.msra.mxu0 0.0
    %419 = vmatprep.subr.mxu0 0.0
    %420 = vmatpush1.xpose.msra.mxu0 0.0
    %421 = vmatprep.subr.mxu0 0.0
    %422 = vmatpush1.xpose.msra.mxu0 0.0
    %423 = vmatprep.subr.mxu0 0.0
    %424 = vmatpush1.xpose.msra.mxu0 0.0
    %425 = vmatprep.subr.mxu0 0.0
    %426 = vmatpush1.xpose.msra.mxu0 0.0
    %427 = vmatprep.subr.mxu0 0.0
    %428 = vmatpush1.xpose.msra.mxu0 0.0
    %429 = vmatprep.subr.mxu0 0.0
    %430 = vmatpush1.xpose.msra.mxu0 0.0
    %431 = vmatprep.subr.mxu0 0.0
    %432 = vmatpush1.xpose.msra.mxu0 0.0
    %433 = vmatprep.subr.mxu0 0.0
    %434 = vmatpush1.xpose.msra.mxu0 0.0
    %435 = vmatprep.subr.mxu0 0.0
    %436 = vmatpush1.xpose.msra.mxu0 0.0
    %437 = vmatprep.subr.mxu0 0.0
    %438 = vmatpush1.xpose.msra.mxu0 0.0
    %439 = vmatprep.subr.mxu0 0.0
    %440 = vmatpush1.xpose.msra.mxu0 0.0
    %441 = vmatprep.subr.mxu0 0.0
    %442 = vmatpush1.xpose.msra.mxu0 0.0
    %443 = vmatprep.subr.mxu0 0.0
    %444 = vmatpush1.xpose.msra.mxu0 0.0
    %445 = vmatprep.subr.mxu0 0.0
    %446 = vmatpush1.xpose.msra.mxu0 0.0
    %447 = vmatprep.subr.mxu0 0.0
    %448 = vmatpush1.xpose.msra.mxu0 0.0
    %449 = vmatprep.subr.mxu0 0.0
    %450 = vmatpush1.xpose.msra.mxu0 0.0
    %451 = vmatprep.subr.mxu0 0.0
    %452 = vmatpush1.xpose.msra.mxu0 0.0
    %453 = vmatprep.subr.mxu0 0.0
    %454 = vmatpush1.xpose.msra.mxu0 0.0
    %455 = vmatprep.subr.mxu0 0.0
    %456 = vmatpush1.xpose.msra.mxu0 0.0
    %457 = vmatprep.subr.mxu0 0.0
    %458 = vmatpush1.xpose.msra.mxu0 0.0
    %459 = vmatprep.subr.mxu0 0.0
    %460 = vmatpush1.xpose.msra.mxu0 0.0
    %461 = vmatprep.subr.mxu0 0.0
    %462 = vmatpush1.xpose.msra.mxu0 0.0
    %463 = vmatprep.subr.mxu0 0.0
    %464 = vmatpush1.xpose.msra.mxu0 0.0
    %465 = vmatprep.subr.mxu0 0.0
    %466 = vmatpush1.xpose.msra.mxu0 0.0
    %467 = vmatprep.subr.mxu0 0.0
    %468 = vmatpush1.xpose.msra.mxu0 0.0
    %469 = vmatprep.mubr.f32.mxu0 0.0
    %470 = vmatmul.mubr.f32.gmra.mrb[0].mxu0 %v400
    %v471 = vpop.f32.mrb[0].mxu0
    %v472 = vadd.f32 0.0, %v471
    %v473 = vpop.f32.mrb[0].mxu0
    %474 = vdwg.mxu0
    %v475 = vsel %vm322, %v396, -inf
    %476 = vmax.xlane.f32.xlu0 %v475
    %v477 = vpop.xlane.xlu0 %476
    %v478 = vsel %vm322, %v472, -inf
    %479 = vmax.xlane.f32.xlu0 %v478
    %v480 = vpop.xlane.xlu0 %479
    %v481 = vsub.f32 %v396, %v477
    %v482 = vsub.f32 %v472, %v480
    %v483 = vmul.f32 %v481, 1.442695
    %v484 = vpow.pop %v483
    %v485 = vmul.f32 %v482, 1.442695
    %v486 = vpow.pop %v485
    %v487 = vsel %vm322, %v484, 0.0
    %488 = vadd.xlane.f32.xlu0 %v487
    %v489 = vpop.xlane.xlu0 %488
    %v490 = vsel %vm322, %v486, 0.0
    %491 = vadd.xlane.f32.xlu0 %v490
    %v492 = vpop.xlane.xlu0 %491
    %v493 = vrcp.pop %v489
    %v494 = vmul.f32 %v484, %v493
    %v495 = vrcp.pop %v492
    %v496 = vmul.f32 %v486, %v495
    %v498 = vsel %vm322, %v494, 0
    %500 = vmatprep.subr.mxu0 0.0
    %501 = vmatpush1.msra.mxu0 %v314
    %502 = vmatprep.subr.mxu0 0.0
    %503 = vmatpush1.msra.mxu0 0.0
    %504 = vmatprep.subr.mxu0 0.0
    %505 = vmatpush1.msra.mxu0 0.0
    %506 = vmatprep.subr.mxu0 0.0
    %507 = vmatpush1.msra.mxu0 0.0
    %508 = vmatprep.subr.mxu0 0.0
    %509 = vmatpush1.msra.mxu0 0.0
    %510 = vmatprep.subr.mxu0 0.0
    %511 = vmatpush1.msra.mxu0 0.0
    %512 = vmatprep.subr.mxu0 0.0
    %513 = vmatpush1.msra.mxu0 0.0
    %514 = vmatprep.subr.mxu0 0.0
    %515 = vmatpush1.msra.mxu0 0.0
    %516 = vmatprep.subr.mxu0 0.0
    %517 = vmatpush1.msra.mxu0 0.0
    %518 = vmatprep.subr.mxu0 0.0
    %519 = vmatpush1.msra.mxu0 0.0
    %520 = vmatprep.subr.mxu0 0.0
    %521 = vmatpush1.msra.mxu0 0.0
    %522 = vmatprep.subr.mxu0 0.0
    %523 = vmatpush1.msra.mxu0 0.0
    %524 = vmatprep.subr.mxu0 0.0
    %525 = vmatpush1.msra.mxu0 0.0
    %526 = vmatprep.subr.mxu0 0.0
    %527 = vmatpush1.msra.mxu0 0.0
    %528 = vmatprep.subr.mxu0 0.0
    %529 = vmatpush1.msra.mxu0 0.0
    %530 = vmatprep.subr.mxu0 0.0
    %531 = vmatpush1.msra.mxu0 0.0
    %532 = vmatprep.subr.mxu0 0.0
    %533 = vmatpush1.msra.mxu0 0.0
    %534 = vmatprep.subr.mxu0 0.0
    %535 = vmatpush1.msra.mxu0 0.0
    %536 = vmatprep.subr.mxu0 0.0
    %537 = vmatpush1.msra.mxu0 0.0
    %538 = vmatprep.subr.mxu0 0.0
    %539 = vmatpush1.msra.mxu0 0.0
    %540 = vmatprep.subr.mxu0 0.0
    %541 = vmatpush1.msra.mxu0 0.0
    %542 = vmatprep.subr.mxu0 0.0
    %543 = vmatpush1.msra.mxu0 0.0
    %544 = vmatprep.subr.mxu0 0.0
    %545 = vmatpush1.msra.mxu0 0.0
    %546 = vmatprep.subr.mxu0 0.0
    %547 = vmatpush1.msra.mxu0 0.0
    %548 = vmatprep.subr.mxu0 0.0
    %549 = vmatpush1.msra.mxu0 0.0
    %550 = vmatprep.subr.mxu0 0.0
    %551 = vmatpush1.msra.mxu0 0.0
    %552 = vmatprep.subr.mxu0 0.0
    %553 = vmatpush1.msra.mxu0 0.0
    %554 = vmatprep.subr.mxu0 0.0
    %555 = vmatpush1.msra.mxu0 0.0
    %556 = vmatprep.subr.mxu0 0.0
    %557 = vmatpush1.msra.mxu0 0.0
    %558 = vmatprep.subr.mxu0 0.0
    %559 = vmatpush1.msra.mxu0 0.0
    %560 = vmatprep.subr.mxu0 0.0
    %561 = vmatpush1.msra.mxu0 0.0
    %562 = vmatprep.subr.mxu0 0.0
    %563 = vmatpush1.msra.mxu0 0.0
    %564 = vmatprep.mubr.f32.mxu0 0.0
    %565 = vmatmul.mubr.f32.gmra.mrb[0].mxu0 %v498
    %v566 = vpop.f32.mrb[0].mxu0
    %v567 = vadd.f32 0.0, %v566
    %v568 = vpop.f32.mrb[0].mxu0
    %569 = vdwg.mxu0
    %v571 = vsel %vm322, %v496, 0
    %573 = vmatprep.subr.mxu0 0.0
    %574 = vmatpush1.msra.mxu0 %v319
    %575 = vmatprep.subr.mxu0 0.0
    %576 = vmatpush1.msra.mxu0 0.0
    %577 = vmatprep.subr.mxu0 0.0
    %578 = vmatpush1.msra.mxu0 0.0
    %579 = vmatprep.subr.mxu0 0.0
    %580 = vmatpush1.msra.mxu0 0.0
    %581 = vmatprep.subr.mxu0 0.0
    %582 = vmatpush1.msra.mxu0 0.0
    %583 = vmatprep.subr.mxu0 0.0
    %584 = vmatpush1.msra.mxu0 0.0
    %585 = vmatprep.subr.mxu0 0.0
    %586 = vmatpush1.msra.mxu0 0.0
    %587 = vmatprep.subr.mxu0 0.0
    %588 = vmatpush1.msra.mxu0 0.0
    %589 = vmatprep.subr.mxu0 0.0
    %590 = vmatpush1.msra.mxu0 0.0
    %591 = vmatprep.subr.mxu0 0.0
    %592 = vmatpush1.msra.mxu0 0.0
    %593 = vmatprep.subr.mxu0 0.0
    %594 = vmatpush1.msra.mxu0 0.0
    %595 = vmatprep.subr.mxu0 0.0
    %596 = vmatpush1.msra.mxu0 0.0
    %597 = vmatprep.subr.mxu0 0.0
    %598 = vmatpush1.msra.mxu0 0.0
    %599 = vmatprep.subr.mxu0 0.0
    %600 = vmatpush1.msra.mxu0 0.0
    %601 = vmatprep.subr.mxu0 0.0
    %602 = vmatpush1.msra.mxu0 0.0
    %603 = vmatprep.subr.mxu0 0.0
    %604 = vmatpush1.msra.mxu0 0.0
    %605 = vmatprep.subr.mxu0 0.0
    %606 = vmatpush1.msra.mxu0 0.0
    %607 = vmatprep.subr.mxu0 0.0
    %608 = vmatpush1.msra.mxu0 0.0
    %609 = vmatprep.subr.mxu0 0.0
    %610 = vmatpush1.msra.mxu0 0.0
    %611 = vmatprep.subr.mxu0 0.0
    %612 = vmatpush1.msra.mxu0 0.0
    %613 = vmatprep.subr.mxu0 0.0
    %614 = vmatpush1.msra.mxu0 0.0
    %615 = vmatprep.subr.mxu0 0.0
    %616 = vmatpush1.msra.mxu0 0.0
    %617 = vmatprep.subr.mxu0 0.0
    %618 = vmatpush1.msra.mxu0 0.0
    %619 = vmatprep.subr.mxu0 0.0
    %620 = vmatpush1.msra.mxu0 0.0
    %621 = vmatprep.subr.mxu0 0.0
    %622 = vmatpush1.msra.mxu0 0.0
    %623 = vmatprep.subr.mxu0 0.0
    %624 = vmatpush1.msra.mxu0 0.0
    %625 = vmatprep.subr.mxu0 0.0
    %626 = vmatpush1.msra.mxu0 0.0
    %627 = vmatprep.subr.mxu0 0.0
    %628 = vmatpush1.msra.mxu0 0.0
    %629 = vmatprep.subr.mxu0 0.0
    %630 = vmatpush1.msra.mxu0 0.0
    %631 = vmatprep.subr.mxu0 0.0
    %632 = vmatpush1.msra.mxu0 0.0
    %633 = vmatprep.subr.mxu0 0.0
    %634 = vmatpush1.msra.mxu0 0.0
    %635 = vmatprep.subr.mxu0 0.0
    %636 = vmatpush1.msra.mxu0 0.0
    %637 = vmatprep.mubr.f32.mxu0 0.0
    %638 = vmatmul.mubr.f32.gmra.mrb[0].mxu0 %v571
    %v639 = vpop.f32.mrb[0].mxu0
    %v640 = vadd.f32 0.0, %v639
    %v641 = vpop.f32.mrb[0].mxu0
    %642 = vdwg.mxu0
    %v643 = vld [vmem:[%s9] sm:$0xff]
    %s644 = scalar_lea.vmem %s3, 32
    %v645 = vld [vmem:[%s644] sm:$0xff]
    %v646 = vld [vmem:[%s644 + $0x8] sm:$0xff]
    %v647 = vld [vmem:[%s644 + $0x10] sm:$0xff]
    %v648 = vld [vmem:[%s644 + $0x18] sm:$0xff]
    %s649 = scalar_lea.vmem %s4, 1
    %v650 = vld [vmem:[%s649] sm:$0x1]
    %v652 = vlaneseq
    %v653 = vshrl.u32 %v652, 7
    %v654 = vsub.s32 0, %v653
    %v655 = vrot.slane %v650, %v654
    %657 = vmatprep.subr.mxu0 0.0
    %658 = vmatpush1.msra.mxu0 %v645
    %659 = vmatprep.subr.mxu0 0.0
    %660 = vmatpush1.msra.mxu0 %v646
    %661 = vmatprep.subr.mxu0 0.0
    %662 = vmatpush1.msra.mxu0 %v647
    %663 = vmatprep.subr.mxu0 0.0
    %664 = vmatpush1.msra.mxu0 %v648
    %665 = vmatprep.subr.mxu0 0.0
    %666 = vmatpush1.msra.mxu0 0.0
    %667 = vmatprep.subr.mxu0 0.0
    %668 = vmatpush1.msra.mxu0 0.0
    %669 = vmatprep.subr.mxu0 0.0
    %670 = vmatpush1.msra.mxu0 0.0
    %671 = vmatprep.subr.mxu0 0.0
    %672 = vmatpush1.msra.mxu0 0.0
    %673 = vmatprep.subr.mxu0 0.0
    %674 = vmatpush1.msra.mxu0 0.0
    %675 = vmatprep.subr.mxu0 0.0
    %676 = vmatpush1.msra.mxu0 0.0
    %677 = vmatprep.subr.mxu0 0.0
    %678 = vmatpush1.msra.mxu0 0.0
    %679 = vmatprep.subr.mxu0 0.0
    %680 = vmatpush1.msra.mxu0 0.0
    %681 = vmatprep.subr.mxu0 0.0
    %682 = vmatpush1.msra.mxu0 0.0
    %683 = vmatprep.subr.mxu0 0.0
    %684 = vmatpush1.msra.mxu0 0.0
    %685 = vmatprep.subr.mxu0 0.0
    %686 = vmatpush1.msra.mxu0 0.0
    %687 = vmatprep.subr.mxu0 0.0
    %688 = vmatpush1.msra.mxu0 0.0
    %689 = vmatprep.subr.mxu0 0.0
    %690 = vmatpush1.msra.mxu0 0.0
    %691 = vmatprep.subr.mxu0 0.0
    %692 = vmatpush1.msra.mxu0 0.0
    %693 = vmatprep.subr.mxu0 0.0
    %694 = vmatpush1.msra.mxu0 0.0
    %695 = vmatprep.subr.mxu0 0.0
    %696 = vmatpush1.msra.mxu0 0.0
    %697 = vmatprep.subr.mxu0 0.0
    %698 = vmatpush1.msra.mxu0 0.0
    %699 = vmatprep.subr.mxu0 0.0
    %700 = vmatpush1.msra.mxu0 0.0
    %701 = vmatprep.subr.mxu0 0.0
    %702 = vmatpush1.msra.mxu0 0.0
    %703 = vmatprep.subr.mxu0 0.0
    %704 = vmatpush1.msra.mxu0 0.0
    %705 = vmatprep.subr.mxu0 0.0
    %706 = vmatpush1.msra.mxu0 0.0
    %707 = vmatprep.subr.mxu0 0.0
    %708 = vmatpush1.msra.mxu0 0.0
    %709 = vmatprep.subr.mxu0 0.0
    %710 = vmatpush1.msra.mxu0 0.0
    %711 = vmatprep.subr.mxu0 0.0
    %712 = vmatpush1.msra.mxu0 0.0
    %713 = vmatprep.subr.mxu0 0.0
    %714 = vmatpush1.msra.mxu0 0.0
    %715 = vmatprep.subr.mxu0 0.0
    %716 = vmatpush1.msra.mxu0 0.0
    %717 = vmatprep.subr.mxu0 0.0
    %718 = vmatpush1.msra.mxu0 0.0
    %719 = vmatprep.subr.mxu0 0.0
    %720 = vmatpush1.msra.mxu0 0.0
    %721 = vmatprep.mubr.f32.mxu0 0.0
    %722 = vmatmul.mubr.f32.gmra.mrb[0].mxu0 %v58
    %v723 = vpop.f32.mrb[0].mxu0
    %v724 = vadd.f32 %v655, %v723
    %v725 = vpop.f32.mrb[0].mxu0
    %726 = vmatprep.mubr.f32.mxu0 0.0
    %727 = vmatmul.mubr.f32.gmra.mrb[0].mxu0 %v61
    %v728 = vpop.f32.mrb[0].mxu0
    %v729 = vadd.f32 %v655, %v728
    %v730 = vpop.f32.mrb[0].mxu0
    %731 = vdwg.mxu0
    %s732 = scalar_lea.vmem %s5, 32
    %v733 = vld [vmem:[%s732] sm:$0xff]
    %v734 = vld [vmem:[%s732 + $0x8] sm:$0xff]
    %v735 = vld [vmem:[%s732 + $0x10] sm:$0xff]
    %v736 = vld [vmem:[%s732 + $0x18] sm:$0xff]
    %s737 = scalar_lea.vmem %s6, 1
    %v738 = vld [vmem:[%s737] sm:$0x1]
    %v740 = vlaneseq
    %v741 = vshrl.u32 %v740, 7
    %v742 = vsub.s32 0, %v741
    %v743 = vrot.slane %v738, %v742
    %745 = vmatprep.subr.mxu0 0.0
    %746 = vmatpush1.msra.mxu0 %v733
    %747 = vmatprep.subr.mxu0 0.0
    %748 = vmatpush1.msra.mxu0 %v734
    %749 = vmatprep.subr.mxu0 0.0
    %750 = vmatpush1.msra.mxu0 %v735
    %751 = vmatprep.subr.mxu0 0.0
    %752 = vmatpush1.msra.mxu0 %v736
    %753 = vmatprep.subr.mxu0 0.0
    %754 = vmatpush1.msra.mxu0 0.0
    %755 = vmatprep.subr.mxu0 0.0
    %756 = vmatpush1.msra.mxu0 0.0
    %757 = vmatprep.subr.mxu0 0.0
    %758 = vmatpush1.msra.mxu0 0.0
    %759 = vmatprep.subr.mxu0 0.0
    %760 = vmatpush1.msra.mxu0 0.0
    %761 = vmatprep.subr.mxu0 0.0
    %762 = vmatpush1.msra.mxu0 0.0
    %763 = vmatprep.subr.mxu0 0.0
    %764 = vmatpush1.msra.mxu0 0.0
    %765 = vmatprep.subr.mxu0 0.0
    %766 = vmatpush1.msra.mxu0 0.0
    %767 = vmatprep.subr.mxu0 0.0
    %768 = vmatpush1.msra.mxu0 0.0
    %769 = vmatprep.subr.mxu0 0.0
    %770 = vmatpush1.msra.mxu0 0.0
    %771 = vmatprep.subr.mxu0 0.0
    %772 = vmatpush1.msra.mxu0 0.0
    %773 = vmatprep.subr.mxu0 0.0
    %774 = vmatpush1.msra.mxu0 0.0
    %775 = vmatprep.subr.mxu0 0.0
    %776 = vmatpush1.msra.mxu0 0.0
    %777 = vmatprep.subr.mxu0 0.0
    %778 = vmatpush1.msra.mxu0 0.0
    %779 = vmatprep.subr.mxu0 0.0
    %780 = vmatpush1.msra.mxu0 0.0
    %781 = vmatprep.subr.mxu0 0.0
    %782 = vmatpush1.msra.mxu0 0.0
    %783 = vmatprep.subr.mxu0 0.0
    %784 = vmatpush1.msra.mxu0 0.0
    %785 = vmatprep.subr.mxu0 0.0
    %786 = vmatpush1.msra.mxu0 0.0
    %787 = vmatprep.subr.mxu0 0.0
    %788 = vmatpush1.msra.mxu0 0.0
    %789 = vmatprep.subr.mxu0 0.0
    %790 = vmatpush1.msra.mxu0 0.0
    %791 = vmatprep.subr.mxu0 0.0
    %792 = vmatpush1.msra.mxu0 0.0
    %793 = vmatprep.subr.mxu0 0.0
    %794 = vmatpush1.msra.mxu0 0.0
    %795 = vmatprep.subr.mxu0 0.0
    %796 = vmatpush1.msra.mxu0 0.0
    %797 = vmatprep.subr.mxu0 0.0
    %798 = vmatpush1.msra.mxu0 0.0
    %799 = vmatprep.subr.mxu0 0.0
    %800 = vmatpush1.msra.mxu0 0.0
    %801 = vmatprep.subr.mxu0 0.0
    %802 = vmatpush1.msra.mxu0 0.0
    %803 = vmatprep.subr.mxu0 0.0
    %804 = vmatpush1.msra.mxu0 0.0
    %805 = vmatprep.subr.mxu0 0.0
    %806 = vmatpush1.msra.mxu0 0.0
    %807 = vmatprep.subr.mxu0 0.0
    %808 = vmatpush1.msra.mxu0 0.0
    %809 = vmatprep.mubr.f32.mxu0 0.0
    %810 = vmatmul.mubr.f32.gmra.mrb[0].mxu0 %v150
    %v811 = vpop.f32.mrb[0].mxu0
    %v812 = vadd.f32 %v743, %v811
    %v813 = vpop.f32.mrb[0].mxu0
    %814 = vmatprep.mubr.f32.mxu0 0.0
    %815 = vmatmul.mubr.f32.gmra.mrb[0].mxu0 %v153
    %v816 = vpop.f32.mrb[0].mxu0
    %v817 = vadd.f32 %v743, %v816
    %v818 = vpop.f32.mrb[0].mxu0
    %819 = vdwg.mxu0
    %s820 = scalar_lea.vmem %s7, 32
    %v821 = vld [vmem:[%s820] sm:$0xff]
    %v822 = vld [vmem:[%s820 + $0x8] sm:$0xff]
    %v823 = vld [vmem:[%s820 + $0x10] sm:$0xff]
    %v824 = vld [vmem:[%s820 + $0x18] sm:$0xff]
    %s825 = scalar_lea.vmem %s8, 1
    %v826 = vld [vmem:[%s825] sm:$0x1]
    %v828 = vlaneseq
    %v829 = vshrl.u32 %v828, 7
    %v830 = vsub.s32 0, %v829
    %v831 = vrot.slane %v826, %v830
    %833 = vmatprep.subr.mxu0 0.0
    %834 = vmatpush1.msra.mxu0 %v821
    %835 = vmatprep.subr.mxu0 0.0
    %836 = vmatpush1.msra.mxu0 %v822
    %837 = vmatprep.subr.mxu0 0.0
    %838 = vmatpush1.msra.mxu0 %v823
    %839 = vmatprep.subr.mxu0 0.0
    %840 = vmatpush1.msra.mxu0 %v824
    %841 = vmatprep.subr.mxu0 0.0
    %842 = vmatpush1.msra.mxu0 0.0
    %843 = vmatprep.subr.mxu0 0.0
    %844 = vmatpush1.msra.mxu0 0.0
    %845 = vmatprep.subr.mxu0 0.0
    %846 = vmatpush1.msra.mxu0 0.0
    %847 = vmatprep.subr.mxu0 0.0
    %848 = vmatpush1.msra.mxu0 0.0
    %849 = vmatprep.subr.mxu0 0.0
    %850 = vmatpush1.msra.mxu0 0.0
    %851 = vmatprep.subr.mxu0 0.0
    %852 = vmatpush1.msra.mxu0 0.0
    %853 = vmatprep.subr.mxu0 0.0
    %854 = vmatpush1.msra.mxu0 0.0
    %855 = vmatprep.subr.mxu0 0.0
    %856 = vmatpush1.msra.mxu0 0.0
    %857 = vmatprep.subr.mxu0 0.0
    %858 = vmatpush1.msra.mxu0 0.0
    %859 = vmatprep.subr.mxu0 0.0
    %860 = vmatpush1.msra.mxu0 0.0
    %861 = vmatprep.subr.mxu0 0.0
    %862 = vmatpush1.msra.mxu0 0.0
    %863 = vmatprep.subr.mxu0 0.0
    %864 = vmatpush1.msra.mxu0 0.0
    %865 = vmatprep.subr.mxu0 0.0
    %866 = vmatpush1.msra.mxu0 0.0
    %867 = vmatprep.subr.mxu0 0.0
    %868 = vmatpush1.msra.mxu0 0.0
    %869 = vmatprep.subr.mxu0 0.0
    %870 = vmatpush1.msra.mxu0 0.0
    %871 = vmatprep.subr.mxu0 0.0
    %872 = vmatpush1.msra.mxu0 0.0
    %873 = vmatprep.subr.mxu0 0.0
    %874 = vmatpush1.msra.mxu0 0.0
    %875 = vmatprep.subr.mxu0 0.0
    %876 = vmatpush1.msra.mxu0 0.0
    %877 = vmatprep.subr.mxu0 0.0
    %878 = vmatpush1.msra.mxu0 0.0
    %879 = vmatprep.subr.mxu0 0.0
    %880 = vmatpush1.msra.mxu0 0.0
    %881 = vmatprep.subr.mxu0 0.0
    %882 = vmatpush1.msra.mxu0 0.0
    %883 = vmatprep.subr.mxu0 0.0
    %884 = vmatpush1.msra.mxu0 0.0
    %885 = vmatprep.subr.mxu0 0.0
    %886 = vmatpush1.msra.mxu0 0.0
    %887 = vmatprep.subr.mxu0 0.0
    %888 = vmatpush1.msra.mxu0 0.0
    %889 = vmatprep.subr.mxu0 0.0
    %890 = vmatpush1.msra.mxu0 0.0
    %891 = vmatprep.subr.mxu0 0.0
    %892 = vmatpush1.msra.mxu0 0.0
    %893 = vmatprep.subr.mxu0 0.0
    %894 = vmatpush1.msra.mxu0 0.0
    %895 = vmatprep.subr.mxu0 0.0
    %896 = vmatpush1.msra.mxu0 0.0
    %897 = vmatprep.mubr.f32.mxu0 0.0
    %898 = vmatmul.mubr.f32.gmra.mrb[0].mxu0 %v242
    %v899 = vpop.f32.mrb[0].mxu0
    %v900 = vadd.f32 %v831, %v899
    %v901 = vpop.f32.mrb[0].mxu0
    %902 = vmatprep.mubr.f32.mxu0 0.0
    %903 = vmatmul.mubr.f32.gmra.mrb[0].mxu0 %v245
    %v904 = vpop.f32.mrb[0].mxu0
    %v905 = vadd.f32 %v831, %v904
    %v906 = vpop.f32.mrb[0].mxu0
    %907 = vdwg.mxu0
    %v909 = vsel %vm322, %v724, 0
    %v912 = vsel %vm322, %v812, 0
    %914 = vmatprep.subr.mxu0 0.0
    %915 = vmatpush1.xpose.msra.mxu0 %v912
    %916 = vmatprep.subr.mxu0 0.0
    %917 = vmatpush1.xpose.msra.mxu0 0.0
    %918 = vmatprep.subr.mxu0 0.0
    %919 = vmatpush1.xpose.msra.mxu0 0.0
    %920 = vmatprep.subr.mxu0 0.0
    %921 = vmatpush1.xpose.msra.mxu0 0.0
    %922 = vmatprep.subr.mxu0 0.0
    %923 = vmatpush1.xpose.msra.mxu0 0.0
    %924 = vmatprep.subr.mxu0 0.0
    %925 = vmatpush1.xpose.msra.mxu0 0.0
    %926 = vmatprep.subr.mxu0 0.0
    %927 = vmatpush1.xpose.msra.mxu0 0.0
    %928 = vmatprep.subr.mxu0 0.0
    %929 = vmatpush1.xpose.msra.mxu0 0.0
    %930 = vmatprep.subr.mxu0 0.0
    %931 = vmatpush1.xpose.msra.mxu0 0.0
    %932 = vmatprep.subr.mxu0 0.0
    %933 = vmatpush1.xpose.msra.mxu0 0.0
    %934 = vmatprep.subr.mxu0 0.0
    %935 = vmatpush1.xpose.msra.mxu0 0.0
    %936 = vmatprep.subr.mxu0 0.0
    %937 = vmatpush1.xpose.msra.mxu0 0.0
    %938 = vmatprep.subr.mxu0 0.0
    %939 = vmatpush1.xpose.msra.mxu0 0.0
    %940 = vmatprep.subr.mxu0 0.0
    %941 = vmatpush1.xpose.msra.mxu0 0.0
    %942 = vmatprep.subr.mxu0 0.0
    %943 = vmatpush1.xpose.msra.mxu0 0.0
    %944 = vmatprep.subr.mxu0 0.0
    %945 = vmatpush1.xpose.msra.mxu0 0.0
    %946 = vmatprep.subr.mxu0 0.0
    %947 = vmatpush1.xpose.msra.mxu0 0.0
    %948 = vmatprep.subr.mxu0 0.0
    %949 = vmatpush1.xpose.msra.mxu0 0.0
    %950 = vmatprep.subr.mxu0 0.0
    %951 = vmatpush1.xpose.msra.mxu0 0.0
    %952 = vmatprep.subr.mxu0 0.0
    %953 = vmatpush1.xpose.msra.mxu0 0.0
    %954 = vmatprep.subr.mxu0 0.0
    %955 = vmatpush1.xpose.msra.mxu0 0.0
    %956 = vmatprep.subr.mxu0 0.0
    %957 = vmatpush1.xpose.msra.mxu0 0.0
    %958 = vmatprep.subr.mxu0 0.0
    %959 = vmatpush1.xpose.msra.mxu0 0.0
    %960 = vmatprep.subr.mxu0 0.0
    %961 = vmatpush1.xpose.msra.mxu0 0.0
    %962 = vmatprep.subr.mxu0 0.0
    %963 = vmatpush1.xpose.msra.mxu0 0.0
    %964 = vmatprep.subr.mxu0 0.0
    %965 = vmatpush1.xpose.msra.mxu0 0.0
    %966 = vmatprep.subr.mxu0 0.0
    %967 = vmatpush1.xpose.msra.mxu0 0.0
    %968 = vmatprep.subr.mxu0 0.0
    %969 = vmatpush1.xpose.msra.mxu0 0.0
    %970 = vmatprep.subr.mxu0 0.0
    %971 = vmatpush1.xpose.msra.mxu0 0.0
    %972 = vmatprep.subr.mxu0 0.0
    %973 = vmatpush1.xpose.msra.mxu0 0.0
    %974 = vmatprep.subr.mxu0 0.0
    %975 = vmatpush1.xpose.msra.mxu0 0.0
    %976 = vmatprep.subr.mxu0 0.0
    %977 = vmatpush1.xpose.msra.mxu0 0.0
    %978 = vmatprep.mubr.f32.mxu0 0.0
    %979 = vmatmul.mubr.f32.gmra.mrb[0].mxu0 %v909
    %v980 = vpop.f32.mrb[0].mxu0
    %v981 = vadd.f32 0.0, %v980
    %v982 = vpop.f32.mrb[0].mxu0
    %983 = vdwg.mxu0
    %v985 = vsel %vm322, %v729, 0
    %v988 = vsel %vm322, %v817, 0
    %990 = vmatprep.subr.mxu0 0.0
    %991 = vmatpush1.xpose.msra.mxu0 %v988
    %992 = vmatprep.subr.mxu0 0.0
    %993 = vmatpush1.xpose.msra.mxu0 0.0
    %994 = vmatprep.subr.mxu0 0.0
    %995 = vmatpush1.xpose.msra.mxu0 0.0
    %996 = vmatprep.subr.mxu0 0.0
    %997 = vmatpush1.xpose.msra.mxu0 0.0
    %998 = vmatprep.subr.mxu0 0.0
    %999 = vmatpush1.xpose.msra.mxu0 0.0
    %1000 = vmatprep.subr.mxu0 0.0
    %1001 = vmatpush1.xpose.msra.mxu0 0.0
    %1002 = vmatprep.subr.mxu0 0.0
    %1003 = vmatpush1.xpose.msra.mxu0 0.0
    %1004 = vmatprep.subr.mxu0 0.0
    %1005 = vmatpush1.xpose.msra.mxu0 0.0
    %1006 = vmatprep.subr.mxu0 0.0
    %1007 = vmatpush1.xpose.msra.mxu0 0.0
    %1008 = vmatprep.subr.mxu0 0.0
    %1009 = vmatpush1.xpose.msra.mxu0 0.0
    %1010 = vmatprep.subr.mxu0 0.0
    %1011 = vmatpush1.xpose.msra.mxu0 0.0
    %1012 = vmatprep.subr.mxu0 0.0
    %1013 = vmatpush1.xpose.msra.mxu0 0.0
    %1014 = vmatprep.subr.mxu0 0.0
    %1015 = vmatpush1.xpose.msra.mxu0 0.0
    %1016 = vmatprep.subr.mxu0 0.0
    %1017 = vmatpush1.xpose.msra.mxu0 0.0
    %1018 = vmatprep.subr.mxu0 0.0
    %1019 = vmatpush1.xpose.msra.mxu0 0.0
    %1020 = vmatprep.subr.mxu0 0.0
    %1021 = vmatpush1.xpose.msra.mxu0 0.0
    %1022 = vmatprep.subr.mxu0 0.0
    %1023 = vmatpush1.xpose.msra.mxu0 0.0
    %1024 = vmatprep.subr.mxu0 0.0
    %1025 = vmatpush1.xpose.msra.mxu0 0.0
    %1026 = vmatprep.subr.mxu0 0.0
    %1027 = vmatpush1.xpose.msra.mxu0 0.0
    %1028 = vmatprep.subr.mxu0 0.0
    %1029 = vmatpush1.xpose.msra.mxu0 0.0
    %1030 = vmatprep.subr.mxu0 0.0
    %1031 = vmatpush1.xpose.msra.mxu0 0.0
    %1032 = vmatprep.subr.mxu0 0.0
    %1033 = vmatpush1.xpose.msra.mxu0 0.0
    %1034 = vmatprep.subr.mxu0 0.0
    %1035 = vmatpush1.xpose.msra.mxu0 0.0
    %1036 = vmatprep.subr.mxu0 0.0
    %1037 = vmatpush1.xpose.msra.mxu0 0.0
    %1038 = vmatprep.subr.mxu0 0.0
    %1039 = vmatpush1.xpose.msra.mxu0 0.0
    %1040 = vmatprep.subr.mxu0 0.0
    %1041 = vmatpush1.xpose.msra.mxu0 0.0
    %1042 = vmatprep.subr.mxu0 0.0
    %1043 = vmatpush1.xpose.msra.mxu0 0.0
    %1044 = vmatprep.subr.mxu0 0.0
    %1045 = vmatpush1.xpose.msra.mxu0 0.0
    %1046 = vmatprep.subr.mxu0 0.0
    %1047 = vmatpush1.xpose.msra.mxu0 0.0
    %1048 = vmatprep.subr.mxu0 0.0
    %1049 = vmatpush1.xpose.msra.mxu0 0.0
    %1050 = vmatprep.subr.mxu0 0.0
    %1051 = vmatpush1.xpose.msra.mxu0 0.0
    %1052 = vmatprep.subr.mxu0 0.0
    %1053 = vmatpush1.xpose.msra.mxu0 0.0
    %1054 = vmatprep.mubr.f32.mxu0 0.0
    %1055 = vmatmul.mubr.f32.gmra.mrb[0].mxu0 %v985
    %v1056 = vpop.f32.mrb[0].mxu0
    %v1057 = vadd.f32 0.0, %v1056
    %v1058 = vpop.f32.mrb[0].mxu0
    %1059 = vdwg.mxu0
    %v1060 = vsel %vm322, %v981, -inf
    %1061 = vmax.xlane.f32.xlu0 %v1060
    %v1062 = vpop.xlane.xlu0 %1061
    %v1063 = vsel %vm322, %v1057, -inf
    %1064 = vmax.xlane.f32.xlu0 %v1063
    %v1065 = vpop.xlane.xlu0 %1064
    %v1066 = vsub.f32 %v981, %v1062
    %v1067 = vsub.f32 %v1057, %v1065
    %v1068 = vmul.f32 %v1066, 1.442695
    %v1069 = vpow.pop %v1068
    %v1070 = vmul.f32 %v1067, 1.442695
    %v1071 = vpow.pop %v1070
    %v1072 = vsel %vm322, %v1069, 0.0
    %1073 = vadd.xlane.f32.xlu0 %v1072
    %v1074 = vpop.xlane.xlu0 %1073
    %v1075 = vsel %vm322, %v1071, 0.0
    %1076 = vadd.xlane.f32.xlu0 %v1075
    %v1077 = vpop.xlane.xlu0 %1076
    %v1078 = vrcp.pop %v1074
    %v1079 = vmul.f32 %v1069, %v1078
    %v1080 = vrcp.pop %v1077
    %v1081 = vmul.f32 %v1071, %v1080
    %v1083 = vsel %vm322, %v1079, 0
    %1085 = vmatprep.subr.mxu0 0.0
    %1086 = vmatpush1.msra.mxu0 %v900
    %1087 = vmatprep.subr.mxu0 0.0
    %1088 = vmatpush1.msra.mxu0 0.0
    %1089 = vmatprep.subr.mxu0 0.0
    %1090 = vmatpush1.msra.mxu0 0.0
    %1091 = vmatprep.subr.mxu0 0.0
    %1092 = vmatpush1.msra.mxu0 0.0
    %1093 = vmatprep.subr.mxu0 0.0
    %1094 = vmatpush1.msra.mxu0 0.0
    %1095 = vmatprep.subr.mxu0 0.0
    %1096 = vmatpush1.msra.mxu0 0.0
    %1097 = vmatprep.subr.mxu0 0.0
    %1098 = vmatpush1.msra.mxu0 0.0
    %1099 = vmatprep.subr.mxu0 0.0
    %1100 = vmatpush1.msra.mxu0 0.0
    %1101 = vmatprep.subr.mxu0 0.0
    %1102 = vmatpush1.msra.mxu0 0.0
    %1103 = vmatprep.subr.mxu0 0.0
    %1104 = vmatpush1.msra.mxu0 0.0
    %1105 = vmatprep.subr.mxu0 0.0
    %1106 = vmatpush1.msra.mxu0 0.0
    %1107 = vmatprep.subr.mxu0 0.0
    %1108 = vmatpush1.msra.mxu0 0.0
    %1109 = vmatprep.subr.mxu0 0.0
    %1110 = vmatpush1.msra.mxu0 0.0
    %1111 = vmatprep.subr.mxu0 0.0
    %1112 = vmatpush1.msra.mxu0 0.0
    %1113 = vmatprep.subr.mxu0 0.0
    %1114 = vmatpush1.msra.mxu0 0.0
    %1115 = vmatprep.subr.mxu0 0.0
    %1116 = vmatpush1.msra.mxu0 0.0
    %1117 = vmatprep.subr.mxu0 0.0
    %1118 = vmatpush1.msra.mxu0 0.0
    %1119 = vmatprep.subr.mxu0 0.0
    %1120 = vmatpush1.msra.mxu0 0.0
    %1121 = vmatprep.subr.mxu0 0.0
    %1122 = vmatpush1.msra.mxu0 0.0
    %1123 = vmatprep.subr.mxu0 0.0
    %1124 = vmatpush1.msra.mxu0 0.0
    %1125 = vmatprep.subr.mxu0 0.0
    %1126 = vmatpush1.msra.mxu0 0.0
    %1127 = vmatprep.subr.mxu0 0.0
    %1128 = vmatpush1.msra.mxu0 0.0
    %1129 = vmatprep.subr.mxu0 0.0
    %1130 = vmatpush1.msra.mxu0 0.0
    %1131 = vmatprep.subr.mxu0 0.0
    %1132 = vmatpush1.msra.mxu0 0.0
    %1133 = vmatprep.subr.mxu0 0.0
    %1134 = vmatpush1.msra.mxu0 0.0
    %1135 = vmatprep.subr.mxu0 0.0
    %1136 = vmatpush1.msra.mxu0 0.0
    %1137 = vmatprep.subr.mxu0 0.0
    %1138 = vmatpush1.msra.mxu0 0.0
    %1139 = vmatprep.subr.mxu0 0.0
    %1140 = vmatpush1.msra.mxu0 0.0
    %1141 = vmatprep.subr.mxu0 0.0
    %1142 = vmatpush1.msra.mxu0 0.0
    %1143 = vmatprep.subr.mxu0 0.0
    %1144 = vmatpush1.msra.mxu0 0.0
    %1145 = vmatprep.subr.mxu0 0.0
    %1146 = vmatpush1.msra.mxu0 0.0
    %1147 = vmatprep.subr.mxu0 0.0
    %1148 = vmatpush1.msra.mxu0 0.0
    %1149 = vmatprep.mubr.f32.mxu0 0.0
    %1150 = vmatmul.mubr.f32.gmra.mrb[0].mxu0 %v1083
    %v1151 = vpop.f32.mrb[0].mxu0
    %v1152 = vadd.f32 0.0, %v1151
    %v1153 = vpop.f32.mrb[0].mxu0
    %1154 = vdwg.mxu0
    %v1156 = vsel %vm322, %v1081, 0
    %1158 = vmatprep.subr.mxu0 0.0
    %1159 = vmatpush1.msra.mxu0 %v905
    %1160 = vmatprep.subr.mxu0 0.0
    %1161 = vmatpush1.msra.mxu0 0.0
    %1162 = vmatprep.subr.mxu0 0.0
    %1163 = vmatpush1.msra.mxu0 0.0
    %1164 = vmatprep.subr.mxu0 0.0
    %1165 = vmatpush1.msra.mxu0 0.0
    %1166 = vmatprep.subr.mxu0 0.0
    %1167 = vmatpush1.msra.mxu0 0.0
    %1168 = vmatprep.subr.mxu0 0.0
    %1169 = vmatpush1.msra.mxu0 0.0
    %1170 = vmatprep.subr.mxu0 0.0
    %1171 = vmatpush1.msra.mxu0 0.0
    %1172 = vmatprep.subr.mxu0 0.0
    %1173 = vmatpush1.msra.mxu0 0.0
    %1174 = vmatprep.subr.mxu0 0.0
    %1175 = vmatpush1.msra.mxu0 0.0
    %1176 = vmatprep.subr.mxu0 0.0
    %1177 = vmatpush1.msra.mxu0 0.0
    %1178 = vmatprep.subr.mxu0 0.0
    %1179 = vmatpush1.msra.mxu0 0.0
    %1180 = vmatprep.subr.mxu0 0.0
    %1181 = vmatpush1.msra.mxu0 0.0
    %1182 = vmatprep.subr.mxu0 0.0
    %1183 = vmatpush1.msra.mxu0 0.0
    %1184 = vmatprep.subr.mxu0 0.0
    %1185 = vmatpush1.msra.mxu0 0.0
    %1186 = vmatprep.subr.mxu0 0.0
    %1187 = vmatpush1.msra.mxu0 0.0
    %1188 = vmatprep.subr.mxu0 0.0
    %1189 = vmatpush1.msra.mxu0 0.0
    %1190 = vmatprep.subr.mxu0 0.0
    %1191 = vmatpush1.msra.mxu0 0.0
    %1192 = vmatprep.subr.mxu0 0.0
    %1193 = vmatpush1.msra.mxu0 0.0
    %1194 = vmatprep.subr.mxu0 0.0
    %1195 = vmatpush1.msra.mxu0 0.0
    %1196 = vmatprep.subr.mxu0 0.0
    %1197 = vmatpush1.msra.mxu0 0.0
    %1198 = vmatprep.subr.mxu0 0.0
    %1199 = vmatpush1.msra.mxu0 0.0
    %1200 = vmatprep.subr.mxu0 0.0
    %1201 = vmatpush1.msra.mxu0 0.0
    %1202 = vmatprep.subr.mxu0 0.0
    %1203 = vmatpush1.msra.mxu0 0.0
    %1204 = vmatprep.subr.mxu0 0.0
    %1205 = vmatpush1.msra.mxu0 0.0
    %1206 = vmatprep.subr.mxu0 0.0
    %1207 = vmatpush1.msra.mxu0 0.0
    %1208 = vmatprep.subr.mxu0 0.0
    %1209 = vmatpush1.msra.mxu0 0.0
    %1210 = vmatprep.subr.mxu0 0.0
    %1211 = vmatpush1.msra.mxu0 0.0
    %1212 = vmatprep.subr.mxu0 0.0
    %1213 = vmatpush1.msra.mxu0 0.0
    %1214 = vmatprep.subr.mxu0 0.0
    %1215 = vmatpush1.msra.mxu0 0.0
    %1216 = vmatprep.subr.mxu0 0.0
    %1217 = vmatpush1.msra.mxu0 0.0
    %1218 = vmatprep.subr.mxu0 0.0
    %1219 = vmatpush1.msra.mxu0 0.0
    %1220 = vmatprep.subr.mxu0 0.0
    %1221 = vmatpush1.msra.mxu0 0.0
    %1222 = vmatprep.mubr.f32.mxu0 0.0
    %1223 = vmatmul.mubr.f32.gmra.mrb[0].mxu0 %v1156
    %v1224 = vpop.f32.mrb[0].mxu0
    %v1225 = vadd.f32 0.0, %v1224
    %v1226 = vpop.f32.mrb[0].mxu0
    %1227 = vdwg.mxu0
    %s1228 = scalar_lea.vmem %s9, 8
    %v1229 = vld [vmem:[%s1228] sm:$0xff]
    %v1231 = vsel %vm322, %v1152, 0
    %v1234 = vsel %vm322, %v1225, 0
    %1236 = vmatprep.subr.mxu0 0.0
    %1237 = vmatpush1.msra.mxu0 %v1229
    %1238 = vmatprep.subr.mxu0 0.0
    %1239 = vmatpush1.msra.mxu0 0.0
    %1240 = vmatprep.subr.mxu0 0.0
    %1241 = vmatpush1.msra.mxu0 0.0
    %1242 = vmatprep.subr.mxu0 0.0
    %1243 = vmatpush1.msra.mxu0 0.0
    %1244 = vmatprep.subr.mxu0 0.0
    %1245 = vmatpush1.msra.mxu0 0.0
    %1246 = vmatprep.subr.mxu0 0.0
    %1247 = vmatpush1.msra.mxu0 0.0
    %1248 = vmatprep.subr.mxu0 0.0
    %1249 = vmatpush1.msra.mxu0 0.0
    %1250 = vmatprep.subr.mxu0 0.0
    %1251 = vmatpush1.msra.mxu0 0.0
    %1252 = vmatprep.subr.mxu0 0.0
    %1253 = vmatpush1.msra.mxu0 0.0
    %1254 = vmatprep.subr.mxu0 0.0
    %1255 = vmatpush1.msra.mxu0 0.0
    %1256 = vmatprep.subr.mxu0 0.0
    %1257 = vmatpush1.msra.mxu0 0.0
    %1258 = vmatprep.subr.mxu0 0.0
    %1259 = vmatpush1.msra.mxu0 0.0
    %1260 = vmatprep.subr.mxu0 0.0
    %1261 = vmatpush1.msra.mxu0 0.0
    %1262 = vmatprep.subr.mxu0 0.0
    %1263 = vmatpush1.msra.mxu0 0.0
    %1264 = vmatprep.subr.mxu0 0.0
    %1265 = vmatpush1.msra.mxu0 0.0
    %1266 = vmatprep.subr.mxu0 0.0
    %1267 = vmatpush1.msra.mxu0 0.0
    %1268 = vmatprep.subr.mxu0 0.0
    %1269 = vmatpush1.msra.mxu0 0.0
    %1270 = vmatprep.subr.mxu0 0.0
    %1271 = vmatpush1.msra.mxu0 0.0
    %1272 = vmatprep.subr.mxu0 0.0
    %1273 = vmatpush1.msra.mxu0 0.0
    %1274 = vmatprep.subr.mxu0 0.0
    %1275 = vmatpush1.msra.mxu0 0.0
    %1276 = vmatprep.subr.mxu0 0.0
    %1277 = vmatpush1.msra.mxu0 0.0
    %1278 = vmatprep.subr.mxu0 0.0
    %1279 = vmatpush1.msra.mxu0 0.0
    %1280 = vmatprep.subr.mxu0 0.0
    %1281 = vmatpush1.msra.mxu0 0.0
    %1282 = vmatprep.subr.mxu0 0.0
    %1283 = vmatpush1.msra.mxu0 0.0
    %1284 = vmatprep.subr.mxu0 0.0
    %1285 = vmatpush1.msra.mxu0 0.0
    %1286 = vmatprep.subr.mxu0 0.0
    %1287 = vmatpush1.msra.mxu0 0.0
    %1288 = vmatprep.subr.mxu0 0.0
    %1289 = vmatpush1.msra.mxu0 0.0
    %1290 = vmatprep.subr.mxu0 0.0
    %1291 = vmatpush1.msra.mxu0 0.0
    %1292 = vmatprep.subr.mxu0 0.0
    %1293 = vmatpush1.msra.mxu0 0.0
    %1294 = vmatprep.subr.mxu0 0.0
    %1295 = vmatpush1.msra.mxu0 0.0
    %1296 = vmatprep.subr.mxu0 0.0
    %1297 = vmatpush1.msra.mxu0 0.0
    %1298 = vmatprep.subr.mxu0 0.0
    %1299 = vmatpush1.msra.mxu0 0.0
    %1300 = vmatprep.mubr.f32.mxu0 0.0
    %1301 = vmatmul.mubr.f32.gmra.mrb[0].mxu0 %v1231
    %v1302 = vpop.f32.mrb[0].mxu0
    %v1303 = vadd.f32 0.0, %v1302
    %v1304 = vpop.f32.mrb[0].mxu0
    %1305 = vmatprep.mubr.f32.mxu0 0.0
    %1306 = vmatmul.mubr.f32.gmra.mrb[0].mxu0 %v1234
    %v1307 = vpop.f32.mrb[0].mxu0
    %v1308 = vadd.f32 0.0, %v1307
    %v1309 = vpop.f32.mrb[0].mxu0
    %1310 = vdwg.mxu0
    %v1312 = vsel %vm322, %v567, 0
    %v1315 = vsel %vm322, %v640, 0
    %1317 = vmatprep.subr.mxu0 0.0
    %1318 = vmatpush1.msra.mxu0 %v643
    %1319 = vmatprep.subr.mxu0 0.0
    %1320 = vmatpush1.msra.mxu0 0.0
    %1321 = vmatprep.subr.mxu0 0.0
    %1322 = vmatpush1.msra.mxu0 0.0
    %1323 = vmatprep.subr.mxu0 0.0
    %1324 = vmatpush1.msra.mxu0 0.0
    %1325 = vmatprep.subr.mxu0 0.0
    %1326 = vmatpush1.msra.mxu0 0.0
    %1327 = vmatprep.subr.mxu0 0.0
    %1328 = vmatpush1.msra.mxu0 0.0
    %1329 = vmatprep.subr.mxu0 0.0
    %1330 = vmatpush1.msra.mxu0 0.0
    %1331 = vmatprep.subr.mxu0 0.0
    %1332 = vmatpush1.msra.mxu0 0.0
    %1333 = vmatprep.subr.mxu0 0.0
    %1334 = vmatpush1.msra.mxu0 0.0
    %1335 = vmatprep.subr.mxu0 0.0
    %1336 = vmatpush1.msra.mxu0 0.0
    %1337 = vmatprep.subr.mxu0 0.0
    %1338 = vmatpush1.msra.mxu0 0.0
    %1339 = vmatprep.subr.mxu0 0.0
    %1340 = vmatpush1.msra.mxu0 0.0
    %1341 = vmatprep.subr.mxu0 0.0
    %1342 = vmatpush1.msra.mxu0 0.0
    %1343 = vmatprep.subr.mxu0 0.0
    %1344 = vmatpush1.msra.mxu0 0.0
    %1345 = vmatprep.subr.mxu0 0.0
    %1346 = vmatpush1.msra.mxu0 0.0
    %1347 = vmatprep.subr.mxu0 0.0
    %1348 = vmatpush1.msra.mxu0 0.0
    %1349 = vmatprep.subr.mxu0 0.0
    %1350 = vmatpush1.msra.mxu0 0.0
    %1351 = vmatprep.subr.mxu0 0.0
    %1352 = vmatpush1.msra.mxu0 0.0
    %1353 = vmatprep.subr.mxu0 0.0
    %1354 = vmatpush1.msra.mxu0 0.0
    %1355 = vmatprep.subr.mxu0 0.0
    %1356 = vmatpush1.msra.mxu0 0.0
    %1357 = vmatprep.subr.mxu0 0.0
    %1358 = vmatpush1.msra.mxu0 0.0
    %1359 = vmatprep.subr.mxu0 0.0
    %1360 = vmatpush1.msra.mxu0 0.0
    %1361 = vmatprep.subr.mxu0 0.0
    %1362 = vmatpush1.msra.mxu0 0.0
    %1363 = vmatprep.subr.mxu0 0.0
    %1364 = vmatpush1.msra.mxu0 0.0
    %1365 = vmatprep.subr.mxu0 0.0
    %1366 = vmatpush1.msra.mxu0 0.0
    %1367 = vmatprep.subr.mxu0 0.0
    %1368 = vmatpush1.msra.mxu0 0.0
    %1369 = vmatprep.subr.mxu0 0.0
    %1370 = vmatpush1.msra.mxu0 0.0
    %1371 = vmatprep.subr.mxu0 0.0
    %1372 = vmatpush1.msra.mxu0 0.0
    %1373 = vmatprep.subr.mxu0 0.0
    %1374 = vmatpush1.msra.mxu0 0.0
    %1375 = vmatprep.subr.mxu0 0.0
    %1376 = vmatpush1.msra.mxu0 0.0
    %1377 = vmatprep.subr.mxu0 0.0
    %1378 = vmatpush1.msra.mxu0 0.0
    %1379 = vmatprep.subr.mxu0 0.0
    %1380 = vmatpush1.msra.mxu0 0.0
    %1381 = vmatprep.mubr.f32.mxu0 0.0
    %1382 = vmatmul.mubr.f32.gmra.mrb[0].mxu0 %v1312
    %v1383 = vpop.f32.mrb[0].mxu0
    %v1384 = vadd.f32 %v1303, %v1383
    %v1385 = vpop.f32.mrb[0].mxu0
    %1386 = vmatprep.mubr.f32.mxu0 0.0
    %1387 = vmatmul.mubr.f32.gmra.mrb[0].mxu0 %v1315
    %v1388 = vpop.f32.mrb[0].mxu0
    %v1389 = vadd.f32 %v1308, %v1388
    %v1390 = vpop.f32.mrb[0].mxu0
    %1391 = vdwg.mxu0
    %s1392 = scalar_lea.vmem %s3, 64
    %v1393 = vld [vmem:[%s1392] sm:$0xff]
    %v1394 = vld [vmem:[%s1392 + $0x8] sm:$0xff]
    %v1395 = vld [vmem:[%s1392 + $0x10] sm:$0xff]
    %v1396 = vld [vmem:[%s1392 + $0x18] sm:$0xff]
    %s1397 = scalar_lea.vmem %s4, 2
    %v1398 = vld [vmem:[%s1397] sm:$0x1]
    %v1400 = vlaneseq
    %v1401 = vshrl.u32 %v1400, 7
    %v1402 = vsub.s32 0, %v1401
    %v1403 = vrot.slane %v1398, %v1402
    %1405 = vmatprep.subr.mxu0 0.0
    %1406 = vmatpush1.msra.mxu0 %v1393
    %1407 = vmatprep.subr.mxu0 0.0
    %1408 = vmatpush1.msra.mxu0 %v1394
    %1409 = vmatprep.subr.mxu0 0.0
    %1410 = vmatpush1.msra.mxu0 %v1395
    %1411 = vmatprep.subr.mxu0 0.0
    %1412 = vmatpush1.msra.mxu0 %v1396
    %1413 = vmatprep.subr.mxu0 0.0
    %1414 = vmatpush1.msra.mxu0 0.0
    %1415 = vmatprep.subr.mxu0 0.0
    %1416 = vmatpush1.msra.mxu0 0.0
    %1417 = vmatprep.subr.mxu0 0.0
    %1418 = vmatpush1.msra.mxu0 0.0
    %1419 = vmatprep.subr.mxu0 0.0
    %1420 = vmatpush1.msra.mxu0 0.0
    %1421 = vmatprep.subr.mxu0 0.0
    %1422 = vmatpush1.msra.mxu0 0.0
    %1423 = vmatprep.subr.mxu0 0.0
    %1424 = vmatpush1.msra.mxu0 0.0
    %1425 = vmatprep.subr.mxu0 0.0
    %1426 = vmatpush1.msra.mxu0 0.0
    %1427 = vmatprep.subr.mxu0 0.0
    %1428 = vmatpush1.msra.mxu0 0.0
    %1429 = vmatprep.subr.mxu0 0.0
    %1430 = vmatpush1.msra.mxu0 0.0
    %1431 = vmatprep.subr.mxu0 0.0
    %1432 = vmatpush1.msra.mxu0 0.0
    %1433 = vmatprep.subr.mxu0 0.0
    %1434 = vmatpush1.msra.mxu0 0.0
    %1435 = vmatprep.subr.mxu0 0.0
    %1436 = vmatpush1.msra.mxu0 0.0
    %1437 = vmatprep.subr.mxu0 0.0
    %1438 = vmatpush1.msra.mxu0 0.0
    %1439 = vmatprep.subr.mxu0 0.0
    %1440 = vmatpush1.msra.mxu0 0.0
    %1441 = vmatprep.subr.mxu0 0.0
    %1442 = vmatpush1.msra.mxu0 0.0
    %1443 = vmatprep.subr.mxu0 0.0
    %1444 = vmatpush1.msra.mxu0 0.0
    %1445 = vmatprep.subr.mxu0 0.0
    %1446 = vmatpush1.msra.mxu0 0.0
    %1447 = vmatprep.subr.mxu0 0.0
    %1448 = vmatpush1.msra.mxu0 0.0
    %1449 = vmatprep.subr.mxu0 0.0
    %1450 = vmatpush1.msra.mxu0 0.0
    %1451 = vmatprep.subr.mxu0 0.0
    %1452 = vmatpush1.msra.mxu0 0.0
    %1453 = vmatprep.subr.mxu0 0.0
    %1454 = vmatpush1.msra.mxu0 0.0
    %1455 = vmatprep.subr.mxu0 0.0
    %1456 = vmatpush1.msra.mxu0 0.0
    %1457 = vmatprep.subr.mxu0 0.0
    %1458 = vmatpush1.msra.mxu0 0.0
    %1459 = vmatprep.subr.mxu0 0.0
    %1460 = vmatpush1.msra.mxu0 0.0
    %1461 = vmatprep.subr.mxu0 0.0
    %1462 = vmatpush1.msra.mxu0 0.0
    %1463 = vmatprep.subr.mxu0 0.0
    %1464 = vmatpush1.msra.mxu0 0.0
    %1465 = vmatprep.subr.mxu0 0.0
    %1466 = vmatpush1.msra.mxu0 0.0
    %1467 = vmatprep.subr.mxu0 0.0
    %1468 = vmatpush1.msra.mxu0 0.0
    %1469 = vmatprep.mubr.f32.mxu0 0.0
    %1470 = vmatmul.mubr.f32.gmra.mrb[0].mxu0 %v58
    %v1471 = vpop.f32.mrb[0].mxu0
    %v1472 = vadd.f32 %v1403, %v1471
    %v1473 = vpop.f32.mrb[0].mxu0
    %1474 = vmatprep.mubr.f32.mxu0 0.0
    %1475 = vmatmul.mubr.f32.gmra.mrb[0].mxu0 %v61
    %v1476 = vpop.f32.mrb[0].mxu0
    %v1477 = vadd.f32 %v1403, %v1476
    %v1478 = vpop.f32.mrb[0].mxu0
    %1479 = vdwg.mxu0
    %s1480 = scalar_lea.vmem %s5, 64
    %v1481 = vld [vmem:[%s1480] sm:$0xff]
    %v1482 = vld [vmem:[%s1480 + $0x8] sm:$0xff]
    %v1483 = vld [vmem:[%s1480 + $0x10] sm:$0xff]
    %v1484 = vld [vmem:[%s1480 + $0x18] sm:$0xff]
    %s1485 = scalar_lea.vmem %s6, 2
    %v1486 = vld [vmem:[%s1485] sm:$0x1]
    %v1488 = vlaneseq
    %v1489 = vshrl.u32 %v1488, 7
    %v1490 = vsub.s32 0, %v1489
    %v1491 = vrot.slane %v1486, %v1490
    %1493 = vmatprep.subr.mxu0 0.0
    %1494 = vmatpush1.msra.mxu0 %v1481
    %1495 = vmatprep.subr.mxu0 0.0
    %1496 = vmatpush1.msra.mxu0 %v1482
    %1497 = vmatprep.subr.mxu0 0.0
    %1498 = vmatpush1.msra.mxu0 %v1483
    %1499 = vmatprep.subr.mxu0 0.0
    %1500 = vmatpush1.msra.mxu0 %v1484
    %1501 = vmatprep.subr.mxu0 0.0
    %1502 = vmatpush1.msra.mxu0 0.0
    %1503 = vmatprep.subr.mxu0 0.0
    %1504 = vmatpush1.msra.mxu0 0.0
    %1505 = vmatprep.subr.mxu0 0.0
    %1506 = vmatpush1.msra.mxu0 0.0
    %1507 = vmatprep.subr.mxu0 0.0
    %1508 = vmatpush1.msra.mxu0 0.0
    %1509 = vmatprep.subr.mxu0 0.0
    %1510 = vmatpush1.msra.mxu0 0.0
    %1511 = vmatprep.subr.mxu0 0.0
    %1512 = vmatpush1.msra.mxu0 0.0
    %1513 = vmatprep.subr.mxu0 0.0
    %1514 = vmatpush1.msra.mxu0 0.0
    %1515 = vmatprep.subr.mxu0 0.0
    %1516 = vmatpush1.msra.mxu0 0.0
    %1517 = vmatprep.subr.mxu0 0.0
    %1518 = vmatpush1.msra.mxu0 0.0
    %1519 = vmatprep.subr.mxu0 0.0
    %1520 = vmatpush1.msra.mxu0 0.0
    %1521 = vmatprep.subr.mxu0 0.0
    %1522 = vmatpush1.msra.mxu0 0.0
    %1523 = vmatprep.subr.mxu0 0.0
    %1524 = vmatpush1.msra.mxu0 0.0
    %1525 = vmatprep.subr.mxu0 0.0
    %1526 = vmatpush1.msra.mxu0 0.0
    %1527 = vmatprep.subr.mxu0 0.0
    %1528 = vmatpush1.msra.mxu0 0.0
    %1529 = vmatprep.subr.mxu0 0.0
    %1530 = vmatpush1.msra.mxu0 0.0
    %1531 = vmatprep.subr.mxu0 0.0
    %1532 = vmatpush1.msra.mxu0 0.0
    %1533 = vmatprep.subr.mxu0 0.0
    %1534 = vmatpush1.msra.mxu0 0.0
    %1535 = vmatprep.subr.mxu0 0.0
    %1536 = vmatpush1.msra.mxu0 0.0
    %1537 = vmatprep.subr.mxu0 0.0
    %1538 = vmatpush1.msra.mxu0 0.0
    %1539 = vmatprep.subr.mxu0 0.0
    %1540 = vmatpush1.msra.mxu0 0.0
    %1541 = vmatprep.subr.mxu0 0.0
    %1542 = vmatpush1.msra.mxu0 0.0
    %1543 = vmatprep.subr.mxu0 0.0
    %1544 = vmatpush1.msra.mxu0 0.0
    %1545 = vmatprep.subr.mxu0 0.0
    %1546 = vmatpush1.msra.mxu0 0.0
    %1547 = vmatprep.subr.mxu0 0.0
    %1548 = vmatpush1.msra.mxu0 0.0
    %1549 = vmatprep.subr.mxu0 0.0
    %1550 = vmatpush1.msra.mxu0 0.0
    %1551 = vmatprep.subr.mxu0 0.0
    %1552 = vmatpush1.msra.mxu0 0.0
    %1553 = vmatprep.subr.mxu0 0.0
    %1554 = vmatpush1.msra.mxu0 0.0
    %1555 = vmatprep.subr.mxu0 0.0
    %1556 = vmatpush1.msra.mxu0 0.0
    %1557 = vmatprep.mubr.f32.mxu0 0.0
    %1558 = vmatmul.mubr.f32.gmra.mrb[0].mxu0 %v150
    %v1559 = vpop.f32.mrb[0].mxu0
    %v1560 = vadd.f32 %v1491, %v1559
    %v1561 = vpop.f32.mrb[0].mxu0
    %1562 = vmatprep.mubr.f32.mxu0 0.0
    %1563 = vmatmul.mubr.f32.gmra.mrb[0].mxu0 %v153
    %v1564 = vpop.f32.mrb[0].mxu0
    %v1565 = vadd.f32 %v1491, %v1564
    %v1566 = vpop.f32.mrb[0].mxu0
    %1567 = vdwg.mxu0
    %s1568 = scalar_lea.vmem %s7, 64
    %v1569 = vld [vmem:[%s1568] sm:$0xff]
    %v1570 = vld [vmem:[%s1568 + $0x8] sm:$0xff]
    %v1571 = vld [vmem:[%s1568 + $0x10] sm:$0xff]
    %v1572 = vld [vmem:[%s1568 + $0x18] sm:$0xff]
    %s1573 = scalar_lea.vmem %s8, 2
    %v1574 = vld [vmem:[%s1573] sm:$0x1]
    %v1576 = vlaneseq
    %v1577 = vshrl.u32 %v1576, 7
    %v1578 = vsub.s32 0, %v1577
    %v1579 = vrot.slane %v1574, %v1578
    %1581 = vmatprep.subr.mxu0 0.0
    %1582 = vmatpush1.msra.mxu0 %v1569
    %1583 = vmatprep.subr.mxu0 0.0
    %1584 = vmatpush1.msra.mxu0 %v1570
    %1585 = vmatprep.subr.mxu0 0.0
    %1586 = vmatpush1.msra.mxu0 %v1571
    %1587 = vmatprep.subr.mxu0 0.0
    %1588 = vmatpush1.msra.mxu0 %v1572
    %1589 = vmatprep.subr.mxu0 0.0
    %1590 = vmatpush1.msra.mxu0 0.0
    %1591 = vmatprep.subr.mxu0 0.0
    %1592 = vmatpush1.msra.mxu0 0.0
    %1593 = vmatprep.subr.mxu0 0.0
    %1594 = vmatpush1.msra.mxu0 0.0
    %1595 = vmatprep.subr.mxu0 0.0
    %1596 = vmatpush1.msra.mxu0 0.0
    %1597 = vmatprep.subr.mxu0 0.0
    %1598 = vmatpush1.msra.mxu0 0.0
    %1599 = vmatprep.subr.mxu0 0.0
    %1600 = vmatpush1.msra.mxu0 0.0
    %1601 = vmatprep.subr.mxu0 0.0
    %1602 = vmatpush1.msra.mxu0 0.0
    %1603 = vmatprep.subr.mxu0 0.0
    %1604 = vmatpush1.msra.mxu0 0.0
    %1605 = vmatprep.subr.mxu0 0.0
    %1606 = vmatpush1.msra.mxu0 0.0
    %1607 = vmatprep.subr.mxu0 0.0
    %1608 = vmatpush1.msra.mxu0 0.0
    %1609 = vmatprep.subr.mxu0 0.0
    %1610 = vmatpush1.msra.mxu0 0.0
    %1611 = vmatprep.subr.mxu0 0.0
    %1612 = vmatpush1.msra.mxu0 0.0
    %1613 = vmatprep.subr.mxu0 0.0
    %1614 = vmatpush1.msra.mxu0 0.0
    %1615 = vmatprep.subr.mxu0 0.0
    %1616 = vmatpush1.msra.mxu0 0.0
    %1617 = vmatprep.subr.mxu0 0.0
    %1618 = vmatpush1.msra.mxu0 0.0
    %1619 = vmatprep.subr.mxu0 0.0
    %1620 = vmatpush1.msra.mxu0 0.0
    %1621 = vmatprep.subr.mxu0 0.0
    %1622 = vmatpush1.msra.mxu0 0.0
    %1623 = vmatprep.subr.mxu0 0.0
    %1624 = vmatpush1.msra.mxu0 0.0
    %1625 = vmatprep.subr.mxu0 0.0
    %1626 = vmatpush1.msra.mxu0 0.0
    %1627 = vmatprep.subr.mxu0 0.0
    %1628 = vmatpush1.msra.mxu0 0.0
    %1629 = vmatprep.subr.mxu0 0.0
    %1630 = vmatpush1.msra.mxu0 0.0
    %1631 = vmatprep.subr.mxu0 0.0
    %1632 = vmatpush1.msra.mxu0 0.0
    %1633 = vmatprep.subr.mxu0 0.0
    %1634 = vmatpush1.msra.mxu0 0.0
    %1635 = vmatprep.subr.mxu0 0.0
    %1636 = vmatpush1.msra.mxu0 0.0
    %1637 = vmatprep.subr.mxu0 0.0
    %1638 = vmatpush1.msra.mxu0 0.0
    %1639 = vmatprep.subr.mxu0 0.0
    %1640 = vmatpush1.msra.mxu0 0.0
    %1641 = vmatprep.subr.mxu0 0.0
    %1642 = vmatpush1.msra.mxu0 0.0
    %1643 = vmatprep.subr.mxu0 0.0
    %1644 = vmatpush1.msra.mxu0 0.0
    %1645 = vmatprep.mubr.f32.mxu0 0.0
    %1646 = vmatmul.mubr.f32.gmra.mrb[0].mxu0 %v242
    %v1647 = vpop.f32.mrb[0].mxu0
    %v1648 = vadd.f32 %v1579, %v1647
    %v1649 = vpop.f32.mrb[0].mxu0
    %1650 = vmatprep.mubr.f32.mxu0 0.0
    %1651 = vmatmul.mubr.f32.gmra.mrb[0].mxu0 %v245
    %v1652 = vpop.f32.mrb[0].mxu0
    %v1653 = vadd.f32 %v1579, %v1652
    %v1654 = vpop.f32.mrb[0].mxu0
    %1655 = vdwg.mxu0
    %v1657 = vsel %vm322, %v1472, 0
    %v1660 = vsel %vm322, %v1560, 0
    %1662 = vmatprep.subr.mxu0 0.0
    %1663 = vmatpush1.xpose.msra.mxu0 %v1660
    %1664 = vmatprep.subr.mxu0 0.0
    %1665 = vmatpush1.xpose.msra.mxu0 0.0
    %1666 = vmatprep.subr.mxu0 0.0
    %1667 = vmatpush1.xpose.msra.mxu0 0.0
    %1668 = vmatprep.subr.mxu0 0.0
    %1669 = vmatpush1.xpose.msra.mxu0 0.0
    %1670 = vmatprep.subr.mxu0 0.0
    %1671 = vmatpush1.xpose.msra.mxu0 0.0
    %1672 = vmatprep.subr.mxu0 0.0
    %1673 = vmatpush1.xpose.msra.mxu0 0.0
    %1674 = vmatprep.subr.mxu0 0.0
    %1675 = vmatpush1.xpose.msra.mxu0 0.0
    %1676 = vmatprep.subr.mxu0 0.0
    %1677 = vmatpush1.xpose.msra.mxu0 0.0
    %1678 = vmatprep.subr.mxu0 0.0
    %1679 = vmatpush1.xpose.msra.mxu0 0.0
    %1680 = vmatprep.subr.mxu0 0.0
    %1681 = vmatpush1.xpose.msra.mxu0 0.0
    %1682 = vmatprep.subr.mxu0 0.0
    %1683 = vmatpush1.xpose.msra.mxu0 0.0
    %1684 = vmatprep.subr.mxu0 0.0
    %1685 = vmatpush1.xpose.msra.mxu0 0.0
    %1686 = vmatprep.subr.mxu0 0.0
    %1687 = vmatpush1.xpose.msra.mxu0 0.0
    %1688 = vmatprep.subr.mxu0 0.0
    %1689 = vmatpush1.xpose.msra.mxu0 0.0
    %1690 = vmatprep.subr.mxu0 0.0
    %1691 = vmatpush1.xpose.msra.mxu0 0.0
    %1692 = vmatprep.subr.mxu0 0.0
    %1693 = vmatpush1.xpose.msra.mxu0 0.0
    %1694 = vmatprep.subr.mxu0 0.0
    %1695 = vmatpush1.xpose.msra.mxu0 0.0
    %1696 = vmatprep.subr.mxu0 0.0
    %1697 = vmatpush1.xpose.msra.mxu0 0.0
    %1698 = vmatprep.subr.mxu0 0.0
    %1699 = vmatpush1.xpose.msra.mxu0 0.0
    %1700 = vmatprep.subr.mxu0 0.0
    %1701 = vmatpush1.xpose.msra.mxu0 0.0
    %1702 = vmatprep.subr.mxu0 0.0
    %1703 = vmatpush1.xpose.msra.mxu0 0.0
    %1704 = vmatprep.subr.mxu0 0.0
    %1705 = vmatpush1.xpose.msra.mxu0 0.0
    %1706 = vmatprep.subr.mxu0 0.0
    %1707 = vmatpush1.xpose.msra.mxu0 0.0
    %1708 = vmatprep.subr.mxu0 0.0
    %1709 = vmatpush1.xpose.msra.mxu0 0.0
    %1710 = vmatprep.subr.mxu0 0.0
    %1711 = vmatpush1.xpose.msra.mxu0 0.0
    %1712 = vmatprep.subr.mxu0 0.0
    %1713 = vmatpush1.xpose.msra.mxu0 0.0
    %1714 = vmatprep.subr.mxu0 0.0
    %1715 = vmatpush1.xpose.msra.mxu0 0.0
    %1716 = vmatprep.subr.mxu0 0.0
    %1717 = vmatpush1.xpose.msra.mxu0 0.0
    %1718 = vmatprep.subr.mxu0 0.0
    %1719 = vmatpush1.xpose.msra.mxu0 0.0
    %1720 = vmatprep.subr.mxu0 0.0
    %1721 = vmatpush1.xpose.msra.mxu0 0.0
    %1722 = vmatprep.subr.mxu0 0.0
    %1723 = vmatpush1.xpose.msra.mxu0 0.0
    %1724 = vmatprep.subr.mxu0 0.0
    %1725 = vmatpush1.xpose.msra.mxu0 0.0
    %1726 = vmatprep.mubr.f32.mxu0 0.0
    %1727 = vmatmul.mubr.f32.gmra.mrb[0].mxu0 %v1657
    %v1728 = vpop.f32.mrb[0].mxu0
    %v1729 = vadd.f32 0.0, %v1728
    %v1730 = vpop.f32.mrb[0].mxu0
    %1731 = vdwg.mxu0
    %v1733 = vsel %vm322, %v1477, 0
    %v1736 = vsel %vm322, %v1565, 0
    %1738 = vmatprep.subr.mxu0 0.0
    %1739 = vmatpush1.xpose.msra.mxu0 %v1736
    %1740 = vmatprep.subr.mxu0 0.0
    %1741 = vmatpush1.xpose.msra.mxu0 0.0
    %1742 = vmatprep.subr.mxu0 0.0
    %1743 = vmatpush1.xpose.msra.mxu0 0.0
    %1744 = vmatprep.subr.mxu0 0.0
    %1745 = vmatpush1.xpose.msra.mxu0 0.0
    %1746 = vmatprep.subr.mxu0 0.0
    %1747 = vmatpush1.xpose.msra.mxu0 0.0
    %1748 = vmatprep.subr.mxu0 0.0
    %1749 = vmatpush1.xpose.msra.mxu0 0.0
    %1750 = vmatprep.subr.mxu0 0.0
    %1751 = vmatpush1.xpose.msra.mxu0 0.0
    %1752 = vmatprep.subr.mxu0 0.0
    %1753 = vmatpush1.xpose.msra.mxu0 0.0
    %1754 = vmatprep.subr.mxu0 0.0
    %1755 = vmatpush1.xpose.msra.mxu0 0.0
    %1756 = vmatprep.subr.mxu0 0.0
    %1757 = vmatpush1.xpose.msra.mxu0 0.0
    %1758 = vmatprep.subr.mxu0 0.0
    %1759 = vmatpush1.xpose.msra.mxu0 0.0
    %1760 = vmatprep.subr.mxu0 0.0
    %1761 = vmatpush1.xpose.msra.mxu0 0.0
    %1762 = vmatprep.subr.mxu0 0.0
    %1763 = vmatpush1.xpose.msra.mxu0 0.0
    %1764 = vmatprep.subr.mxu0 0.0
    %1765 = vmatpush1.xpose.msra.mxu0 0.0
    %1766 = vmatprep.subr.mxu0 0.0
    %1767 = vmatpush1.xpose.msra.mxu0 0.0
    %1768 = vmatprep.subr.mxu0 0.0
    %1769 = vmatpush1.xpose.msra.mxu0 0.0
    %1770 = vmatprep.subr.mxu0 0.0
    %1771 = vmatpush1.xpose.msra.mxu0 0.0
    %1772 = vmatprep.subr.mxu0 0.0
    %1773 = vmatpush1.xpose.msra.mxu0 0.0
    %1774 = vmatprep.subr.mxu0 0.0
    %1775 = vmatpush1.xpose.msra.mxu0 0.0
    %1776 = vmatprep.subr.mxu0 0.0
    %1777 = vmatpush1.xpose.msra.mxu0 0.0
    %1778 = vmatprep.subr.mxu0 0.0
    %1779 = vmatpush1.xpose.msra.mxu0 0.0
    %1780 = vmatprep.subr.mxu0 0.0
    %1781 = vmatpush1.xpose.msra.mxu0 0.0
    %1782 = vmatprep.subr.mxu0 0.0
    %1783 = vmatpush1.xpose.msra.mxu0 0.0
    %1784 = vmatprep.subr.mxu0 0.0
    %1785 = vmatpush1.xpose.msra.mxu0 0.0
    %1786 = vmatprep.subr.mxu0 0.0
    %1787 = vmatpush1.xpose.msra.mxu0 0.0
    %1788 = vmatprep.subr.mxu0 0.0
    %1789 = vmatpush1.xpose.msra.mxu0 0.0
    %1790 = vmatprep.subr.mxu0 0.0
    %1791 = vmatpush1.xpose.msra.mxu0 0.0
    %1792 = vmatprep.subr.mxu0 0.0
    %1793 = vmatpush1.xpose.msra.mxu0 0.0
    %1794 = vmatprep.subr.mxu0 0.0
    %1795 = vmatpush1.xpose.msra.mxu0 0.0
    %1796 = vmatprep.subr.mxu0 0.0
    %1797 = vmatpush1.xpose.msra.mxu0 0.0
    %1798 = vmatprep.subr.mxu0 0.0
    %1799 = vmatpush1.xpose.msra.mxu0 0.0
    %1800 = vmatprep.subr.mxu0 0.0
    %1801 = vmatpush1.xpose.msra.mxu0 0.0
    %1802 = vmatprep.mubr.f32.mxu0 0.0
    %1803 = vmatmul.mubr.f32.gmra.mrb[0].mxu0 %v1733
    %v1804 = vpop.f32.mrb[0].mxu0
    %v1805 = vadd.f32 0.0, %v1804
    %v1806 = vpop.f32.mrb[0].mxu0
    %1807 = vdwg.mxu0
    %v1808 = vsel %vm322, %v1729, -inf
    %1809 = vmax.xlane.f32.xlu0 %v1808
    %v1810 = vpop.xlane.xlu0 %1809
    %v1811 = vsel %vm322, %v1805, -inf
    %1812 = vmax.xlane.f32.xlu0 %v1811
    %v1813 = vpop.xlane.xlu0 %1812
    %v1814 = vsub.f32 %v1729, %v1810
    %v1815 = vsub.f32 %v1805, %v1813
    %v1816 = vmul.f32 %v1814, 1.442695
    %v1817 = vpow.pop %v1816
    %v1818 = vmul.f32 %v1815, 1.442695
    %v1819 = vpow.pop %v1818
    %v1820 = vsel %vm322, %v1817, 0.0
    %1821 = vadd.xlane.f32.xlu0 %v1820
    %v1822 = vpop.xlane.xlu0 %1821
    %v1823 = vsel %vm322, %v1819, 0.0
    %1824 = vadd.xlane.f32.xlu0 %v1823
    %v1825 = vpop.xlane.xlu0 %1824
    %v1826 = vrcp.pop %v1822
    %v1827 = vmul.f32 %v1817, %v1826
    %v1828 = vrcp.pop %v1825
    %v1829 = vmul.f32 %v1819, %v1828
    %v1831 = vsel %vm322, %v1827, 0
    %1833 = vmatprep.subr.mxu0 0.0
    %1834 = vmatpush1.msra.mxu0 %v1648
    %1835 = vmatprep.subr.mxu0 0.0
    %1836 = vmatpush1.msra.mxu0 0.0
    %1837 = vmatprep.subr.mxu0 0.0
    %1838 = vmatpush1.msra.mxu0 0.0
    %1839 = vmatprep.subr.mxu0 0.0
    %1840 = vmatpush1.msra.mxu0 0.0
    %1841 = vmatprep.subr.mxu0 0.0
    %1842 = vmatpush1.msra.mxu0 0.0
    %1843 = vmatprep.subr.mxu0 0.0
    %1844 = vmatpush1.msra.mxu0 0.0
    %1845 = vmatprep.subr.mxu0 0.0
    %1846 = vmatpush1.msra.mxu0 0.0
    %1847 = vmatprep.subr.mxu0 0.0
    %1848 = vmatpush1.msra.mxu0 0.0
    %1849 = vmatprep.subr.mxu0 0.0
    %1850 = vmatpush1.msra.mxu0 0.0
    %1851 = vmatprep.subr.mxu0 0.0
    %1852 = vmatpush1.msra.mxu0 0.0
    %1853 = vmatprep.subr.mxu0 0.0
    %1854 = vmatpush1.msra.mxu0 0.0
    %1855 = vmatprep.subr.mxu0 0.0
    %1856 = vmatpush1.msra.mxu0 0.0
    %1857 = vmatprep.subr.mxu0 0.0
    %1858 = vmatpush1.msra.mxu0 0.0
    %1859 = vmatprep.subr.mxu0 0.0
    %1860 = vmatpush1.msra.mxu0 0.0
    %1861 = vmatprep.subr.mxu0 0.0
    %1862 = vmatpush1.msra.mxu0 0.0
    %1863 = vmatprep.subr.mxu0 0.0
    %1864 = vmatpush1.msra.mxu0 0.0
    %1865 = vmatprep.subr.mxu0 0.0
    %1866 = vmatpush1.msra.mxu0 0.0
    %1867 = vmatprep.subr.mxu0 0.0
    %1868 = vmatpush1.msra.mxu0 0.0
    %1869 = vmatprep.subr.mxu0 0.0
    %1870 = vmatpush1.msra.mxu0 0.0
    %1871 = vmatprep.subr.mxu0 0.0
    %1872 = vmatpush1.msra.mxu0 0.0
    %1873 = vmatprep.subr.mxu0 0.0
    %1874 = vmatpush1.msra.mxu0 0.0
    %1875 = vmatprep.subr.mxu0 0.0
    %1876 = vmatpush1.msra.mxu0 0.0
    %1877 = vmatprep.subr.mxu0 0.0
    %1878 = vmatpush1.msra.mxu0 0.0
    %1879 = vmatprep.subr.mxu0 0.0
    %1880 = vmatpush1.msra.mxu0 0.0
    %1881 = vmatprep.subr.mxu0 0.0
    %1882 = vmatpush1.msra.mxu0 0.0
    %1883 = vmatprep.subr.mxu0 0.0
    %1884 = vmatpush1.msra.mxu0 0.0
    %1885 = vmatprep.subr.mxu0 0.0
    %1886 = vmatpush1.msra.mxu0 0.0
    %1887 = vmatprep.subr.mxu0 0.0
    %1888 = vmatpush1.msra.mxu0 0.0
    %1889 = vmatprep.subr.mxu0 0.0
    %1890 = vmatpush1.msra.mxu0 0.0
    %1891 = vmatprep.subr.mxu0 0.0
    %1892 = vmatpush1.msra.mxu0 0.0
    %1893 = vmatprep.subr.mxu0 0.0
    %1894 = vmatpush1.msra.mxu0 0.0
    %1895 = vmatprep.subr.mxu0 0.0
    %1896 = vmatpush1.msra.mxu0 0.0
    %1897 = vmatprep.mubr.f32.mxu0 0.0
    %1898 = vmatmul.mubr.f32.gmra.mrb[0].mxu0 %v1831
    %v1899 = vpop.f32.mrb[0].mxu0
    %v1900 = vadd.f32 0.0, %v1899
    %v1901 = vpop.f32.mrb[0].mxu0
    %1902 = vdwg.mxu0
    %v1904 = vsel %vm322, %v1829, 0
    %1906 = vmatprep.subr.mxu0 0.0
    %1907 = vmatpush1.msra.mxu0 %v1653
    %1908 = vmatprep.subr.mxu0 0.0
    %1909 = vmatpush1.msra.mxu0 0.0
    %1910 = vmatprep.subr.mxu0 0.0
    %1911 = vmatpush1.msra.mxu0 0.0
    %1912 = vmatprep.subr.mxu0 0.0
    %1913 = vmatpush1.msra.mxu0 0.0
    %1914 = vmatprep.subr.mxu0 0.0
    %1915 = vmatpush1.msra.mxu0 0.0
    %1916 = vmatprep.subr.mxu0 0.0
    %1917 = vmatpush1.msra.mxu0 0.0
    %1918 = vmatprep.subr.mxu0 0.0
    %1919 = vmatpush1.msra.mxu0 0.0
    %1920 = vmatprep.subr.mxu0 0.0
    %1921 = vmatpush1.msra.mxu0 0.0
    %1922 = vmatprep.subr.mxu0 0.0
    %1923 = vmatpush1.msra.mxu0 0.0
    %1924 = vmatprep.subr.mxu0 0.0
    %1925 = vmatpush1.msra.mxu0 0.0
    %1926 = vmatprep.subr.mxu0 0.0
    %1927 = vmatpush1.msra.mxu0 0.0
    %1928 = vmatprep.subr.mxu0 0.0
    %1929 = vmatpush1.msra.mxu0 0.0
    %1930 = vmatprep.subr.mxu0 0.0
    %1931 = vmatpush1.msra.mxu0 0.0
    %1932 = vmatprep.subr.mxu0 0.0
    %1933 = vmatpush1.msra.mxu0 0.0
    %1934 = vmatprep.subr.mxu0 0.0
    %1935 = vmatpush1.msra.mxu0 0.0
    %1936 = vmatprep.subr.mxu0 0.0
    %1937 = vmatpush1.msra.mxu0 0.0
    %1938 = vmatprep.subr.mxu0 0.0
    %1939 = vmatpush1.msra.mxu0 0.0
    %1940 = vmatprep.subr.mxu0 0.0
    %1941 = vmatpush1.msra.mxu0 0.0
    %1942 = vmatprep.subr.mxu0 0.0
    %1943 = vmatpush1.msra.mxu0 0.0
    %1944 = vmatprep.subr.mxu0 0.0
    %1945 = vmatpush1.msra.mxu0 0.0
    %1946 = vmatprep.subr.mxu0 0.0
    %1947 = vmatpush1.msra.mxu0 0.0
    %1948 = vmatprep.subr.mxu0 0.0
    %1949 = vmatpush1.msra.mxu0 0.0
    %1950 = vmatprep.subr.mxu0 0.0
    %1951 = vmatpush1.msra.mxu0 0.0
    %1952 = vmatprep.subr.mxu0 0.0
    %1953 = vmatpush1.msra.mxu0 0.0
    %1954 = vmatprep.subr.mxu0 0.0
    %1955 = vmatpush1.msra.mxu0 0.0
    %1956 = vmatprep.subr.mxu0 0.0
    %1957 = vmatpush1.msra.mxu0 0.0
    %1958 = vmatprep.subr.mxu0 0.0
    %1959 = vmatpush1.msra.mxu0 0.0
    %1960 = vmatprep.subr.mxu0 0.0
    %1961 = vmatpush1.msra.mxu0 0.0
    %1962 = vmatprep.subr.mxu0 0.0
    %1963 = vmatpush1.msra.mxu0 0.0
    %1964 = vmatprep.subr.mxu0 0.0
    %1965 = vmatpush1.msra.mxu0 0.0
    %1966 = vmatprep.subr.mxu0 0.0
    %1967 = vmatpush1.msra.mxu0 0.0
    %1968 = vmatprep.subr.mxu0 0.0
    %1969 = vmatpush1.msra.mxu0 0.0
    %1970 = vmatprep.mubr.f32.mxu0 0.0
    %1971 = vmatmul.mubr.f32.gmra.mrb[0].mxu0 %v1904
    %v1972 = vpop.f32.mrb[0].mxu0
    %v1973 = vadd.f32 0.0, %v1972
    %v1974 = vpop.f32.mrb[0].mxu0
    %1975 = vdwg.mxu0
    %s1976 = scalar_lea.vmem %s9, 16
    %v1977 = vld [vmem:[%s1976] sm:$0xff]
    %v1979 = vsel %vm322, %v1900, 0
    %v1982 = vsel %vm322, %v1973, 0
    %1984 = vmatprep.subr.mxu0 0.0
    %1985 = vmatpush1.msra.mxu0 %v1977
    %1986 = vmatprep.subr.mxu0 0.0
    %1987 = vmatpush1.msra.mxu0 0.0
    %1988 = vmatprep.subr.mxu0 0.0
    %1989 = vmatpush1.msra.mxu0 0.0
    %1990 = vmatprep.subr.mxu0 0.0
    %1991 = vmatpush1.msra.mxu0 0.0
    %1992 = vmatprep.subr.mxu0 0.0
    %1993 = vmatpush1.msra.mxu0 0.0
    %1994 = vmatprep.subr.mxu0 0.0
    %1995 = vmatpush1.msra.mxu0 0.0
    %1996 = vmatprep.subr.mxu0 0.0
    %1997 = vmatpush1.msra.mxu0 0.0
    %1998 = vmatprep.subr.mxu0 0.0
    %1999 = vmatpush1.msra.mxu0 0.0
    %2000 = vmatprep.subr.mxu0 0.0
    %2001 = vmatpush1.msra.mxu0 0.0
    %2002 = vmatprep.subr.mxu0 0.0
    %2003 = vmatpush1.msra.mxu0 0.0
    %2004 = vmatprep.subr.mxu0 0.0
    %2005 = vmatpush1.msra.mxu0 0.0
    %2006 = vmatprep.subr.mxu0 0.0
    %2007 = vmatpush1.msra.mxu0 0.0
    %2008 = vmatprep.subr.mxu0 0.0
    %2009 = vmatpush1.msra.mxu0 0.0
    %2010 = vmatprep.subr.mxu0 0.0
    %2011 = vmatpush1.msra.mxu0 0.0
    %2012 = vmatprep.subr.mxu0 0.0
    %2013 = vmatpush1.msra.mxu0 0.0
    %2014 = vmatprep.subr.mxu0 0.0
    %2015 = vmatpush1.msra.mxu0 0.0
    %2016 = vmatprep.subr.mxu0 0.0
    %2017 = vmatpush1.msra.mxu0 0.0
    %2018 = vmatprep.subr.mxu0 0.0
    %2019 = vmatpush1.msra.mxu0 0.0
    %2020 = vmatprep.subr.mxu0 0.0
    %2021 = vmatpush1.msra.mxu0 0.0
    %2022 = vmatprep.subr.mxu0 0.0
    %2023 = vmatpush1.msra.mxu0 0.0
    %2024 = vmatprep.subr.mxu0 0.0
    %2025 = vmatpush1.msra.mxu0 0.0
    %2026 = vmatprep.subr.mxu0 0.0
    %2027 = vmatpush1.msra.mxu0 0.0
    %2028 = vmatprep.subr.mxu0 0.0
    %2029 = vmatpush1.msra.mxu0 0.0
    %2030 = vmatprep.subr.mxu0 0.0
    %2031 = vmatpush1.msra.mxu0 0.0
    %2032 = vmatprep.subr.mxu0 0.0
    %2033 = vmatpush1.msra.mxu0 0.0
    %2034 = vmatprep.subr.mxu0 0.0
    %2035 = vmatpush1.msra.mxu0 0.0
    %2036 = vmatprep.subr.mxu0 0.0
    %2037 = vmatpush1.msra.mxu0 0.0
    %2038 = vmatprep.subr.mxu0 0.0
    %2039 = vmatpush1.msra.mxu0 0.0
    %2040 = vmatprep.subr.mxu0 0.0
    %2041 = vmatpush1.msra.mxu0 0.0
    %2042 = vmatprep.subr.mxu0 0.0
    %2043 = vmatpush1.msra.mxu0 0.0
    %2044 = vmatprep.subr.mxu0 0.0
    %2045 = vmatpush1.msra.mxu0 0.0
    %2046 = vmatprep.subr.mxu0 0.0
    %2047 = vmatpush1.msra.mxu0 0.0
    %2048 = vmatprep.mubr.f32.mxu0 0.0
    %2049 = vmatmul.mubr.f32.gmra.mrb[0].mxu0 %v1979
    %v2050 = vpop.f32.mrb[0].mxu0
    %v2051 = vadd.f32 0.0, %v2050
    %v2052 = vpop.f32.mrb[0].mxu0
    %2053 = vmatprep.mubr.f32.mxu0 0.0
    %2054 = vmatmul.mubr.f32.gmra.mrb[0].mxu0 %v1982
    %v2055 = vpop.f32.mrb[0].mxu0
    %v2056 = vadd.f32 0.0, %v2055
    %v2057 = vpop.f32.mrb[0].mxu0
    %2058 = vdwg.mxu0
    %v2059 = vadd.f32 %v1384, %v2051
    %v2060 = vadd.f32 %v1389, %v2056
    %s2061 = scalar_lea.vmem %s3, 96
    %v2062 = vld [vmem:[%s2061] sm:$0xff]
    %v2063 = vld [vmem:[%s2061 + $0x8] sm:$0xff]
    %v2064 = vld [vmem:[%s2061 + $0x10] sm:$0xff]
    %v2065 = vld [vmem:[%s2061 + $0x18] sm:$0xff]
    %s2066 = scalar_lea.vmem %s4, 3
    %v2067 = vld [vmem:[%s2066] sm:$0x1]
    %v2069 = vlaneseq
    %v2070 = vshrl.u32 %v2069, 7
    %v2071 = vsub.s32 0, %v2070
    %v2072 = vrot.slane %v2067, %v2071
    %2074 = vmatprep.subr.mxu0 0.0
    %2075 = vmatpush1.msra.mxu0 %v2062
    %2076 = vmatprep.subr.mxu0 0.0
    %2077 = vmatpush1.msra.mxu0 %v2063
    %2078 = vmatprep.subr.mxu0 0.0
    %2079 = vmatpush1.msra.mxu0 %v2064
    %2080 = vmatprep.subr.mxu0 0.0
    %2081 = vmatpush1.msra.mxu0 %v2065
    %2082 = vmatprep.subr.mxu0 0.0
    %2083 = vmatpush1.msra.mxu0 0.0
    %2084 = vmatprep.subr.mxu0 0.0
    %2085 = vmatpush1.msra.mxu0 0.0
    %2086 = vmatprep.subr.mxu0 0.0
    %2087 = vmatpush1.msra.mxu0 0.0
    %2088 = vmatprep.subr.mxu0 0.0
    %2089 = vmatpush1.msra.mxu0 0.0
    %2090 = vmatprep.subr.mxu0 0.0
    %2091 = vmatpush1.msra.mxu0 0.0
    %2092 = vmatprep.subr.mxu0 0.0
    %2093 = vmatpush1.msra.mxu0 0.0
    %2094 = vmatprep.subr.mxu0 0.0
    %2095 = vmatpush1.msra.mxu0 0.0
    %2096 = vmatprep.subr.mxu0 0.0
    %2097 = vmatpush1.msra.mxu0 0.0
    %2098 = vmatprep.subr.mxu0 0.0
    %2099 = vmatpush1.msra.mxu0 0.0
    %2100 = vmatprep.subr.mxu0 0.0
    %2101 = vmatpush1.msra.mxu0 0.0
    %2102 = vmatprep.subr.mxu0 0.0
    %2103 = vmatpush1.msra.mxu0 0.0
    %2104 = vmatprep.subr.mxu0 0.0
    %2105 = vmatpush1.msra.mxu0 0.0
    %2106 = vmatprep.subr.mxu0 0.0
    %2107 = vmatpush1.msra.mxu0 0.0
    %2108 = vmatprep.subr.mxu0 0.0
    %2109 = vmatpush1.msra.mxu0 0.0
    %2110 = vmatprep.subr.mxu0 0.0
    %2111 = vmatpush1.msra.mxu0 0.0
    %2112 = vmatprep.subr.mxu0 0.0
    %2113 = vmatpush1.msra.mxu0 0.0
    %2114 = vmatprep.subr.mxu0 0.0
    %2115 = vmatpush1.msra.mxu0 0.0
    %2116 = vmatprep.subr.mxu0 0.0
    %2117 = vmatpush1.msra.mxu0 0.0
    %2118 = vmatprep.subr.mxu0 0.0
    %2119 = vmatpush1.msra.mxu0 0.0
    %2120 = vmatprep.subr.mxu0 0.0
    %2121 = vmatpush1.msra.mxu0 0.0
    %2122 = vmatprep.subr.mxu0 0.0
    %2123 = vmatpush1.msra.mxu0 0.0
    %2124 = vmatprep.subr.mxu0 0.0
    %2125 = vmatpush1.msra.mxu0 0.0
    %2126 = vmatprep.subr.mxu0 0.0
    %2127 = vmatpush1.msra.mxu0 0.0
    %2128 = vmatprep.subr.mxu0 0.0
    %2129 = vmatpush1.msra.mxu0 0.0
    %2130 = vmatprep.subr.mxu0 0.0
    %2131 = vmatpush1.msra.mxu0 0.0
    %2132 = vmatprep.subr.mxu0 0.0
    %2133 = vmatpush1.msra.mxu0 0.0
    %2134 = vmatprep.subr.mxu0 0.0
    %2135 = vmatpush1.msra.mxu0 0.0
    %2136 = vmatprep.subr.mxu0 0.0
    %2137 = vmatpush1.msra.mxu0 0.0
    %2138 = vmatprep.mubr.f32.mxu0 0.0
    %2139 = vmatmul.mubr.f32.gmra.mrb[0].mxu0 %v58
    %v2140 = vpop.f32.mrb[0].mxu0
    %v2141 = vadd.f32 %v2072, %v2140
    %v2142 = vpop.f32.mrb[0].mxu0
    %2143 = vmatprep.mubr.f32.mxu0 0.0
    %2144 = vmatmul.mubr.f32.gmra.mrb[0].mxu0 %v61
    %v2145 = vpop.f32.mrb[0].mxu0
    %v2146 = vadd.f32 %v2072, %v2145
    %v2147 = vpop.f32.mrb[0].mxu0
    %2148 = vdwg.mxu0
    %s2149 = scalar_lea.vmem %s5, 96
    %v2150 = vld [vmem:[%s2149] sm:$0xff]
    %v2151 = vld [vmem:[%s2149 + $0x8] sm:$0xff]
    %v2152 = vld [vmem:[%s2149 + $0x10] sm:$0xff]
    %v2153 = vld [vmem:[%s2149 + $0x18] sm:$0xff]
    %s2154 = scalar_lea.vmem %s6, 3
    %v2155 = vld [vmem:[%s2154] sm:$0x1]
    %v2157 = vlaneseq
    %v2158 = vshrl.u32 %v2157, 7
    %v2159 = vsub.s32 0, %v2158
    %v2160 = vrot.slane %v2155, %v2159
    %2162 = vmatprep.subr.mxu0 0.0
    %2163 = vmatpush1.msra.mxu0 %v2150
    %2164 = vmatprep.subr.mxu0 0.0
    %2165 = vmatpush1.msra.mxu0 %v2151
    %2166 = vmatprep.subr.mxu0 0.0
    %2167 = vmatpush1.msra.mxu0 %v2152
    %2168 = vmatprep.subr.mxu0 0.0
    %2169 = vmatpush1.msra.mxu0 %v2153
    %2170 = vmatprep.subr.mxu0 0.0
    %2171 = vmatpush1.msra.mxu0 0.0
    %2172 = vmatprep.subr.mxu0 0.0
    %2173 = vmatpush1.msra.mxu0 0.0
    %2174 = vmatprep.subr.mxu0 0.0
    %2175 = vmatpush1.msra.mxu0 0.0
    %2176 = vmatprep.subr.mxu0 0.0
    %2177 = vmatpush1.msra.mxu0 0.0
    %2178 = vmatprep.subr.mxu0 0.0
    %2179 = vmatpush1.msra.mxu0 0.0
    %2180 = vmatprep.subr.mxu0 0.0
    %2181 = vmatpush1.msra.mxu0 0.0
    %2182 = vmatprep.subr.mxu0 0.0
    %2183 = vmatpush1.msra.mxu0 0.0
    %2184 = vmatprep.subr.mxu0 0.0
    %2185 = vmatpush1.msra.mxu0 0.0
    %2186 = vmatprep.subr.mxu0 0.0
    %2187 = vmatpush1.msra.mxu0 0.0
    %2188 = vmatprep.subr.mxu0 0.0
    %2189 = vmatpush1.msra.mxu0 0.0
    %2190 = vmatprep.subr.mxu0 0.0
    %2191 = vmatpush1.msra.mxu0 0.0
    %2192 = vmatprep.subr.mxu0 0.0
    %2193 = vmatpush1.msra.mxu0 0.0
    %2194 = vmatprep.subr.mxu0 0.0
    %2195 = vmatpush1.msra.mxu0 0.0
    %2196 = vmatprep.subr.mxu0 0.0
    %2197 = vmatpush1.msra.mxu0 0.0
    %2198 = vmatprep.subr.mxu0 0.0
    %2199 = vmatpush1.msra.mxu0 0.0
    %2200 = vmatprep.subr.mxu0 0.0
    %2201 = vmatpush1.msra.mxu0 0.0
    %2202 = vmatprep.subr.mxu0 0.0
    %2203 = vmatpush1.msra.mxu0 0.0
    %2204 = vmatprep.subr.mxu0 0.0
    %2205 = vmatpush1.msra.mxu0 0.0
    %2206 = vmatprep.subr.mxu0 0.0
    %2207 = vmatpush1.msra.mxu0 0.0
    %2208 = vmatprep.subr.mxu0 0.0
    %2209 = vmatpush1.msra.mxu0 0.0
    %2210 = vmatprep.subr.mxu0 0.0
    %2211 = vmatpush1.msra.mxu0 0.0
    %2212 = vmatprep.subr.mxu0 0.0
    %2213 = vmatpush1.msra.mxu0 0.0
    %2214 = vmatprep.subr.mxu0 0.0
    %2215 = vmatpush1.msra.mxu0 0.0
    %2216 = vmatprep.subr.mxu0 0.0
    %2217 = vmatpush1.msra.mxu0 0.0
    %2218 = vmatprep.subr.mxu0 0.0
    %2219 = vmatpush1.msra.mxu0 0.0
    %2220 = vmatprep.subr.mxu0 0.0
    %2221 = vmatpush1.msra.mxu0 0.0
    %2222 = vmatprep.subr.mxu0 0.0
    %2223 = vmatpush1.msra.mxu0 0.0
    %2224 = vmatprep.subr.mxu0 0.0
    %2225 = vmatpush1.msra.mxu0 0.0
    %2226 = vmatprep.mubr.f32.mxu0 0.0
    %2227 = vmatmul.mubr.f32.gmra.mrb[0].mxu0 %v150
    %v2228 = vpop.f32.mrb[0].mxu0
    %v2229 = vadd.f32 %v2160, %v2228
    %v2230 = vpop.f32.mrb[0].mxu0
    %2231 = vmatprep.mubr.f32.mxu0 0.0
    %2232 = vmatmul.mubr.f32.gmra.mrb[0].mxu0 %v153
    %v2233 = vpop.f32.mrb[0].mxu0
    %v2234 = vadd.f32 %v2160, %v2233
    %v2235 = vpop.f32.mrb[0].mxu0
    %2236 = vdwg.mxu0
    %s2237 = scalar_lea.vmem %s7, 96
    %v2238 = vld [vmem:[%s2237] sm:$0xff]
    %v2239 = vld [vmem:[%s2237 + $0x8] sm:$0xff]
    %v2240 = vld [vmem:[%s2237 + $0x10] sm:$0xff]
    %v2241 = vld [vmem:[%s2237 + $0x18] sm:$0xff]
    %s2242 = scalar_lea.vmem %s8, 3
    %v2243 = vld [vmem:[%s2242] sm:$0x1]
    %v2245 = vlaneseq
    %v2246 = vshrl.u32 %v2245, 7
    %v2247 = vsub.s32 0, %v2246
    %v2248 = vrot.slane %v2243, %v2247
    %2250 = vmatprep.subr.mxu0 0.0
    %2251 = vmatpush1.msra.mxu0 %v2238
    %2252 = vmatprep.subr.mxu0 0.0
    %2253 = vmatpush1.msra.mxu0 %v2239
    %2254 = vmatprep.subr.mxu0 0.0
    %2255 = vmatpush1.msra.mxu0 %v2240
    %2256 = vmatprep.subr.mxu0 0.0
    %2257 = vmatpush1.msra.mxu0 %v2241
    %2258 = vmatprep.subr.mxu0 0.0
    %2259 = vmatpush1.msra.mxu0 0.0
    %2260 = vmatprep.subr.mxu0 0.0
    %2261 = vmatpush1.msra.mxu0 0.0
    %2262 = vmatprep.subr.mxu0 0.0
    %2263 = vmatpush1.msra.mxu0 0.0
    %2264 = vmatprep.subr.mxu0 0.0
    %2265 = vmatpush1.msra.mxu0 0.0
    %2266 = vmatprep.subr.mxu0 0.0
    %2267 = vmatpush1.msra.mxu0 0.0
    %2268 = vmatprep.subr.mxu0 0.0
    %2269 = vmatpush1.msra.mxu0 0.0
    %2270 = vmatprep.subr.mxu0 0.0
    %2271 = vmatpush1.msra.mxu0 0.0
    %2272 = vmatprep.subr.mxu0 0.0
    %2273 = vmatpush1.msra.mxu0 0.0
    %2274 = vmatprep.subr.mxu0 0.0
    %2275 = vmatpush1.msra.mxu0 0.0
    %2276 = vmatprep.subr.mxu0 0.0
    %2277 = vmatpush1.msra.mxu0 0.0
    %2278 = vmatprep.subr.mxu0 0.0
    %2279 = vmatpush1.msra.mxu0 0.0
    %2280 = vmatprep.subr.mxu0 0.0
    %2281 = vmatpush1.msra.mxu0 0.0
    %2282 = vmatprep.subr.mxu0 0.0
    %2283 = vmatpush1.msra.mxu0 0.0
    %2284 = vmatprep.subr.mxu0 0.0
    %2285 = vmatpush1.msra.mxu0 0.0
    %2286 = vmatprep.subr.mxu0 0.0
    %2287 = vmatpush1.msra.mxu0 0.0
    %2288 = vmatprep.subr.mxu0 0.0
    %2289 = vmatpush1.msra.mxu0 0.0
    %2290 = vmatprep.subr.mxu0 0.0
    %2291 = vmatpush1.msra.mxu0 0.0
    %2292 = vmatprep.subr.mxu0 0.0
    %2293 = vmatpush1.msra.mxu0 0.0
    %2294 = vmatprep.subr.mxu0 0.0
    %2295 = vmatpush1.msra.mxu0 0.0
    %2296 = vmatprep.subr.mxu0 0.0
    %2297 = vmatpush1.msra.mxu0 0.0
    %2298 = vmatprep.subr.mxu0 0.0
    %2299 = vmatpush1.msra.mxu0 0.0
    %2300 = vmatprep.subr.mxu0 0.0
    %2301 = vmatpush1.msra.mxu0 0.0
    %2302 = vmatprep.subr.mxu0 0.0
    %2303 = vmatpush1.msra.mxu0 0.0
    %2304 = vmatprep.subr.mxu0 0.0
    %2305 = vmatpush1.msra.mxu0 0.0
    %2306 = vmatprep.subr.mxu0 0.0
    %2307 = vmatpush1.msra.mxu0 0.0
    %2308 = vmatprep.subr.mxu0 0.0
    %2309 = vmatpush1.msra.mxu0 0.0
    %2310 = vmatprep.subr.mxu0 0.0
    %2311 = vmatpush1.msra.mxu0 0.0
    %2312 = vmatprep.subr.mxu0 0.0
    %2313 = vmatpush1.msra.mxu0 0.0
    %2314 = vmatprep.mubr.f32.mxu0 0.0
    %2315 = vmatmul.mubr.f32.gmra.mrb[0].mxu0 %v242
    %v2316 = vpop.f32.mrb[0].mxu0
    %v2317 = vadd.f32 %v2248, %v2316
    %v2318 = vpop.f32.mrb[0].mxu0
    %2319 = vmatprep.mubr.f32.mxu0 0.0
    %2320 = vmatmul.mubr.f32.gmra.mrb[0].mxu0 %v245
    %v2321 = vpop.f32.mrb[0].mxu0
    %v2322 = vadd.f32 %v2248, %v2321
    %v2323 = vpop.f32.mrb[0].mxu0
    %2324 = vdwg.mxu0
    %v2326 = vsel %vm322, %v2141, 0
    %v2329 = vsel %vm322, %v2229, 0
    %2331 = vmatprep.subr.mxu0 0.0
    %2332 = vmatpush1.xpose.msra.mxu0 %v2329
    %2333 = vmatprep.subr.mxu0 0.0
    %2334 = vmatpush1.xpose.msra.mxu0 0.0
    %2335 = vmatprep.subr.mxu0 0.0
    %2336 = vmatpush1.xpose.msra.mxu0 0.0
    %2337 = vmatprep.subr.mxu0 0.0
    %2338 = vmatpush1.xpose.msra.mxu0 0.0
    %2339 = vmatprep.subr.mxu0 0.0
    %2340 = vmatpush1.xpose.msra.mxu0 0.0
    %2341 = vmatprep.subr.mxu0 0.0
    %2342 = vmatpush1.xpose.msra.mxu0 0.0
    %2343 = vmatprep.subr.mxu0 0.0
    %2344 = vmatpush1.xpose.msra.mxu0 0.0
    %2345 = vmatprep.subr.mxu0 0.0
    %2346 = vmatpush1.xpose.msra.mxu0 0.0
    %2347 = vmatprep.subr.mxu0 0.0
    %2348 = vmatpush1.xpose.msra.mxu0 0.0
    %2349 = vmatprep.subr.mxu0 0.0
    %2350 = vmatpush1.xpose.msra.mxu0 0.0
    %2351 = vmatprep.subr.mxu0 0.0
    %2352 = vmatpush1.xpose.msra.mxu0 0.0
    %2353 = vmatprep.subr.mxu0 0.0
    %2354 = vmatpush1.xpose.msra.mxu0 0.0
    %2355 = vmatprep.subr.mxu0 0.0
    %2356 = vmatpush1.xpose.msra.mxu0 0.0
    %2357 = vmatprep.subr.mxu0 0.0
    %2358 = vmatpush1.xpose.msra.mxu0 0.0
    %2359 = vmatprep.subr.mxu0 0.0
    %2360 = vmatpush1.xpose.msra.mxu0 0.0
    %2361 = vmatprep.subr.mxu0 0.0
    %2362 = vmatpush1.xpose.msra.mxu0 0.0
    %2363 = vmatprep.subr.mxu0 0.0
    %2364 = vmatpush1.xpose.msra.mxu0 0.0
    %2365 = vmatprep.subr.mxu0 0.0
    %2366 = vmatpush1.xpose.msra.mxu0 0.0
    %2367 = vmatprep.subr.mxu0 0.0
    %2368 = vmatpush1.xpose.msra.mxu0 0.0
    %2369 = vmatprep.subr.mxu0 0.0
    %2370 = vmatpush1.xpose.msra.mxu0 0.0
    %2371 = vmatprep.subr.mxu0 0.0
    %2372 = vmatpush1.xpose.msra.mxu0 0.0
    %2373 = vmatprep.subr.mxu0 0.0
    %2374 = vmatpush1.xpose.msra.mxu0 0.0
    %2375 = vmatprep.subr.mxu0 0.0
    %2376 = vmatpush1.xpose.msra.mxu0 0.0
    %2377 = vmatprep.subr.mxu0 0.0
    %2378 = vmatpush1.xpose.msra.mxu0 0.0
    %2379 = vmatprep.subr.mxu0 0.0
    %2380 = vmatpush1.xpose.msra.mxu0 0.0
    %2381 = vmatprep.subr.mxu0 0.0
    %2382 = vmatpush1.xpose.msra.mxu0 0.0
    %2383 = vmatprep.subr.mxu0 0.0
    %2384 = vmatpush1.xpose.msra.mxu0 0.0
    %2385 = vmatprep.subr.mxu0 0.0
    %2386 = vmatpush1.xpose.msra.mxu0 0.0
    %2387 = vmatprep.subr.mxu0 0.0
    %2388 = vmatpush1.xpose.msra.mxu0 0.0
    %2389 = vmatprep.subr.mxu0 0.0
    %2390 = vmatpush1.xpose.msra.mxu0 0.0
    %2391 = vmatprep.subr.mxu0 0.0
    %2392 = vmatpush1.xpose.msra.mxu0 0.0
    %2393 = vmatprep.subr.mxu0 0.0
    %2394 = vmatpush1.xpose.msra.mxu0 0.0
    %2395 = vmatprep.mubr.f32.mxu0 0.0
    %2396 = vmatmul.mubr.f32.gmra.mrb[0].mxu0 %v2326
    %v2397 = vpop.f32.mrb[0].mxu0
    %v2398 = vadd.f32 0.0, %v2397
    %v2399 = vpop.f32.mrb[0].mxu0
    %2400 = vdwg.mxu0
    %v2402 = vsel %vm322, %v2146, 0
    %v2405 = vsel %vm322, %v2234, 0
    %2407 = vmatprep.subr.mxu0 0.0
    %2408 = vmatpush1.xpose.msra.mxu0 %v2405
    %2409 = vmatprep.subr.mxu0 0.0
    %2410 = vmatpush1.xpose.msra.mxu0 0.0
    %2411 = vmatprep.subr.mxu0 0.0
    %2412 = vmatpush1.xpose.msra.mxu0 0.0
    %2413 = vmatprep.subr.mxu0 0.0
    %2414 = vmatpush1.xpose.msra.mxu0 0.0
    %2415 = vmatprep.subr.mxu0 0.0
    %2416 = vmatpush1.xpose.msra.mxu0 0.0
    %2417 = vmatprep.subr.mxu0 0.0
    %2418 = vmatpush1.xpose.msra.mxu0 0.0
    %2419 = vmatprep.subr.mxu0 0.0
    %2420 = vmatpush1.xpose.msra.mxu0 0.0
    %2421 = vmatprep.subr.mxu0 0.0
    %2422 = vmatpush1.xpose.msra.mxu0 0.0
    %2423 = vmatprep.subr.mxu0 0.0
    %2424 = vmatpush1.xpose.msra.mxu0 0.0
    %2425 = vmatprep.subr.mxu0 0.0
    %2426 = vmatpush1.xpose.msra.mxu0 0.0
    %2427 = vmatprep.subr.mxu0 0.0
    %2428 = vmatpush1.xpose.msra.mxu0 0.0
    %2429 = vmatprep.subr.mxu0 0.0
    %2430 = vmatpush1.xpose.msra.mxu0 0.0
    %2431 = vmatprep.subr.mxu0 0.0
    %2432 = vmatpush1.xpose.msra.mxu0 0.0
    %2433 = vmatprep.subr.mxu0 0.0
    %2434 = vmatpush1.xpose.msra.mxu0 0.0
    %2435 = vmatprep.subr.mxu0 0.0
    %2436 = vmatpush1.xpose.msra.mxu0 0.0
    %2437 = vmatprep.subr.mxu0 0.0
    %2438 = vmatpush1.xpose.msra.mxu0 0.0
    %2439 = vmatprep.subr.mxu0 0.0
    %2440 = vmatpush1.xpose.msra.mxu0 0.0
    %2441 = vmatprep.subr.mxu0 0.0
    %2442 = vmatpush1.xpose.msra.mxu0 0.0
    %2443 = vmatprep.subr.mxu0 0.0
    %2444 = vmatpush1.xpose.msra.mxu0 0.0
    %2445 = vmatprep.subr.mxu0 0.0
    %2446 = vmatpush1.xpose.msra.mxu0 0.0
    %2447 = vmatprep.subr.mxu0 0.0
    %2448 = vmatpush1.xpose.msra.mxu0 0.0
    %2449 = vmatprep.subr.mxu0 0.0
    %2450 = vmatpush1.xpose.msra.mxu0 0.0
    %2451 = vmatprep.subr.mxu0 0.0
    %2452 = vmatpush1.xpose.msra.mxu0 0.0
    %2453 = vmatprep.subr.mxu0 0.0
    %2454 = vmatpush1.xpose.msra.mxu0 0.0
    %2455 = vmatprep.subr.mxu0 0.0
    %2456 = vmatpush1.xpose.msra.mxu0 0.0
    %2457 = vmatprep.subr.mxu0 0.0
    %2458 = vmatpush1.xpose.msra.mxu0 0.0
    %2459 = vmatprep.subr.mxu0 0.0
    %2460 = vmatpush1.xpose.msra.mxu0 0.0
    %2461 = vmatprep.subr.mxu0 0.0
    %2462 = vmatpush1.xpose.msra.mxu0 0.0
    %2463 = vmatprep.subr.mxu0 0.0
    %2464 = vmatpush1.xpose.msra.mxu0 0.0
    %2465 = vmatprep.subr.mxu0 0.0
    %2466 = vmatpush1.xpose.msra.mxu0 0.0
    %2467 = vmatprep.subr.mxu0 0.0
    %2468 = vmatpush1.xpose.msra.mxu0 0.0
    %2469 = vmatprep.subr.mxu0 0.0
    %2470 = vmatpush1.xpose.msra.mxu0 0.0
    %2471 = vmatprep.mubr.f32.mxu0 0.0
    %2472 = vmatmul.mubr.f32.gmra.mrb[0].mxu0 %v2402
    %v2473 = vpop.f32.mrb[0].mxu0
    %v2474 = vadd.f32 0.0, %v2473
    %v2475 = vpop.f32.mrb[0].mxu0
    %2476 = vdwg.mxu0
    %v2477 = vsel %vm322, %v2398, -inf
    %2478 = vmax.xlane.f32.xlu0 %v2477
    %v2479 = vpop.xlane.xlu0 %2478
    %v2480 = vsel %vm322, %v2474, -inf
    %2481 = vmax.xlane.f32.xlu0 %v2480
    %v2482 = vpop.xlane.xlu0 %2481
    %v2483 = vsub.f32 %v2398, %v2479
    %v2484 = vsub.f32 %v2474, %v2482
    %v2485 = vmul.f32 %v2483, 1.442695
    %v2486 = vpow.pop %v2485
    %v2487 = vmul.f32 %v2484, 1.442695
    %v2488 = vpow.pop %v2487
    %v2489 = vsel %vm322, %v2486, 0.0
    %2490 = vadd.xlane.f32.xlu0 %v2489
    %v2491 = vpop.xlane.xlu0 %2490
    %v2492 = vsel %vm322, %v2488, 0.0
    %2493 = vadd.xlane.f32.xlu0 %v2492
    %v2494 = vpop.xlane.xlu0 %2493
    %v2495 = vrcp.pop %v2491
    %v2496 = vmul.f32 %v2486, %v2495
    %v2497 = vrcp.pop %v2494
    %v2498 = vmul.f32 %v2488, %v2497
    %v2500 = vsel %vm322, %v2496, 0
    %2502 = vmatprep.subr.mxu0 0.0
    %2503 = vmatpush1.msra.mxu0 %v2317
    %2504 = vmatprep.subr.mxu0 0.0
    %2505 = vmatpush1.msra.mxu0 0.0
    %2506 = vmatprep.subr.mxu0 0.0
    %2507 = vmatpush1.msra.mxu0 0.0
    %2508 = vmatprep.subr.mxu0 0.0
    %2509 = vmatpush1.msra.mxu0 0.0
    %2510 = vmatprep.subr.mxu0 0.0
    %2511 = vmatpush1.msra.mxu0 0.0
    %2512 = vmatprep.subr.mxu0 0.0
    %2513 = vmatpush1.msra.mxu0 0.0
    %2514 = vmatprep.subr.mxu0 0.0
    %2515 = vmatpush1.msra.mxu0 0.0
    %2516 = vmatprep.subr.mxu0 0.0
    %2517 = vmatpush1.msra.mxu0 0.0
    %2518 = vmatprep.subr.mxu0 0.0
    %2519 = vmatpush1.msra.mxu0 0.0
    %2520 = vmatprep.subr.mxu0 0.0
    %2521 = vmatpush1.msra.mxu0 0.0
    %2522 = vmatprep.subr.mxu0 0.0
    %2523 = vmatpush1.msra.mxu0 0.0
    %2524 = vmatprep.subr.mxu0 0.0
    %2525 = vmatpush1.msra.mxu0 0.0
    %2526 = vmatprep.subr.mxu0 0.0
    %2527 = vmatpush1.msra.mxu0 0.0
    %2528 = vmatprep.subr.mxu0 0.0
    %2529 = vmatpush1.msra.mxu0 0.0
    %2530 = vmatprep.subr.mxu0 0.0
    %2531 = vmatpush1.msra.mxu0 0.0
    %2532 = vmatprep.subr.mxu0 0.0
    %2533 = vmatpush1.msra.mxu0 0.0
    %2534 = vmatprep.subr.mxu0 0.0
    %2535 = vmatpush1.msra.mxu0 0.0
    %2536 = vmatprep.subr.mxu0 0.0
    %2537 = vmatpush1.msra.mxu0 0.0
    %2538 = vmatprep.subr.mxu0 0.0
    %2539 = vmatpush1.msra.mxu0 0.0
    %2540 = vmatprep.subr.mxu0 0.0
    %2541 = vmatpush1.msra.mxu0 0.0
    %2542 = vmatprep.subr.mxu0 0.0
    %2543 = vmatpush1.msra.mxu0 0.0
    %2544 = vmatprep.subr.mxu0 0.0
    %2545 = vmatpush1.msra.mxu0 0.0
    %2546 = vmatprep.subr.mxu0 0.0
    %2547 = vmatpush1.msra.mxu0 0.0
    %2548 = vmatprep.subr.mxu0 0.0
    %2549 = vmatpush1.msra.mxu0 0.0
    %2550 = vmatprep.subr.mxu0 0.0
    %2551 = vmatpush1.msra.mxu0 0.0
    %2552 = vmatprep.subr.mxu0 0.0
    %2553 = vmatpush1.msra.mxu0 0.0
    %2554 = vmatprep.subr.mxu0 0.0
    %2555 = vmatpush1.msra.mxu0 0.0
    %2556 = vmatprep.subr.mxu0 0.0
    %2557 = vmatpush1.msra.mxu0 0.0
    %2558 = vmatprep.subr.mxu0 0.0
    %2559 = vmatpush1.msra.mxu0 0.0
    %2560 = vmatprep.subr.mxu0 0.0
    %2561 = vmatpush1.msra.mxu0 0.0
    %2562 = vmatprep.subr.mxu0 0.0
    %2563 = vmatpush1.msra.mxu0 0.0
    %2564 = vmatprep.subr.mxu0 0.0
    %2565 = vmatpush1.msra.mxu0 0.0
    %2566 = vmatprep.mubr.f32.mxu0 0.0
    %2567 = vmatmul.mubr.f32.gmra.mrb[0].mxu0 %v2500
    %v2568 = vpop.f32.mrb[0].mxu0
    %v2569 = vadd.f32 0.0, %v2568
    %v2570 = vpop.f32.mrb[0].mxu0
    %2571 = vdwg.mxu0
    %v2573 = vsel %vm322, %v2498, 0
    %2575 = vmatprep.subr.mxu0 0.0
    %2576 = vmatpush1.msra.mxu0 %v2322
    %2577 = vmatprep.subr.mxu0 0.0
    %2578 = vmatpush1.msra.mxu0 0.0
    %2579 = vmatprep.subr.mxu0 0.0
    %2580 = vmatpush1.msra.mxu0 0.0
    %2581 = vmatprep.subr.mxu0 0.0
    %2582 = vmatpush1.msra.mxu0 0.0
    %2583 = vmatprep.subr.mxu0 0.0
    %2584 = vmatpush1.msra.mxu0 0.0
    %2585 = vmatprep.subr.mxu0 0.0
    %2586 = vmatpush1.msra.mxu0 0.0
    %2587 = vmatprep.subr.mxu0 0.0
    %2588 = vmatpush1.msra.mxu0 0.0
    %2589 = vmatprep.subr.mxu0 0.0
    %2590 = vmatpush1.msra.mxu0 0.0
    %2591 = vmatprep.subr.mxu0 0.0
    %2592 = vmatpush1.msra.mxu0 0.0
    %2593 = vmatprep.subr.mxu0 0.0
    %2594 = vmatpush1.msra.mxu0 0.0
    %2595 = vmatprep.subr.mxu0 0.0
    %2596 = vmatpush1.msra.mxu0 0.0
    %2597 = vmatprep.subr.mxu0 0.0
    %2598 = vmatpush1.msra.mxu0 0.0
    %2599 = vmatprep.subr.mxu0 0.0
    %2600 = vmatpush1.msra.mxu0 0.0
    %2601 = vmatprep.subr.mxu0 0.0
    %2602 = vmatpush1.msra.mxu0 0.0
    %2603 = vmatprep.subr.mxu0 0.0
    %2604 = vmatpush1.msra.mxu0 0.0
    %2605 = vmatprep.subr.mxu0 0.0
    %2606 = vmatpush1.msra.mxu0 0.0
    %2607 = vmatprep.subr.mxu0 0.0
    %2608 = vmatpush1.msra.mxu0 0.0
    %2609 = vmatprep.subr.mxu0 0.0
    %2610 = vmatpush1.msra.mxu0 0.0
    %2611 = vmatprep.subr.mxu0 0.0
    %2612 = vmatpush1.msra.mxu0 0.0
    %2613 = vmatprep.subr.mxu0 0.0
    %2614 = vmatpush1.msra.mxu0 0.0
    %2615 = vmatprep.subr.mxu0 0.0
    %2616 = vmatpush1.msra.mxu0 0.0
    %2617 = vmatprep.subr.mxu0 0.0
    %2618 = vmatpush1.msra.mxu0 0.0
    %2619 = vmatprep.subr.mxu0 0.0
    %2620 = vmatpush1.msra.mxu0 0.0
    %2621 = vmatprep.subr.mxu0 0.0
    %2622 = vmatpush1.msra.mxu0 0.0
    %2623 = vmatprep.subr.mxu0 0.0
    %2624 = vmatpush1.msra.mxu0 0.0
    %2625 = vmatprep.subr.mxu0 0.0
    %2626 = vmatpush1.msra.mxu0 0.0
    %2627 = vmatprep.subr.mxu0 0.0
    %2628 = vmatpush1.msra.mxu0 0.0
    %2629 = vmatprep.subr.mxu0 0.0
    %2630 = vmatpush1.msra.mxu0 0.0
    %2631 = vmatprep.subr.mxu0 0.0
    %2632 = vmatpush1.msra.mxu0 0.0
    %2633 = vmatprep.subr.mxu0 0.0
    %2634 = vmatpush1.msra.mxu0 0.0
    %2635 = vmatprep.subr.mxu0 0.0
    %2636 = vmatpush1.msra.mxu0 0.0
    %2637 = vmatprep.subr.mxu0 0.0
    %2638 = vmatpush1.msra.mxu0 0.0
    %2639 = vmatprep.mubr.f32.mxu0 0.0
    %2640 = vmatmul.mubr.f32.gmra.mrb[0].mxu0 %v2573
    %v2641 = vpop.f32.mrb[0].mxu0
    %v2642 = vadd.f32 0.0, %v2641
    %v2643 = vpop.f32.mrb[0].mxu0
    %2644 = vdwg.mxu0
    %s2645 = scalar_lea.vmem %s9, 24
    %v2646 = vld [vmem:[%s2645] sm:$0xff]
    %v2648 = vsel %vm322, %v2569, 0
    %v2651 = vsel %vm322, %v2642, 0
    %2653 = vmatprep.subr.mxu0 0.0
    %2654 = vmatpush1.msra.mxu0 %v2646
    %2655 = vmatprep.subr.mxu0 0.0
    %2656 = vmatpush1.msra.mxu0 0.0
    %2657 = vmatprep.subr.mxu0 0.0
    %2658 = vmatpush1.msra.mxu0 0.0
    %2659 = vmatprep.subr.mxu0 0.0
    %2660 = vmatpush1.msra.mxu0 0.0
    %2661 = vmatprep.subr.mxu0 0.0
    %2662 = vmatpush1.msra.mxu0 0.0
    %2663 = vmatprep.subr.mxu0 0.0
    %2664 = vmatpush1.msra.mxu0 0.0
    %2665 = vmatprep.subr.mxu0 0.0
    %2666 = vmatpush1.msra.mxu0 0.0
    %2667 = vmatprep.subr.mxu0 0.0
    %2668 = vmatpush1.msra.mxu0 0.0
    %2669 = vmatprep.subr.mxu0 0.0
    %2670 = vmatpush1.msra.mxu0 0.0
    %2671 = vmatprep.subr.mxu0 0.0
    %2672 = vmatpush1.msra.mxu0 0.0
    %2673 = vmatprep.subr.mxu0 0.0
    %2674 = vmatpush1.msra.mxu0 0.0
    %2675 = vmatprep.subr.mxu0 0.0
    %2676 = vmatpush1.msra.mxu0 0.0
    %2677 = vmatprep.subr.mxu0 0.0
    %2678 = vmatpush1.msra.mxu0 0.0
    %2679 = vmatprep.subr.mxu0 0.0
    %2680 = vmatpush1.msra.mxu0 0.0
    %2681 = vmatprep.subr.mxu0 0.0
    %2682 = vmatpush1.msra.mxu0 0.0
    %2683 = vmatprep.subr.mxu0 0.0
    %2684 = vmatpush1.msra.mxu0 0.0
    %2685 = vmatprep.subr.mxu0 0.0
    %2686 = vmatpush1.msra.mxu0 0.0
    %2687 = vmatprep.subr.mxu0 0.0
    %2688 = vmatpush1.msra.mxu0 0.0
    %2689 = vmatprep.subr.mxu0 0.0
    %2690 = vmatpush1.msra.mxu0 0.0
    %2691 = vmatprep.subr.mxu0 0.0
    %2692 = vmatpush1.msra.mxu0 0.0
    %2693 = vmatprep.subr.mxu0 0.0
    %2694 = vmatpush1.msra.mxu0 0.0
    %2695 = vmatprep.subr.mxu0 0.0
    %2696 = vmatpush1.msra.mxu0 0.0
    %2697 = vmatprep.subr.mxu0 0.0
    %2698 = vmatpush1.msra.mxu0 0.0
    %2699 = vmatprep.subr.mxu0 0.0
    %2700 = vmatpush1.msra.mxu0 0.0
    %2701 = vmatprep.subr.mxu0 0.0
    %2702 = vmatpush1.msra.mxu0 0.0
    %2703 = vmatprep.subr.mxu0 0.0
    %2704 = vmatpush1.msra.mxu0 0.0
    %2705 = vmatprep.subr.mxu0 0.0
    %2706 = vmatpush1.msra.mxu0 0.0
    %2707 = vmatprep.subr.mxu0 0.0
    %2708 = vmatpush1.msra.mxu0 0.0
    %2709 = vmatprep.subr.mxu0 0.0
    %2710 = vmatpush1.msra.mxu0 0.0
    %2711 = vmatprep.subr.mxu0 0.0
    %2712 = vmatpush1.msra.mxu0 0.0
    %2713 = vmatprep.subr.mxu0 0.0
    %2714 = vmatpush1.msra.mxu0 0.0
    %2715 = vmatprep.subr.mxu0 0.0
    %2716 = vmatpush1.msra.mxu0 0.0
    %2717 = vmatprep.mubr.f32.mxu0 0.0
    %2718 = vmatmul.mubr.f32.gmra.mrb[0].mxu0 %v2648
    %v2719 = vpop.f32.mrb[0].mxu0
    %v2720 = vadd.f32 0.0, %v2719
    %v2721 = vpop.f32.mrb[0].mxu0
    %2722 = vmatprep.mubr.f32.mxu0 0.0
    %2723 = vmatmul.mubr.f32.gmra.mrb[0].mxu0 %v2651
    %v2724 = vpop.f32.mrb[0].mxu0
    %v2725 = vadd.f32 0.0, %v2724
    %v2726 = vpop.f32.mrb[0].mxu0
    %2727 = vdwg.mxu0
    %v2728 = vadd.f32 %v2059, %v2720
    %v2729 = vadd.f32 %v2060, %v2725
    %v2730 = vld [vmem:[%s10] sm:$0x1]
    %v2732 = vlaneseq
    %v2733 = vshrl.u32 %v2732, 7
    %v2734 = vsub.s32 0, %v2733
    %v2735 = vrot.slane %v2730, %v2734
    %v2737 = vadd.f32 %v2728, %v2735
    %v2738 = vadd.f32 %v2729, %v2735
    %2739 = vst.msk [vmem:[#allocation2] sm:$0xff] %vm56, %v2737
    %2740 = vst.msk [vmem:[#allocation2 + $0x8] sm:$0xff] %vm56, %v2738
    // Predicated region
    $region46: #{tpu_custom_call.1} parent=1 // pred_check
      _
    $region47: #{tpu_custom_call.1} parent=1 // pred_check_branch
      %2742 = sbr.rel (0) target = $region49
    $region48: #{tpu_custom_call.1} parent=1 // pred_region
      %s2744 = ssub.s32 256, 256
      %2745 = vsyncadd [#allocation3], %s2744
      %s2746 = sshll.u32 [#allocation2], 4
      %s2747 = int_to_ptr.vmem [resolvable:$true] %s2746
      %2752 = dma.vmem_to_hbm [thread:$0]  %s2747, 256, %s11, [#allocation3], 128, 128, 8
    $region49: #{tpu_custom_call.1} parent=1 // pred_fallthru
      _
    // Predicated region
    $region50: #{tpu_custom_call.1} parent=1 // pred_check
      _
    $region51: #{tpu_custom_call.1} parent=1 // pred_check_branch
      %2754 = sbr.rel (0) target = $region53
    $region52: #{tpu_custom_call.1} parent=1 // pred_region
      %2755 = dma.done [#allocation3], 256
    $region53: #{tpu_custom_call.1} parent=1 // pred_fallthru
      _
    %2756 = vsyncpa [#allocation3], 1

</llo_original>
